<compile_context>
chip_gen: v6e
topology: v6e:2x2x1
jax: 0.10.0
libtpu: 0.0.40
codegen_flags: <defaults>
</compile_context>

<pallas_src>
import jax
import jax.numpy as jnp
from jax import lax
from jax.experimental import pallas as pl
from jax.experimental.pallas import tpu as pltpu

# ----------------------------- config -----------------------------
B = 2             # batch
S = 8             # sequence length
D = 32            # hidden size (768 in the real model)
H = 4             # attention heads (12 real)
HEAD_DIM = D // H
FFN = 64          # intermediate size (3072 real)
LAYERS = 2        # encoder layers (12 real)
VOCAB = 50
NUM_CLASSES = 9
C_PAD = 128       # classifier lane width padded to a full vreg lane dim
LN_EPS = 1e-5
ATT_SCALE = 1.0 / (HEAD_DIM ** 0.5)


def _bf16(x):
    return x.astype(jnp.bfloat16)


def _layernorm(x, g, b):
    mu = jnp.mean(x, axis=-1, keepdims=True)
    var = jnp.mean((x - mu) ** 2, axis=-1, keepdims=True)
    return (x - mu) * lax.rsqrt(var + LN_EPS) * g + b


# ----------------------- fused Pallas kernel ----------------------
def bert_fused_kernel(
        x_ref, bias_ref, embg_ref, embb_ref,
        wq_ref, bq_ref, wk_ref, bk_ref, wv_ref, bv_ref,
        wo_ref, bo_ref, ln1g_ref, ln1b_ref,
        w1_ref, b1_ref, w2_ref, b2_ref, ln2g_ref, ln2b_ref,
        wp_ref, bp_ref, wc_ref, bc_ref,
        out_ref,
        x_scratch):
    """Grid = (batch, layer). One grid step = one encoder layer of one example."""
    layer = pl.program_id(1)

    # Layer 0: embedding LayerNorm seeds the residual stream carried in VMEM scratch.
    @pl.when(layer == 0)
    def _():
        x_scratch[...] = _layernorm(x_ref[0], embg_ref[...], embb_ref[...])

    x = x_scratch[...]                       # (S, D) f32 residual stream
    bias = bias_ref[...]                     # (1, 1, S) additive key-padding mask

    # ---- multi-head self-attention (heads as a batch dim -> no redundant MXU work) ----
    xb = jnp.broadcast_to(_bf16(x)[None], (H, S, D))
    qh = jnp.einsum('hsd,hdk->hsk', xb, wq_ref[0],
                    preferred_element_type=jnp.float32) + bq_ref[0]     # (H, S, HD)
    kh = jnp.einsum('hsd,hdk->hsk', xb, wk_ref[0],
                    preferred_element_type=jnp.float32) + bk_ref[0]
    vh = jnp.einsum('hsd,hdk->hsk', xb, wv_ref[0],
                    preferred_element_type=jnp.float32) + bv_ref[0]

    sc = jnp.einsum('hqd,hkd->hqk', _bf16(qh * ATT_SCALE), _bf16(kh),
                    preferred_element_type=jnp.float32)                 # (H, S, S)
    sc = sc + bias
    sc = sc - jnp.max(sc, axis=-1, keepdims=True)
    p = jnp.exp(sc)
    p = p * pl.reciprocal(jnp.sum(p, axis=-1, keepdims=True), approx=True)
    # TODO(synk): at real sequence length, tile keys/values (flash-style online softmax)
    # instead of materializing the full (H, S, S) score slab.

    ctx = jnp.einsum('hqk,hkd->hqd', _bf16(p), _bf16(vh),
                     preferred_element_type=jnp.float32)                # (H, S, HD)
    # Head merge + output projection: batched matmul with per-head wo, summed over heads.
    attn = jnp.einsum('hsd,hdk->hsk', _bf16(ctx), wo_ref[0],
                      preferred_element_type=jnp.float32)               # (H, S, D)
    attn = jnp.sum(attn, axis=0) + bo_ref[0]                            # (S, D)

    x = _layernorm(x + attn, ln1g_ref[0], ln1b_ref[0])

    # ---- feed-forward ----
    hmid = jnp.dot(_bf16(x), w1_ref[0], preferred_element_type=jnp.float32) + b1_ref[0]
    hmid = jax.nn.gelu(hmid, approximate=True)                          # tanh GELU (EUP path)
    ffn = jnp.dot(_bf16(hmid), w2_ref[0], preferred_element_type=jnp.float32) + b2_ref[0]
    x = _layernorm(x + ffn, ln2g_ref[0], ln2b_ref[0])

    x_scratch[...] = x

    # ---- RoBERTa pooler + classifier head, only on the last layer step ----
    @pl.when(layer == LAYERS - 1)
    def _():
        cls = x[0:1, :]                                                 # [CLS] row, static slice
        pooled = jnp.tanh(jnp.dot(_bf16(cls), wp_ref[...],
                                  preferred_element_type=jnp.float32) + bp_ref[...])
        # TODO(synk): nn.Dropout(0.5) is identity in eval mode; training-mode mask omitted.
        logits = jnp.dot(_bf16(pooled), wc_ref[...],
                         preferred_element_type=jnp.float32) + bc_ref[...]   # (1, 128)
        out_ref[0] = jnp.maximum(logits, 0.0)                           # ReLU, lane-dense store


# --------------------------- wrapper ------------------------------
def _vmem_limit_bytes():
    # Largest live set: double-buffered per-layer weights + per-step activations + head,
    # plus generous headroom (tiny at this toy scale; re-derive per generation at real scale).
    w_layer = (4 * D * D + 2 * D * FFN) * 2                      # bf16 matmul weights / layer
    acts = (H * S * S + 3 * H * S * HEAD_DIM + S * FFN + 6 * S * D) * 4
    head = (D * D + D * C_PAD) * 2 + (D + C_PAD) * 4
    est = 2 * w_layer + acts + head + (2 << 20)
    return int(min(max(est, 8 << 20), 32 << 20))


def bert_classifier_forward(params, input_ids, mask):
    # Embedding gather stays in XLA (glue); per-example layout for the kernel.
    # TODO(synk): RoBERTa padding_idx+1 position offset and token-type embeddings omitted.
    x = params['word_emb'][input_ids] + params['pos_emb'][None, :, :]            # (B, S, D)

    # Per-example additive key-padding bias (no cross-batch blocks in the score matrix).
    attn_bias = jnp.where(mask[:, None, :] > 0.5, 0.0, -1e9).astype(jnp.float32)  # (B, 1, S)

    lmap = lambda b, l: (l, 0, 0)
    lmap4 = lambda b, l: (l, 0, 0, 0)
    smap = lambda b, l: (0, 0)

    grid_spec = pltpu.PrefetchScalarGridSpec(
        num_scalar_prefetch=0,
        grid=(B, LAYERS),
        in_specs=[
            pl.BlockSpec((1, S, D), lambda b, l: (b, 0, 0)),        # embeddings
            pl.BlockSpec((1, 1, S), lambda b, l: (b, 0, 0)),        # attention bias
            pl.BlockSpec((1, D), smap),                             # emb LN gamma
            pl.BlockSpec((1, D), smap),                             # emb LN beta
            pl.BlockSpec((1, H, D, HEAD_DIM), lmap4),               # wq (layer-streamed)
            pl.BlockSpec((1, H, 1, HEAD_DIM), lmap4),               # bq
            pl.BlockSpec((1, H, D, HEAD_DIM), lmap4),               # wk
            pl.BlockSpec((1, H, 1, HEAD_DIM), lmap4),               # bk
            pl.BlockSpec((1, H, D, HEAD_DIM), lmap4),               # wv
            pl.BlockSpec((1, H, 1, HEAD_DIM), lmap4),               # bv
            pl.BlockSpec((1, H, HEAD_DIM, D), lmap4),               # wo
            pl.BlockSpec((1, 1, D), lmap),                          # bo
            pl.BlockSpec((1, 1, D), lmap),                          # ln1 gamma
            pl.BlockSpec((1, 1, D), lmap),                          # ln1 beta
            pl.BlockSpec((1, D, FFN), lmap),                        # w1
            pl.BlockSpec((1, 1, FFN), lmap),                        # b1
            pl.BlockSpec((1, FFN, D), lmap),                        # w2
            pl.BlockSpec((1, 1, D), lmap),                          # b2
            pl.BlockSpec((1, 1, D), lmap),                          # ln2 gamma
            pl.BlockSpec((1, 1, D), lmap),                          # ln2 beta
            pl.BlockSpec((D, D), smap),                             # wp (pooler)
            pl.BlockSpec((1, D), smap),                             # bp
            pl.BlockSpec((D, C_PAD), smap),                         # wc (classifier, padded)
            pl.BlockSpec((1, C_PAD), smap),                         # bc
        ],
        out_specs=pl.BlockSpec((1, 1, C_PAD), lambda b, l: (b, 0, 0)),
        scratch_shapes=[pltpu.VMEM((S, D), jnp.float32)],            # residual carried across layers
    )

    out = pl.pallas_call(
        bert_fused_kernel,
        out_shape=jax.ShapeDtypeStruct((B, 1, C_PAD), jnp.float32),
        grid_spec=grid_spec,
        compiler_params=pltpu.CompilerParams(
            dimension_semantics=("parallel", "arbitrary"),           # batch parallel, layers carried
            vmem_limit_bytes=_vmem_limit_bytes(),
        ),
    )(x, attn_bias,
      params['emb_ln_g'], params['emb_ln_b'],
      params['wq'], params['bq'], params['wk'], params['bk'],
      params['wv'], params['bv'], params['wo'], params['bo'],
      params['ln1g'], params['ln1b'],
      params['w1'], params['b1'], params['w2'], params['b2'],
      params['ln2g'], params['ln2b'],
      params['wp'], params['bp'], params['wc'], params['bc'])

    return out[:, 0, :NUM_CLASSES]


# ----------------------- deterministic init ------------------------
def init_params(key):
    keys = jax.random.split(key, 4 + LAYERS)

    def dense(k, fi, fo):
        # matmul weights stored (in, out), bf16 (f32 accumulation in-kernel)
        return (0.02 * jax.random.normal(k, (fi, fo), jnp.float32)).astype(jnp.bfloat16)

    wc_full = jnp.zeros((D, C_PAD), jnp.float32).at[:, :NUM_CLASSES].set(
        0.02 * jax.random.normal(keys[3], (D, NUM_CLASSES), jnp.float32))

    params = {
        'word_emb': 0.02 * jax.random.normal(keys[0], (VOCAB, D), jnp.float32),
        'pos_emb': 0.02 * jax.random.normal(keys[1], (S, D), jnp.float32),
        'emb_ln_g': jnp.ones((1, D), jnp.float32),
        'emb_ln_b': jnp.zeros((1, D), jnp.float32),
        'wp': dense(keys[2], D, D),
        'bp': jnp.zeros((1, D), jnp.float32),
        'wc': wc_full.astype(jnp.bfloat16),
        'bc': jnp.zeros((1, C_PAD), jnp.float32),
    }

    layer_keys = [jax.random.split(keys[4 + i], 6) for i in range(LAYERS)]

    def qkv(i, j):
        # (H, D, HEAD_DIM): columns of a (D, D) projection split per head
        w = 0.02 * jax.random.normal(layer_keys[i][j], (D, D), jnp.float32)
        return _bf16(w.reshape(D, H, HEAD_DIM).transpose(1, 0, 2))

    def outp(i, j):
        # (H, HEAD_DIM, D): rows of the (D, D) output projection split per head
        w = 0.02 * jax.random.normal(layer_keys[i][j], (D, D), jnp.float32)
        return _bf16(w.reshape(H, HEAD_DIM, D))

    params.update({
        'wq': jnp.stack([qkv(i, 0) for i in range(LAYERS)]),
        'wk': jnp.stack([qkv(i, 1) for i in range(LAYERS)]),
        'wv': jnp.stack([qkv(i, 2) for i in range(LAYERS)]),
        'wo': jnp.stack([outp(i, 3) for i in range(LAYERS)]),
        'w1': jnp.stack([dense(layer_keys[i][4], D, FFN) for i in range(LAYERS)]),
        'w2': jnp.stack([dense(layer_keys[i][5], FFN, D) for i in range(LAYERS)]),
        'bq': jnp.zeros((LAYERS, H, 1, HEAD_DIM), jnp.float32),
        'bk': jnp.zeros((LAYERS, H, 1, HEAD_DIM), jnp.float32),
        'bv': jnp.zeros((LAYERS, H, 1, HEAD_DIM), jnp.float32),
        'bo': jnp.zeros((LAYERS, 1, D), jnp.float32),
        'b1': jnp.zeros((LAYERS, 1, FFN), jnp.float32),
        'b2': jnp.zeros((LAYERS, 1, D), jnp.float32),
        'ln1g': jnp.ones((LAYERS, 1, D), jnp.float32),
        'ln1b': jnp.zeros((LAYERS, 1, D), jnp.float32),
        'ln2g': jnp.ones((LAYERS, 1, D), jnp.float32),
        'ln2b': jnp.zeros((LAYERS, 1, D), jnp.float32),
    })
    return params


if __name__ == "__main__":
    key = jax.random.PRNGKey(0)
    pkey, ikey = jax.random.split(key)
    params = init_params(pkey)

    input_ids = jax.random.randint(ikey, (B, S), 0, VOCAB, dtype=jnp.int32)
    mask = jnp.ones((B, S), jnp.float32).at[1, 6:].set(0.0)   # pad last 2 tokens of batch 1

    fwd = jax.jit(bert_classifier_forward)
    logits = fwd(params, input_ids, mask)
    jax.block_until_ready(logits)
    assert logits.shape == (B, NUM_CLASSES) and logits.dtype == jnp.float32
    assert bool(jnp.all(logits >= 0.0))   # ReLU output
    print("KERNEL_OK")
</pallas_src>

<mosaic_0001>
module attributes {stable_mosaic.version = 11 : i64} {
  func.func @bert_fused_kernel(%arg0: i32, %arg1: i32, %arg2: memref<1x8x32xf32, #tpu.memory_space<vmem>>, %arg3: memref<1x1x8xf32, #tpu.memory_space<vmem>>, %arg4: memref<1x32xf32, #tpu.memory_space<vmem>>, %arg5: memref<1x32xf32, #tpu.memory_space<vmem>>, %arg6: memref<1x4x32x8xbf16, #tpu.memory_space<vmem>>, %arg7: memref<1x4x1x8xf32, #tpu.memory_space<vmem>>, %arg8: memref<1x4x32x8xbf16, #tpu.memory_space<vmem>>, %arg9: memref<1x4x1x8xf32, #tpu.memory_space<vmem>>, %arg10: memref<1x4x32x8xbf16, #tpu.memory_space<vmem>>, %arg11: memref<1x4x1x8xf32, #tpu.memory_space<vmem>>, %arg12: memref<1x4x8x32xbf16, #tpu.memory_space<vmem>>, %arg13: memref<1x1x32xf32, #tpu.memory_space<vmem>>, %arg14: memref<1x1x32xf32, #tpu.memory_space<vmem>>, %arg15: memref<1x1x32xf32, #tpu.memory_space<vmem>>, %arg16: memref<1x32x64xbf16, #tpu.memory_space<vmem>>, %arg17: memref<1x1x64xf32, #tpu.memory_space<vmem>>, %arg18: memref<1x64x32xbf16, #tpu.memory_space<vmem>>, %arg19: memref<1x1x32xf32, #tpu.memory_space<vmem>>, %arg20: memref<1x1x32xf32, #tpu.memory_space<vmem>>, %arg21: memref<1x1x32xf32, #tpu.memory_space<vmem>>, %arg22: memref<32x32xbf16, #tpu.memory_space<vmem>>, %arg23: memref<1x32xf32, #tpu.memory_space<vmem>>, %arg24: memref<32x128xbf16, #tpu.memory_space<vmem>>, %arg25: memref<1x128xf32, #tpu.memory_space<vmem>>, %arg26: memref<1x1x128xf32, #tpu.memory_space<vmem>>, %arg27: memref<8x32xf32, #tpu.memory_space<vmem>>) attributes {dimension_semantics = [#tpu.dimension_semantics<parallel>, #tpu.dimension_semantics<arbitrary>], iteration_bounds = array<i64: 2, 2>, scalar_prefetch = 0 : i64, scratch_operands = 1 : i64, tpu.core_type = #tpu.core_type<tc>, window_params = [{transform_indices = @transform_0, window_bounds = array<i64: 1, 8, 32>}, {transform_indices = @transform_1, window_bounds = array<i64: 1, 1, 8>}, {pipeline_mode = #tpu.pipeline_mode<synchronous>, transform_indices = @transform_2, window_bounds = array<i64: 1, 32>}, {pipeline_mode = #tpu.pipeline_mode<synchronous>, transform_indices = @transform_3, window_bounds = array<i64: 1, 32>}, {transform_indices = @transform_4, window_bounds = array<i64: 1, 4, 32, 8>}, {transform_indices = @transform_5, window_bounds = array<i64: 1, 4, 1, 8>}, {transform_indices = @transform_6, window_bounds = array<i64: 1, 4, 32, 8>}, {transform_indices = @transform_7, window_bounds = array<i64: 1, 4, 1, 8>}, {transform_indices = @transform_8, window_bounds = array<i64: 1, 4, 32, 8>}, {transform_indices = @transform_9, window_bounds = array<i64: 1, 4, 1, 8>}, {transform_indices = @transform_10, window_bounds = array<i64: 1, 4, 8, 32>}, {transform_indices = @transform_11, window_bounds = array<i64: 1, 1, 32>}, {transform_indices = @transform_12, window_bounds = array<i64: 1, 1, 32>}, {transform_indices = @transform_13, window_bounds = array<i64: 1, 1, 32>}, {transform_indices = @transform_14, window_bounds = array<i64: 1, 32, 64>}, {transform_indices = @transform_15, window_bounds = array<i64: 1, 1, 64>}, {transform_indices = @transform_16, window_bounds = array<i64: 1, 64, 32>}, {transform_indices = @transform_17, window_bounds = array<i64: 1, 1, 32>}, {transform_indices = @transform_18, window_bounds = array<i64: 1, 1, 32>}, {transform_indices = @transform_19, window_bounds = array<i64: 1, 1, 32>}, {pipeline_mode = #tpu.pipeline_mode<synchronous>, transform_indices = @transform_20, window_bounds = array<i64: 32, 32>}, {pipeline_mode = #tpu.pipeline_mode<synchronous>, transform_indices = @transform_21, window_bounds = array<i64: 1, 32>}, {pipeline_mode = #tpu.pipeline_mode<synchronous>, transform_indices = @transform_22, window_bounds = array<i64: 32, 128>}, {pipeline_mode = #tpu.pipeline_mode<synchronous>, transform_indices = @transform_23, window_bounds = array<i64: 1, 128>}, {transform_indices = @transform_24, window_bounds = array<i64: 1, 1, 128>}]} {
    %c0_i32 = arith.constant 0 : i32
    %0 = arith.cmpi eq, %arg1, %c0_i32 : i32
    %1 = arith.extui %0 : i1 to i32
    %c0_i32_0 = arith.constant 0 : i32
    %2 = arith.cmpi ne, %1, %c0_i32_0 : i32
    scf.if %2 {
      %c0_88 = arith.constant 0 : index
      %c0_89 = arith.constant 0 : index
      %c0_90 = arith.constant 0 : index
      %146 = vector.load %arg2[%c0_88, %c0_89, %c0_90] : memref<1x8x32xf32, #tpu.memory_space<vmem>>, vector<1x8x32xf32>
      %147 = vector.shape_cast %146 : vector<1x8x32xf32> to vector<8x32xf32>
      %c0_91 = arith.constant 0 : index
      %c0_92 = arith.constant 0 : index
      %148 = vector.load %arg4[%c0_91, %c0_92] : memref<1x32xf32, #tpu.memory_space<vmem>>, vector<1x32xf32>
      %c0_93 = arith.constant 0 : index
      %c0_94 = arith.constant 0 : index
      %149 = vector.load %arg5[%c0_93, %c0_94] : memref<1x32xf32, #tpu.memory_space<vmem>>, vector<1x32xf32>
      %cst_95 = arith.constant dense<0.000000e+00> : vector<8xf32>
      %150 = vector.multi_reduction <add>, %147, %cst_95 [1] : vector<8x32xf32> to vector<8xf32>
      %151 = vector.shape_cast %150 : vector<8xf32> to vector<8x1xf32>
      %cst_96 = arith.constant 3.200000e+01 : f32
      %152 = vector.broadcast %cst_96 : f32 to vector<8x1xf32>
      %153 = arith.divf %151, %152 : vector<8x1xf32>
      %154 = vector.broadcast %153 : vector<8x1xf32> to vector<8x32xf32>
      %155 = arith.subf %147, %154 : vector<8x32xf32>
      %156 = arith.mulf %155, %155 : vector<8x32xf32>
      %cst_97 = arith.constant dense<0.000000e+00> : vector<8xf32>
      %157 = vector.multi_reduction <add>, %156, %cst_97 [1] : vector<8x32xf32> to vector<8xf32>
      %158 = vector.shape_cast %157 : vector<8xf32> to vector<8x1xf32>
      %cst_98 = arith.constant 3.200000e+01 : f32
      %159 = vector.broadcast %cst_98 : f32 to vector<8x1xf32>
      %160 = arith.divf %158, %159 : vector<8x1xf32>
      %161 = vector.broadcast %153 : vector<8x1xf32> to vector<8x32xf32>
      %162 = arith.subf %147, %161 : vector<8x32xf32>
      %cst_99 = arith.constant 9.99999974E-6 : f32
      %163 = vector.broadcast %cst_99 : f32 to vector<8x1xf32>
      %164 = arith.addf %160, %163 : vector<8x1xf32>
      %165 = math.rsqrt %164 : vector<8x1xf32>
      %166 = vector.broadcast %165 : vector<8x1xf32> to vector<8x32xf32>
      %167 = arith.mulf %162, %166 : vector<8x32xf32>
      %168 = vector.broadcast %148 : vector<1x32xf32> to vector<8x32xf32>
      %169 = arith.mulf %167, %168 : vector<8x32xf32>
      %170 = vector.broadcast %149 : vector<1x32xf32> to vector<8x32xf32>
      %171 = arith.addf %169, %170 : vector<8x32xf32>
      %c0_100 = arith.constant 0 : index
      %c0_101 = arith.constant 0 : index
      %172 = vector.load %arg27[%c0_100, %c0_101] : memref<8x32xf32, #tpu.memory_space<vmem>>, vector<8x32xf32>
      tpu.vector_store %arg27[%c0_100, %c0_101], %171 {strides = array<i32>} : memref<8x32xf32, #tpu.memory_space<vmem>>, vector<8x32xf32>,
    } else {
    }
    %c0 = arith.constant 0 : index
    %c0_1 = arith.constant 0 : index
    %3 = vector.load %arg27[%c0, %c0_1] : memref<8x32xf32, #tpu.memory_space<vmem>>, vector<8x32xf32>
    %c0_2 = arith.constant 0 : index
    %c0_3 = arith.constant 0 : index
    %c0_4 = arith.constant 0 : index
    %4 = vector.load %arg3[%c0_2, %c0_3, %c0_4] : memref<1x1x8xf32, #tpu.memory_space<vmem>>, vector<1x1x8xf32>
    %5 = arith.truncf %3 : vector<8x32xf32> to vector<8x32xbf16>
    %6 = vector.shape_cast %5 : vector<8x32xbf16> to vector<1x8x32xbf16>
    %7 = vector.shape_cast %6 : vector<1x8x32xbf16> to vector<1x8x32xbf16>
    %8 = vector.broadcast %7 : vector<1x8x32xbf16> to vector<4x8x32xbf16>
    %c0_5 = arith.constant 0 : index
    %c0_6 = arith.constant 0 : index
    %c0_7 = arith.constant 0 : index
    %c0_8 = arith.constant 0 : index
    %9 = vector.load %arg6[%c0_5, %c0_6, %c0_7, %c0_8] : memref<1x4x32x8xbf16, #tpu.memory_space<vmem>>, vector<1x4x32x8xbf16>
    %10 = vector.shape_cast %9 : vector<1x4x32x8xbf16> to vector<4x32x8xbf16>
    "tpu.trace_start"() <{level = 10 : i32, message = "hsd,hdk->hsk"}> : () -> ()
    %cst = arith.constant dense<0.000000e+00> : vector<4x8x8xf32>
    %11 = tpu.matmul %8, %10, %cst {dimension_numbers = #tpu.dot_dimension_numbers<[2], [1], [1], [2], [0, 0, 0, 1, 1, 2], [0], [0]>} : vector<4x8x32xbf16>, vector<4x32x8xbf16>, vector<4x8x8xf32> -> vector<4x8x8xf32>
    "tpu.trace_stop"() : () -> ()
    %c0_9 = arith.constant 0 : index
    %c0_10 = arith.constant 0 : index
    %c0_11 = arith.constant 0 : index
    %c0_12 = arith.constant 0 : index
    %12 = vector.load %arg7[%c0_9, %c0_10, %c0_11, %c0_12] : memref<1x4x1x8xf32, #tpu.memory_space<vmem>>, vector<1x4x1x8xf32>
    %13 = vector.shape_cast %12 : vector<1x4x1x8xf32> to vector<4x1x8xf32>
    %14 = vector.broadcast %13 : vector<4x1x8xf32> to vector<4x8x8xf32>
    %15 = arith.addf %11, %14 : vector<4x8x8xf32>
    %c0_13 = arith.constant 0 : index
    %c0_14 = arith.constant 0 : index
    %c0_15 = arith.constant 0 : index
    %c0_16 = arith.constant 0 : index
    %16 = vector.load %arg8[%c0_13, %c0_14, %c0_15, %c0_16] : memref<1x4x32x8xbf16, #tpu.memory_space<vmem>>, vector<1x4x32x8xbf16>
    %17 = vector.shape_cast %16 : vector<1x4x32x8xbf16> to vector<4x32x8xbf16>
    "tpu.trace_start"() <{level = 10 : i32, message = "hsd,hdk->hsk"}> : () -> ()
    %cst_17 = arith.constant dense<0.000000e+00> : vector<4x8x8xf32>
    %18 = tpu.matmul %8, %17, %cst_17 {dimension_numbers = #tpu.dot_dimension_numbers<[2], [1], [1], [2], [0, 0, 0, 1, 1, 2], [0], [0]>} : vector<4x8x32xbf16>, vector<4x32x8xbf16>, vector<4x8x8xf32> -> vector<4x8x8xf32>
    "tpu.trace_stop"() : () -> ()
    %c0_18 = arith.constant 0 : index
    %c0_19 = arith.constant 0 : index
    %c0_20 = arith.constant 0 : index
    %c0_21 = arith.constant 0 : index
    %19 = vector.load %arg9[%c0_18, %c0_19, %c0_20, %c0_21] : memref<1x4x1x8xf32, #tpu.memory_space<vmem>>, vector<1x4x1x8xf32>
    %20 = vector.shape_cast %19 : vector<1x4x1x8xf32> to vector<4x1x8xf32>
    %21 = vector.broadcast %20 : vector<4x1x8xf32> to vector<4x8x8xf32>
    %22 = arith.addf %18, %21 : vector<4x8x8xf32>
    %c0_22 = arith.constant 0 : index
    %c0_23 = arith.constant 0 : index
    %c0_24 = arith.constant 0 : index
    %c0_25 = arith.constant 0 : index
    %23 = vector.load %arg10[%c0_22, %c0_23, %c0_24, %c0_25] : memref<1x4x32x8xbf16, #tpu.memory_space<vmem>>, vector<1x4x32x8xbf16>
    %24 = vector.shape_cast %23 : vector<1x4x32x8xbf16> to vector<4x32x8xbf16>
    "tpu.trace_start"() <{level = 10 : i32, message = "hsd,hdk->hsk"}> : () -> ()
    %cst_26 = arith.constant dense<0.000000e+00> : vector<4x8x8xf32>
    %25 = tpu.matmul %8, %24, %cst_26 {dimension_numbers = #tpu.dot_dimension_numbers<[2], [1], [1], [2], [0, 0, 0, 1, 1, 2], [0], [0]>} : vector<4x8x32xbf16>, vector<4x32x8xbf16>, vector<4x8x8xf32> -> vector<4x8x8xf32>
    "tpu.trace_stop"() : () -> ()
    %c0_27 = arith.constant 0 : index
    %c0_28 = arith.constant 0 : index
    %c0_29 = arith.constant 0 : index
    %c0_30 = arith.constant 0 : index
    %26 = vector.load %arg11[%c0_27, %c0_28, %c0_29, %c0_30] : memref<1x4x1x8xf32, #tpu.memory_space<vmem>>, vector<1x4x1x8xf32>
    %27 = vector.shape_cast %26 : vector<1x4x1x8xf32> to vector<4x1x8xf32>
    %28 = vector.broadcast %27 : vector<4x1x8xf32> to vector<4x8x8xf32>
    %29 = arith.addf %25, %28 : vector<4x8x8xf32>
    %cst_31 = arith.constant 0.353553385 : f32
    %30 = vector.broadcast %cst_31 : f32 to vector<4x8x8xf32>
    %31 = arith.mulf %15, %30 : vector<4x8x8xf32>
    %32 = arith.truncf %31 : vector<4x8x8xf32> to vector<4x8x8xbf16>
    %33 = arith.truncf %22 : vector<4x8x8xf32> to vector<4x8x8xbf16>
    "tpu.trace_start"() <{level = 10 : i32, message = "hqd,hkd->hqk"}> : () -> ()
    %cst_32 = arith.constant dense<0.000000e+00> : vector<4x8x8xf32>
    %34 = tpu.matmul %32, %33, %cst_32 {dimension_numbers = #tpu.dot_dimension_numbers<[2], [2], [1], [1], [0, 0, 0, 1, 1, 1], [0], [0]>} : vector<4x8x8xbf16>, vector<4x8x8xbf16>, vector<4x8x8xf32> -> vector<4x8x8xf32>
    "tpu.trace_stop"() : () -> ()
    %35 = vector.broadcast %4 : vector<1x1x8xf32> to vector<4x8x8xf32>
    %36 = arith.addf %34, %35 : vector<4x8x8xf32>
    %cst_33 = arith.constant dense<0xFF800000> : vector<4x8xf32>
    %37 = vector.multi_reduction <maximumf>, %36, %cst_33 [2] : vector<4x8x8xf32> to vector<4x8xf32>
    %38 = vector.shape_cast %37 : vector<4x8xf32> to vector<4x8x1xf32>
    %39 = vector.broadcast %38 : vector<4x8x1xf32> to vector<4x8x8xf32>
    %40 = arith.subf %36, %39 : vector<4x8x8xf32>
    %41 = math.exp %40 : vector<4x8x8xf32>
    %cst_34 = arith.constant dense<0.000000e+00> : vector<4x8xf32>
    %42 = vector.multi_reduction <add>, %41, %cst_34 [2] : vector<4x8x8xf32> to vector<4x8xf32>
    %43 = vector.shape_cast %42 : vector<4x8xf32> to vector<4x8x1xf32>
    %44 = tpu.reciprocal %43 {approx = true} : vector<4x8x1xf32> -> vector<4x8x1xf32>
    %45 = vector.broadcast %44 : vector<4x8x1xf32> to vector<4x8x8xf32>
    %46 = arith.mulf %41, %45 : vector<4x8x8xf32>
    %47 = arith.truncf %46 : vector<4x8x8xf32> to vector<4x8x8xbf16>
    %48 = arith.truncf %29 : vector<4x8x8xf32> to vector<4x8x8xbf16>
    "tpu.trace_start"() <{level = 10 : i32, message = "hqk,hkd->hqd"}> : () -> ()
    %cst_35 = arith.constant dense<0.000000e+00> : vector<4x8x8xf32>
    %49 = tpu.matmul %47, %48, %cst_35 {dimension_numbers = #tpu.dot_dimension_numbers<[2], [1], [1], [2], [0, 0, 0, 1, 1, 2], [0], [0]>} : vector<4x8x8xbf16>, vector<4x8x8xbf16>, vector<4x8x8xf32> -> vector<4x8x8xf32>
    "tpu.trace_stop"() : () -> ()
    %50 = arith.truncf %49 : vector<4x8x8xf32> to vector<4x8x8xbf16>
    %c0_36 = arith.constant 0 : index
    %c0_37 = arith.constant 0 : index
    %c0_38 = arith.constant 0 : index
    %c0_39 = arith.constant 0 : index
    %51 = vector.load %arg12[%c0_36, %c0_37, %c0_38, %c0_39] : memref<1x4x8x32xbf16, #tpu.memory_space<vmem>>, vector<1x4x8x32xbf16>
    %52 = vector.shape_cast %51 : vector<1x4x8x32xbf16> to vector<4x8x32xbf16>
    "tpu.trace_start"() <{level = 10 : i32, message = "hsd,hdk->hsk"}> : () -> ()
    %cst_40 = arith.constant dense<0.000000e+00> : vector<4x8x32xf32>
    %53 = tpu.matmul %50, %52, %cst_40 {dimension_numbers = #tpu.dot_dimension_numbers<[2], [1], [1], [2], [0, 0, 0, 1, 1, 2], [0], [0]>} : vector<4x8x8xbf16>, vector<4x8x32xbf16>, vector<4x8x32xf32> -> vector<4x8x32xf32>
    "tpu.trace_stop"() : () -> ()
    %cst_41 = arith.constant dense<0.000000e+00> : vector<8x32xf32>
    %54 = vector.multi_reduction <add>, %53, %cst_41 [0] : vector<4x8x32xf32> to vector<8x32xf32>
    %c0_42 = arith.constant 0 : index
    %c0_43 = arith.constant 0 : index
    %c0_44 = arith.constant 0 : index
    %55 = vector.load %arg13[%c0_42, %c0_43, %c0_44] : memref<1x1x32xf32, #tpu.memory_space<vmem>>, vector<1x1x32xf32>
    %56 = vector.shape_cast %55 : vector<1x1x32xf32> to vector<1x32xf32>
    %57 = vector.broadcast %56 : vector<1x32xf32> to vector<8x32xf32>
    %58 = arith.addf %54, %57 : vector<8x32xf32>
    %59 = arith.addf %3, %58 : vector<8x32xf32>
    %c0_45 = arith.constant 0 : index
    %c0_46 = arith.constant 0 : index
    %c0_47 = arith.constant 0 : index
    %60 = vector.load %arg14[%c0_45, %c0_46, %c0_47] : memref<1x1x32xf32, #tpu.memory_space<vmem>>, vector<1x1x32xf32>
    %61 = vector.shape_cast %60 : vector<1x1x32xf32> to vector<1x32xf32>
    %c0_48 = arith.constant 0 : index
    %c0_49 = arith.constant 0 : index
    %c0_50 = arith.constant 0 : index
    %62 = vector.load %arg15[%c0_48, %c0_49, %c0_50] : memref<1x1x32xf32, #tpu.memory_space<vmem>>, vector<1x1x32xf32>
    %63 = vector.shape_cast %62 : vector<1x1x32xf32> to vector<1x32xf32>
    %cst_51 = arith.constant dense<0.000000e+00> : vector<8xf32>
    %64 = vector.multi_reduction <add>, %59, %cst_51 [1] : vector<8x32xf32> to vector<8xf32>
    %65 = vector.shape_cast %64 : vector<8xf32> to vector<8x1xf32>
    %cst_52 = arith.constant 3.200000e+01 : f32
    %66 = vector.broadcast %cst_52 : f32 to vector<8x1xf32>
    %67 = arith.divf %65, %66 : vector<8x1xf32>
    %68 = vector.broadcast %67 : vector<8x1xf32> to vector<8x32xf32>
    %69 = arith.subf %59, %68 : vector<8x32xf32>
    %70 = arith.mulf %69, %69 : vector<8x32xf32>
    %cst_53 = arith.constant dense<0.000000e+00> : vector<8xf32>
    %71 = vector.multi_reduction <add>, %70, %cst_53 [1] : vector<8x32xf32> to vector<8xf32>
    %72 = vector.shape_cast %71 : vector<8xf32> to vector<8x1xf32>
    %cst_54 = arith.constant 3.200000e+01 : f32
    %73 = vector.broadcast %cst_54 : f32 to vector<8x1xf32>
    %74 = arith.divf %72, %73 : vector<8x1xf32>
    %75 = vector.broadcast %67 : vector<8x1xf32> to vector<8x32xf32>
    %76 = arith.subf %59, %75 : vector<8x32xf32>
    %cst_55 = arith.constant 9.99999974E-6 : f32
    %77 = vector.broadcast %cst_55 : f32 to vector<8x1xf32>
    %78 = arith.addf %74, %77 : vector<8x1xf32>
    %79 = math.rsqrt %78 : vector<8x1xf32>
    %80 = vector.broadcast %79 : vector<8x1xf32> to vector<8x32xf32>
    %81 = arith.mulf %76, %80 : vector<8x32xf32>
    %82 = vector.broadcast %61 : vector<1x32xf32> to vector<8x32xf32>
    %83 = arith.mulf %81, %82 : vector<8x32xf32>
    %84 = vector.broadcast %63 : vector<1x32xf32> to vector<8x32xf32>
    %85 = arith.addf %83, %84 : vector<8x32xf32>
    %86 = arith.truncf %85 : vector<8x32xf32> to vector<8x32xbf16>
    %c0_56 = arith.constant 0 : index
    %c0_57 = arith.constant 0 : index
    %c0_58 = arith.constant 0 : index
    %87 = vector.load %arg16[%c0_56, %c0_57, %c0_58] : memref<1x32x64xbf16, #tpu.memory_space<vmem>>, vector<1x32x64xbf16>
    %88 = vector.shape_cast %87 : vector<1x32x64xbf16> to vector<32x64xbf16>
    %cst_59 = arith.constant dense<0.000000e+00> : vector<8x64xf32>
    %89 = tpu.matmul %86, %88, %cst_59 {dimension_numbers = #tpu.dot_dimension_numbers<[1], [0], [0], [1], [0, 0, 1, 1], [], []>} : vector<8x32xbf16>, vector<32x64xbf16>, vector<8x64xf32> -> vector<8x64xf32>
    %c0_60 = arith.constant 0 : index
    %c0_61 = arith.constant 0 : index
    %c0_62 = arith.constant 0 : index
    %90 = vector.load %arg17[%c0_60, %c0_61, %c0_62] : memref<1x1x64xf32, #tpu.memory_space<vmem>>, vector<1x1x64xf32>
    %91 = vector.shape_cast %90 : vector<1x1x64xf32> to vector<1x64xf32>
    %92 = vector.broadcast %91 : vector<1x64xf32> to vector<8x64xf32>
    %93 = arith.addf %89, %92 : vector<8x64xf32>
    %94 = arith.mulf %93, %93 : vector<8x64xf32>
    %95 = arith.mulf %93, %94 : vector<8x64xf32>
    %cst_63 = arith.constant 4.471500e-02 : f32
    %96 = vector.broadcast %cst_63 : f32 to vector<8x64xf32>
    %97 = arith.mulf %96, %95 : vector<8x64xf32>
    %98 = arith.addf %93, %97 : vector<8x64xf32>
    %cst_64 = arith.constant 0.797884583 : f32
    %99 = vector.broadcast %cst_64 : f32 to vector<8x64xf32>
    %100 = arith.mulf %99, %98 : vector<8x64xf32>
    %101 = math.tanh %100 : vector<8x64xf32>
    %cst_65 = arith.constant 1.000000e+00 : f32
    %102 = vector.broadcast %cst_65 : f32 to vector<8x64xf32>
    %103 = arith.addf %102, %101 : vector<8x64xf32>
    %cst_66 = arith.constant 5.000000e-01 : f32
    %104 = vector.broadcast %cst_66 : f32 to vector<8x64xf32>
    %105 = arith.mulf %104, %103 : vector<8x64xf32>
    %106 = arith.mulf %93, %105 : vector<8x64xf32>
    %107 = arith.truncf %106 : vector<8x64xf32> to vector<8x64xbf16>
    %c0_67 = arith.constant 0 : index
    %c0_68 = arith.constant 0 : index
    %c0_69 = arith.constant 0 : index
    %108 = vector.load %arg18[%c0_67, %c0_68, %c0_69] : memref<1x64x32xbf16, #tpu.memory_space<vmem>>, vector<1x64x32xbf16>
    %109 = vector.shape_cast %108 : vector<1x64x32xbf16> to vector<64x32xbf16>
    %cst_70 = arith.constant dense<0.000000e+00> : vector<8x32xf32>
    %110 = tpu.matmul %107, %109, %cst_70 {dimension_numbers = #tpu.dot_dimension_numbers<[1], [0], [0], [1], [0, 0, 1, 1], [], []>} : vector<8x64xbf16>, vector<64x32xbf16>, vector<8x32xf32> -> vector<8x32xf32>
    %c0_71 = arith.constant 0 : index
    %c0_72 = arith.constant 0 : index
    %c0_73 = arith.constant 0 : index
    %111 = vector.load %arg19[%c0_71, %c0_72, %c0_73] : memref<1x1x32xf32, #tpu.memory_space<vmem>>, vector<1x1x32xf32>
    %112 = vector.shape_cast %111 : vector<1x1x32xf32> to vector<1x32xf32>
    %113 = vector.broadcast %112 : vector<1x32xf32> to vector<8x32xf32>
    %114 = arith.addf %110, %113 : vector<8x32xf32>
    %115 = arith.addf %85, %114 : vector<8x32xf32>
    %c0_74 = arith.constant 0 : index
    %c0_75 = arith.constant 0 : index
    %c0_76 = arith.constant 0 : index
    %116 = vector.load %arg20[%c0_74, %c0_75, %c0_76] : memref<1x1x32xf32, #tpu.memory_space<vmem>>, vector<1x1x32xf32>
    %117 = vector.shape_cast %116 : vector<1x1x32xf32> to vector<1x32xf32>
    %c0_77 = arith.constant 0 : index
    %c0_78 = arith.constant 0 : index
    %c0_79 = arith.constant 0 : index
    %118 = vector.load %arg21[%c0_77, %c0_78, %c0_79] : memref<1x1x32xf32, #tpu.memory_space<vmem>>, vector<1x1x32xf32>
    %119 = vector.shape_cast %118 : vector<1x1x32xf32> to vector<1x32xf32>
    %cst_80 = arith.constant dense<0.000000e+00> : vector<8xf32>
    %120 = vector.multi_reduction <add>, %115, %cst_80 [1] : vector<8x32xf32> to vector<8xf32>
    %121 = vector.shape_cast %120 : vector<8xf32> to vector<8x1xf32>
    %cst_81 = arith.constant 3.200000e+01 : f32
    %122 = vector.broadcast %cst_81 : f32 to vector<8x1xf32>
    %123 = arith.divf %121, %122 : vector<8x1xf32>
    %124 = vector.broadcast %123 : vector<8x1xf32> to vector<8x32xf32>
    %125 = arith.subf %115, %124 : vector<8x32xf32>
    %126 = arith.mulf %125, %125 : vector<8x32xf32>
    %cst_82 = arith.constant dense<0.000000e+00> : vector<8xf32>
    %127 = vector.multi_reduction <add>, %126, %cst_82 [1] : vector<8x32xf32> to vector<8xf32>
    %128 = vector.shape_cast %127 : vector<8xf32> to vector<8x1xf32>
    %cst_83 = arith.constant 3.200000e+01 : f32
    %129 = vector.broadcast %cst_83 : f32 to vector<8x1xf32>
    %130 = arith.divf %128, %129 : vector<8x1xf32>
    %131 = vector.broadcast %123 : vector<8x1xf32> to vector<8x32xf32>
    %132 = arith.subf %115, %131 : vector<8x32xf32>
    %cst_84 = arith.constant 9.99999974E-6 : f32
    %133 = vector.broadcast %cst_84 : f32 to vector<8x1xf32>
    %134 = arith.addf %130, %133 : vector<8x1xf32>
    %135 = math.rsqrt %134 : vector<8x1xf32>
    %136 = vector.broadcast %135 : vector<8x1xf32> to vector<8x32xf32>
    %137 = arith.mulf %132, %136 : vector<8x32xf32>
    %138 = vector.broadcast %117 : vector<1x32xf32> to vector<8x32xf32>
    %139 = arith.mulf %137, %138 : vector<8x32xf32>
    %140 = vector.broadcast %119 : vector<1x32xf32> to vector<8x32xf32>
    %141 = arith.addf %139, %140 : vector<8x32xf32>
    %c0_85 = arith.constant 0 : index
    %c0_86 = arith.constant 0 : index
    %142 = vector.load %arg27[%c0_85, %c0_86] : memref<8x32xf32, #tpu.memory_space<vmem>>, vector<8x32xf32>
    tpu.vector_store %arg27[%c0_85, %c0_86], %141 {strides = array<i32>} : memref<8x32xf32, #tpu.memory_space<vmem>>, vector<8x32xf32>,
    %c1_i32 = arith.constant 1 : i32
    %143 = arith.cmpi eq, %arg1, %c1_i32 : i32
    %144 = arith.extui %143 : i1 to i32
    %c0_i32_87 = arith.constant 0 : i32
    %145 = arith.cmpi ne, %144, %c0_i32_87 : i32
    scf.if %145 {
      %146 = vector.extract_strided_slice %141 {offsets = [0, 0], sizes = [1, 32], strides = [1, 1]} : vector<8x32xf32> to vector<1x32xf32>
      %147 = arith.truncf %146 : vector<1x32xf32> to vector<1x32xbf16>
      %c0_88 = arith.constant 0 : index
      %c0_89 = arith.constant 0 : index
      %148 = vector.load %arg22[%c0_88, %c0_89] : memref<32x32xbf16, #tpu.memory_space<vmem>>, vector<32x32xbf16>
      %cst_90 = arith.constant dense<0.000000e+00> : vector<1x32xf32>
      %149 = tpu.matmul %147, %148, %cst_90 {dimension_numbers = #tpu.dot_dimension_numbers<[1], [0], [0], [1], [0, 0, 1, 1], [], []>} : vector<1x32xbf16>, vector<32x32xbf16>, vector<1x32xf32> -> vector<1x32xf32>
      %c0_91 = arith.constant 0 : index
      %c0_92 = arith.constant 0 : index
      %150 = vector.load %arg23[%c0_91, %c0_92] : memref<1x32xf32, #tpu.memory_space<vmem>>, vector<1x32xf32>
      %151 = arith.addf %149, %150 : vector<1x32xf32>
      %152 = math.tanh %151 : vector<1x32xf32>
      %153 = arith.truncf %152 : vector<1x32xf32> to vector<1x32xbf16>
      %c0_93 = arith.constant 0 : index
      %c0_94 = arith.constant 0 : index
      %154 = vector.load %arg24[%c0_93, %c0_94] : memref<32x128xbf16, #tpu.memory_space<vmem>>, vector<32x128xbf16>
      %cst_95 = arith.constant dense<0.000000e+00> : vector<1x128xf32>
      %155 = tpu.matmul %153, %154, %cst_95 {dimension_numbers = #tpu.dot_dimension_numbers<[1], [0], [0], [1], [0, 0, 1, 1], [], []>} : vector<1x32xbf16>, vector<32x128xbf16>, vector<1x128xf32> -> vector<1x128xf32>
      %c0_96 = arith.constant 0 : index
      %c0_97 = arith.constant 0 : index
      %156 = vector.load %arg25[%c0_96, %c0_97] : memref<1x128xf32, #tpu.memory_space<vmem>>, vector<1x128xf32>
      %157 = arith.addf %155, %156 : vector<1x128xf32>
      %cst_98 = arith.constant 0.000000e+00 : f32
      %158 = vector.broadcast %cst_98 : f32 to vector<1x128xf32>
      %159 = arith.maximumf %157, %158 : vector<1x128xf32>
      %c0_99 = arith.constant 0 : index
      %c0_100 = arith.constant 0 : index
      %c0_101 = arith.constant 0 : index
      %160 = vector.load %arg26[%c0_99, %c0_100, %c0_101] : memref<1x1x128xf32, #tpu.memory_space<vmem>>, vector<1x1x128xf32>
      %161 = vector.shape_cast %160 : vector<1x1x128xf32> to vector<1x128xf32>
      %162 = vector.shape_cast %159 : vector<1x128xf32> to vector<1x1x128xf32>
      tpu.vector_store %arg26[%c0_99, %c0_100, %c0_101], %162 {strides = array<i32>} : memref<1x1x128xf32, #tpu.memory_space<vmem>>, vector<1x1x128xf32>,
    } else {
    }
    return
  }
  func.func @transform_0(%arg0: i32, %arg1: i32) -> (i32, i32, i32) {
    %c0_i32 = arith.constant 0 : i32
    %c0_i32_0 = arith.constant 0 : i32
    %c0_i32_1 = arith.constant 0 : i32
    return %arg0, %c0_i32, %c0_i32_0 : i32, i32, i32
  }
  func.func @transform_1(%arg0: i32, %arg1: i32) -> (i32, i32, i32) {
    %c0_i32 = arith.constant 0 : i32
    %c0_i32_0 = arith.constant 0 : i32
    %c0_i32_1 = arith.constant 0 : i32
    return %arg0, %c0_i32, %c0_i32_0 : i32, i32, i32
  }
  func.func @transform_2(%arg0: i32, %arg1: i32) -> (i32, i32) {
    %c0_i32 = arith.constant 0 : i32
    %c0_i32_0 = arith.constant 0 : i32
    %c0_i32_1 = arith.constant 0 : i32
    return %c0_i32, %c0_i32_0 : i32, i32
  }
  func.func @transform_3(%arg0: i32, %arg1: i32) -> (i32, i32) {
    %c0_i32 = arith.constant 0 : i32
    %c0_i32_0 = arith.constant 0 : i32
    %c0_i32_1 = arith.constant 0 : i32
    return %c0_i32, %c0_i32_0 : i32, i32
  }
  func.func @transform_4(%arg0: i32, %arg1: i32) -> (i32, i32, i32, i32) {
    %c0_i32 = arith.constant 0 : i32
    %c0_i32_0 = arith.constant 0 : i32
    %c0_i32_1 = arith.constant 0 : i32
    %c0_i32_2 = arith.constant 0 : i32
    return %arg1, %c0_i32, %c0_i32_0, %c0_i32_1 : i32, i32, i32, i32
  }
  func.func @transform_5(%arg0: i32, %arg1: i32) -> (i32, i32, i32, i32) {
    %c0_i32 = arith.constant 0 : i32
    %c0_i32_0 = arith.constant 0 : i32
    %c0_i32_1 = arith.constant 0 : i32
    %c0_i32_2 = arith.constant 0 : i32
    return %arg1, %c0_i32, %c0_i32_0, %c0_i32_1 : i32, i32, i32, i32
  }
  func.func @transform_6(%arg0: i32, %arg1: i32) -> (i32, i32, i32, i32) {
    %c0_i32 = arith.constant 0 : i32
    %c0_i32_0 = arith.constant 0 : i32
    %c0_i32_1 = arith.constant 0 : i32
    %c0_i32_2 = arith.constant 0 : i32
    return %arg1, %c0_i32, %c0_i32_0, %c0_i32_1 : i32, i32, i32, i32
  }
  func.func @transform_7(%arg0: i32, %arg1: i32) -> (i32, i32, i32, i32) {
    %c0_i32 = arith.constant 0 : i32
    %c0_i32_0 = arith.constant 0 : i32
    %c0_i32_1 = arith.constant 0 : i32
    %c0_i32_2 = arith.constant 0 : i32
    return %arg1, %c0_i32, %c0_i32_0, %c0_i32_1 : i32, i32, i32, i32
  }
  func.func @transform_8(%arg0: i32, %arg1: i32) -> (i32, i32, i32, i32) {
    %c0_i32 = arith.constant 0 : i32
    %c0_i32_0 = arith.constant 0 : i32
    %c0_i32_1 = arith.constant 0 : i32
    %c0_i32_2 = arith.constant 0 : i32
    return %arg1, %c0_i32, %c0_i32_0, %c0_i32_1 : i32, i32, i32, i32
  }
  func.func @transform_9(%arg0: i32, %arg1: i32) -> (i32, i32, i32, i32) {
    %c0_i32 = arith.constant 0 : i32
    %c0_i32_0 = arith.constant 0 : i32
    %c0_i32_1 = arith.constant 0 : i32
    %c0_i32_2 = arith.constant 0 : i32
    return %arg1, %c0_i32, %c0_i32_0, %c0_i32_1 : i32, i32, i32, i32
  }
  func.func @transform_10(%arg0: i32, %arg1: i32) -> (i32, i32, i32, i32) {
    %c0_i32 = arith.constant 0 : i32
    %c0_i32_0 = arith.constant 0 : i32
    %c0_i32_1 = arith.constant 0 : i32
    %c0_i32_2 = arith.constant 0 : i32
    return %arg1, %c0_i32, %c0_i32_0, %c0_i32_1 : i32, i32, i32, i32
  }
  func.func @transform_11(%arg0: i32, %arg1: i32) -> (i32, i32, i32) {
    %c0_i32 = arith.constant 0 : i32
    %c0_i32_0 = arith.constant 0 : i32
    %c0_i32_1 = arith.constant 0 : i32
    return %arg1, %c0_i32, %c0_i32_0 : i32, i32, i32
  }
  func.func @transform_12(%arg0: i32, %arg1: i32) -> (i32, i32, i32) {
    %c0_i32 = arith.constant 0 : i32
    %c0_i32_0 = arith.constant 0 : i32
    %c0_i32_1 = arith.constant 0 : i32
    return %arg1, %c0_i32, %c0_i32_0 : i32, i32, i32
  }
  func.func @transform_13(%arg0: i32, %arg1: i32) -> (i32, i32, i32) {
    %c0_i32 = arith.constant 0 : i32
    %c0_i32_0 = arith.constant 0 : i32
    %c0_i32_1 = arith.constant 0 : i32
    return %arg1, %c0_i32, %c0_i32_0 : i32, i32, i32
  }
  func.func @transform_14(%arg0: i32, %arg1: i32) -> (i32, i32, i32) {
    %c0_i32 = arith.constant 0 : i32
    %c0_i32_0 = arith.constant 0 : i32
    %c0_i32_1 = arith.constant 0 : i32
    return %arg1, %c0_i32, %c0_i32_0 : i32, i32, i32
  }
  func.func @transform_15(%arg0: i32, %arg1: i32) -> (i32, i32, i32) {
    %c0_i32 = arith.constant 0 : i32
    %c0_i32_0 = arith.constant 0 : i32
    %c0_i32_1 = arith.constant 0 : i32
    return %arg1, %c0_i32, %c0_i32_0 : i32, i32, i32
  }
  func.func @transform_16(%arg0: i32, %arg1: i32) -> (i32, i32, i32) {
    %c0_i32 = arith.constant 0 : i32
    %c0_i32_0 = arith.constant 0 : i32
    %c0_i32_1 = arith.constant 0 : i32
    return %arg1, %c0_i32, %c0_i32_0 : i32, i32, i32
  }
  func.func @transform_17(%arg0: i32, %arg1: i32) -> (i32, i32, i32) {
    %c0_i32 = arith.constant 0 : i32
    %c0_i32_0 = arith.constant 0 : i32
    %c0_i32_1 = arith.constant 0 : i32
    return %arg1, %c0_i32, %c0_i32_0 : i32, i32, i32
  }
  func.func @transform_18(%arg0: i32, %arg1: i32) -> (i32, i32, i32) {
    %c0_i32 = arith.constant 0 : i32
    %c0_i32_0 = arith.constant 0 : i32
    %c0_i32_1 = arith.constant 0 : i32
    return %arg1, %c0_i32, %c0_i32_0 : i32, i32, i32
  }
  func.func @transform_19(%arg0: i32, %arg1: i32) -> (i32, i32, i32) {
    %c0_i32 = arith.constant 0 : i32
    %c0_i32_0 = arith.constant 0 : i32
    %c0_i32_1 = arith.constant 0 : i32
    return %arg1, %c0_i32, %c0_i32_0 : i32, i32, i32
  }
  func.func @transform_20(%arg0: i32, %arg1: i32) -> (i32, i32) {
    %c0_i32 = arith.constant 0 : i32
    %c0_i32_0 = arith.constant 0 : i32
    %c0_i32_1 = arith.constant 0 : i32
    return %c0_i32, %c0_i32_0 : i32, i32
  }
  func.func @transform_21(%arg0: i32, %arg1: i32) -> (i32, i32) {
    %c0_i32 = arith.constant 0 : i32
    %c0_i32_0 = arith.constant 0 : i32
    %c0_i32_1 = arith.constant 0 : i32
    return %c0_i32, %c0_i32_0 : i32, i32
  }
  func.func @transform_22(%arg0: i32, %arg1: i32) -> (i32, i32) {
    %c0_i32 = arith.constant 0 : i32
    %c0_i32_0 = arith.constant 0 : i32
    %c0_i32_1 = arith.constant 0 : i32
    return %c0_i32, %c0_i32_0 : i32, i32
  }
  func.func @transform_23(%arg0: i32, %arg1: i32) -> (i32, i32) {
    %c0_i32 = arith.constant 0 : i32
    %c0_i32_0 = arith.constant 0 : i32
    %c0_i32_1 = arith.constant 0 : i32
    return %c0_i32, %c0_i32_0 : i32, i32
  }
  func.func @transform_24(%arg0: i32, %arg1: i32) -> (i32, i32, i32) {
    %c0_i32 = arith.constant 0 : i32
    %c0_i32_0 = arith.constant 0 : i32
    %c0_i32_1 = arith.constant 0 : i32
    return %arg0, %c0_i32, %c0_i32_0 : i32, i32, i32
  }
}

</mosaic_0001>

<llo_original>
// kernel: bert_classifier_forward.1
$region0: #{bert_classifier_forward.1}
  #allocation0 [shape = 'u32[]', space=smem, size = 0x4, offset = 0x4, fixed_abs, tag = 'smem constant byte address 0x4 - core index']
  #allocation1 [shape = 'u32[144,128]{1,0:T(1,128)}', space=vmem, size = 0x12000, scoped, tag = 'internal scratch']
  #allocation2 [shape = 'f32[8,32]{1,0:T(8,128)}', space=vmem, size = 0x1000, scoped, tag = 'scratch operand']
  %s0 = inlined_call_operand.vmem [shape: f32[2,8,32], index: 0, kind: input, shape index: {}]
  %s1 = inlined_call_operand.vmem [shape: f32[2,1,8], index: 1, kind: input, shape index: {}]
  %s2 = inlined_call_operand.vmem [shape: f32[1,32], index: 2, kind: input, shape index: {}]
  %s3 = inlined_call_operand.vmem [shape: f32[1,32], index: 3, kind: input, shape index: {}]
  %s4 = inlined_call_operand.vmem [shape: bf16[2,4,32,8], index: 4, kind: input, shape index: {}]
  %s5 = inlined_call_operand.vmem [shape: f32[2,4,1,8], index: 5, kind: input, shape index: {}]
  %s6 = inlined_call_operand.vmem [shape: bf16[2,4,32,8], index: 6, kind: input, shape index: {}]
  %s7 = inlined_call_operand.vmem [shape: f32[2,4,1,8], index: 7, kind: input, shape index: {}]
  %s8 = inlined_call_operand.vmem [shape: bf16[2,4,32,8], index: 8, kind: input, shape index: {}]
  %s9 = inlined_call_operand.vmem [shape: f32[2,4,1,8], index: 9, kind: input, shape index: {}]
  %s10 = inlined_call_operand.vmem [shape: bf16[2,4,8,32], index: 10, kind: input, shape index: {}]
  %s11 = inlined_call_operand.vmem [shape: f32[2,1,32], index: 11, kind: input, shape index: {}]
  %s12 = inlined_call_operand.vmem [shape: f32[2,1,32], index: 12, kind: input, shape index: {}]
  %s13 = inlined_call_operand.vmem [shape: f32[2,1,32], index: 13, kind: input, shape index: {}]
  %s14 = inlined_call_operand.vmem [shape: bf16[2,32,64], index: 14, kind: input, shape index: {}]
  %s15 = inlined_call_operand.vmem [shape: f32[2,1,64], index: 15, kind: input, shape index: {}]
  %s16 = inlined_call_operand.vmem [shape: bf16[2,64,32], index: 16, kind: input, shape index: {}]
  %s17 = inlined_call_operand.vmem [shape: f32[2,1,32], index: 17, kind: input, shape index: {}]
  %s18 = inlined_call_operand.vmem [shape: f32[2,1,32], index: 18, kind: input, shape index: {}]
  %s19 = inlined_call_operand.vmem [shape: f32[2,1,32], index: 19, kind: input, shape index: {}]
  %s20 = inlined_call_operand.vmem [shape: bf16[32,32], index: 20, kind: input, shape index: {}]
  %s21 = inlined_call_operand.vmem [shape: f32[1,32], index: 21, kind: input, shape index: {}]
  %s22 = inlined_call_operand.vmem [shape: bf16[32,128], index: 22, kind: input, shape index: {}]
  %s23 = inlined_call_operand.vmem [shape: f32[1,128], index: 23, kind: input, shape index: {}]
  %s24 = inlined_call_operand.hbm [shape: f32[2,1,128], index: 24, kind: output, shape index: {}]
  %s25 = sld [smem:[#allocation0]]
  $region137: #{bert_classifier_forward.1} parent=0
    _
  %s27 = ssub.s32 1, %s25
  %s28 = scalar_select 0, %s27, %s25
  $region1: #{bert_classifier_forward.1} parent=0
    #allocation3 [shape = 'u8[1024]{0}', space=vmem, size = 0x400, scoped, tag = 'output window, operand 0']
    #allocation4 [shape = 's32[2]{0}', space=sflag, size = 0x8, scoped, tag = 'scoped memory for bert_classifier_forward.1']
    %29 = vsyncpa [#allocation4], 0
    %s30 = scalar_lea.sflag [#allocation4], 1
    %31 = vsyncpa %s30, 0
    loop: start=0, step=1, limit=6
    $region2: #{bert_classifier_forward.1} parent=1 // loop_pre_header
      _
    $region3: #{bert_classifier_forward.1} parent=1 // loop_header
      %s33 = sphi 0, %s37
      %p34 = scmp.ge.s32.totalorder %s33, 6
      %s40 = sphi 0, %s52
      %s41 = sphi 0, %s48
      %s42 = sphi 0, %s40
      %s43 = sphi 0, %s41
      %s44 = sphi 0, %s42
      %s45 = sphi 0, %s43
      %s55 = sphi 0, %s57
      %s58 = sphi 0, %s55
      %s59 = sphi 0, %s58
      %s75 = sphi 0, %s59
      %s81 = sphi 0, %s83
      %s84 = sphi 0, %s81
      %s85 = sphi 0, %s84
      %s101 = sphi 0, %s85
      %s105 = sphi 0, %s105
      %s107 = sphi 0, %s105
      %s108 = sphi 0, %s107
      %s122 = sphi 0, %s108
      %s126 = sphi 0, %s126
      %s128 = sphi 0, %s126
      %s129 = sphi 0, %s128
      %s143 = sphi 0, %s129
      %s149 = sphi 0, %s151
      %s152 = sphi 0, %s149
      %s153 = sphi 0, %s152
      %s169 = sphi 0, %s153
      %s175 = sphi 0, %s177
      %s178 = sphi 0, %s175
      %s179 = sphi 0, %s178
      %s195 = sphi 0, %s179
      %s201 = sphi 0, %s203
      %s204 = sphi 0, %s201
      %s205 = sphi 0, %s204
      %s221 = sphi 0, %s205
      %s227 = sphi 0, %s229
      %s230 = sphi 0, %s227
      %s231 = sphi 0, %s230
      %s247 = sphi 0, %s231
      %s253 = sphi 0, %s255
      %s256 = sphi 0, %s253
      %s257 = sphi 0, %s256
      %s273 = sphi 0, %s257
      %s279 = sphi 0, %s281
      %s282 = sphi 0, %s279
      %s283 = sphi 0, %s282
      %s299 = sphi 0, %s283
      %s305 = sphi 0, %s307
      %s308 = sphi 0, %s305
      %s309 = sphi 0, %s308
      %s325 = sphi 0, %s309
      %s331 = sphi 0, %s333
      %s334 = sphi 0, %s331
      %s335 = sphi 0, %s334
      %s351 = sphi 0, %s335
      %s357 = sphi 0, %s359
      %s360 = sphi 0, %s357
      %s361 = sphi 0, %s360
      %s377 = sphi 0, %s361
      %s383 = sphi 0, %s385
      %s386 = sphi 0, %s383
      %s387 = sphi 0, %s386
      %s403 = sphi 0, %s387
      %s409 = sphi 0, %s411
      %s412 = sphi 0, %s409
      %s413 = sphi 0, %s412
      %s429 = sphi 0, %s413
      %s435 = sphi 0, %s437
      %s438 = sphi 0, %s435
      %s439 = sphi 0, %s438
      %s455 = sphi 0, %s439
      %s461 = sphi 0, %s463
      %s464 = sphi 0, %s461
      %s465 = sphi 0, %s464
      %s481 = sphi 0, %s465
      %s487 = sphi 0, %s489
      %s490 = sphi 0, %s487
      %s491 = sphi 0, %s490
      %s507 = sphi 0, %s491
      %s513 = sphi 0, %s515
      %s516 = sphi 0, %s513
      %s517 = sphi 0, %s516
      %s533 = sphi 0, %s517
      %s539 = sphi 0, %s541
      %s542 = sphi 0, %s539
      %s543 = sphi 0, %s542
      %s559 = sphi 0, %s543
      %s563 = sphi 0, %s563
      %s565 = sphi 0, %s563
      %s566 = sphi 0, %s565
      %s580 = sphi 0, %s566
      %s584 = sphi 0, %s584
      %s586 = sphi 0, %s584
      %s587 = sphi 0, %s586
      %s601 = sphi 0, %s587
      %s605 = sphi 0, %s605
      %s607 = sphi 0, %s605
      %s608 = sphi 0, %s607
      %s622 = sphi 0, %s608
      %s626 = sphi 0, %s626
      %s628 = sphi 0, %s626
      %s629 = sphi 0, %s628
      %s643 = sphi 0, %s629
      %s649 = sphi 0, %s651
      %s652 = sphi 0, %s649
      %s653 = sphi 0, %s652
      %s669 = sphi 0, %s653
    $region4: #{bert_classifier_forward.1} parent=1 // loop_header_branch
      %36 = sbr.rel (%p34) target = $region8
    $region5: #{bert_classifier_forward.1} parent=1 // loop_body
      %s38 = ssub.s32 %s33, 1
      %s39 = ssub.s32 %s33, 2
      %s46 = sadd.s32 1, %s41
      %p47 = scmp.ge.s32.totalorder %s46, 2
      %s48 = scalar_select %p47, 0, %s46
      %s49 = sadd.s32 1, %s40
      %s50 = scalar_select %p47, %s49, %s40
      %p51 = scmp.ge.s32.totalorder %s50, 2
      %s52 = scalar_select %p51, 0, %s50
      %s53 = ssub.s32 %s40, %s52
      %p54 = scmp.eq.s32.totalorder %s53, 0
      %s56 = sadd.s32 %s55, 1
      %s57 = scalar_select %p54, %s55, %s56
      %p60 = pneg %p54
      %p61 = scmp.eq.s32.totalorder %s33, 3
      %p62 = por %p60, %p61
      %p63 = scmp.ne.s32.totalorder %s55, %s58
      %p64 = scmp.eq.s32.totalorder %s33, 0
      %p65 = por %p63, %p64
      %p66 = scmp.ne.s32.totalorder %s55, %s58
      %p67 = scmp.eq.s32.totalorder %s38, 3
      %p68 = por %p66, %p67
      %p69 = scmp.ne.s32.totalorder %s58, %s59
      %p70 = scmp.eq.s32.totalorder %s38, 0
      %p71 = por %p69, %p70
      %p72 = scmp.ne.s32.totalorder %s58, %s59
      %p73 = scmp.eq.s32.totalorder %s39, 3
      %p74 = por %p72, %p73
      %p76 = scmp.ne.s32.totalorder %s59, %s75
      %p77 = scmp.eq.s32.totalorder %s39, 0
      %p78 = por %p76, %p77
      %s79 = ssub.s32 %s40, %s52
      %p80 = scmp.eq.s32.totalorder %s79, 0
      %s82 = sadd.s32 %s81, 1
      %s83 = scalar_select %p80, %s81, %s82
      %p86 = pneg %p80
      %p87 = scmp.eq.s32.totalorder %s33, 3
      %p88 = por %p86, %p87
      %p89 = scmp.ne.s32.totalorder %s81, %s84
      %p90 = scmp.eq.s32.totalorder %s33, 0
      %p91 = por %p89, %p90
      %p92 = scmp.ne.s32.totalorder %s81, %s84
      %p93 = scmp.eq.s32.totalorder %s38, 3
      %p94 = por %p92, %p93
      %p95 = scmp.ne.s32.totalorder %s84, %s85
      %p96 = scmp.eq.s32.totalorder %s38, 0
      %p97 = por %p95, %p96
      %p98 = scmp.ne.s32.totalorder %s84, %s85
      %p99 = scmp.eq.s32.totalorder %s39, 3
      %p100 = por %p98, %p99
      %p102 = scmp.ne.s32.totalorder %s85, %s101
      %p103 = scmp.eq.s32.totalorder %s39, 0
      %p104 = por %p102, %p103
      %s106 = sadd.s32 %s105, 1
      %p109 = scmp.eq.s32.totalorder %s33, 3
      %p110 = scmp.ne.s32.totalorder %s105, %s107
      %p111 = scmp.eq.s32.totalorder %s33, 0
      %p112 = por %p110, %p111
      %p113 = scmp.ne.s32.totalorder %s105, %s107
      %p114 = scmp.eq.s32.totalorder %s38, 3
      %p115 = por %p113, %p114
      %p116 = scmp.ne.s32.totalorder %s107, %s108
      %p117 = scmp.eq.s32.totalorder %s38, 0
      %p118 = por %p116, %p117
      %p119 = scmp.ne.s32.totalorder %s107, %s108
      %p120 = scmp.eq.s32.totalorder %s39, 3
      %p121 = por %p119, %p120
      %p123 = scmp.ne.s32.totalorder %s108, %s122
      %p124 = scmp.eq.s32.totalorder %s39, 0
      %p125 = por %p123, %p124
      %s127 = sadd.s32 %s126, 1
      %p130 = scmp.eq.s32.totalorder %s33, 3
      %p131 = scmp.ne.s32.totalorder %s126, %s128
      %p132 = scmp.eq.s32.totalorder %s33, 0
      %p133 = por %p131, %p132
      %p134 = scmp.ne.s32.totalorder %s126, %s128
      %p135 = scmp.eq.s32.totalorder %s38, 3
      %p136 = por %p134, %p135
      %p137 = scmp.ne.s32.totalorder %s128, %s129
      %p138 = scmp.eq.s32.totalorder %s38, 0
      %p139 = por %p137, %p138
      %p140 = scmp.ne.s32.totalorder %s128, %s129
      %p141 = scmp.eq.s32.totalorder %s39, 3
      %p142 = por %p140, %p141
      %p144 = scmp.ne.s32.totalorder %s129, %s143
      %p145 = scmp.eq.s32.totalorder %s39, 0
      %p146 = por %p144, %p145
      %s147 = ssub.s32 %s41, %s48
      %p148 = scmp.eq.s32.totalorder %s147, 0
      %s150 = sadd.s32 %s149, 1
      %s151 = scalar_select %p148, %s149, %s150
      %p154 = pneg %p148
      %p155 = scmp.eq.s32.totalorder %s33, 3
      %p156 = por %p154, %p155
      %p157 = scmp.ne.s32.totalorder %s149, %s152
      %p158 = scmp.eq.s32.totalorder %s33, 0
      %p159 = por %p157, %p158
      %p160 = scmp.ne.s32.totalorder %s149, %s152
      %p161 = scmp.eq.s32.totalorder %s38, 3
      %p162 = por %p160, %p161
      %p163 = scmp.ne.s32.totalorder %s152, %s153
      %p164 = scmp.eq.s32.totalorder %s38, 0
      %p165 = por %p163, %p164
      %p166 = scmp.ne.s32.totalorder %s152, %s153
      %p167 = scmp.eq.s32.totalorder %s39, 3
      %p168 = por %p166, %p167
      %p170 = scmp.ne.s32.totalorder %s153, %s169
      %p171 = scmp.eq.s32.totalorder %s39, 0
      %p172 = por %p170, %p171
      %s173 = ssub.s32 %s41, %s48
      %p174 = scmp.eq.s32.totalorder %s173, 0
      %s176 = sadd.s32 %s175, 1
      %s177 = scalar_select %p174, %s175, %s176
      %p180 = pneg %p174
      %p181 = scmp.eq.s32.totalorder %s33, 3
      %p182 = por %p180, %p181
      %p183 = scmp.ne.s32.totalorder %s175, %s178
      %p184 = scmp.eq.s32.totalorder %s33, 0
      %p185 = por %p183, %p184
      %p186 = scmp.ne.s32.totalorder %s175, %s178
      %p187 = scmp.eq.s32.totalorder %s38, 3
      %p188 = por %p186, %p187
      %p189 = scmp.ne.s32.totalorder %s178, %s179
      %p190 = scmp.eq.s32.totalorder %s38, 0
      %p191 = por %p189, %p190
      %p192 = scmp.ne.s32.totalorder %s178, %s179
      %p193 = scmp.eq.s32.totalorder %s39, 3
      %p194 = por %p192, %p193
      %p196 = scmp.ne.s32.totalorder %s179, %s195
      %p197 = scmp.eq.s32.totalorder %s39, 0
      %p198 = por %p196, %p197
      %s199 = ssub.s32 %s41, %s48
      %p200 = scmp.eq.s32.totalorder %s199, 0
      %s202 = sadd.s32 %s201, 1
      %s203 = scalar_select %p200, %s201, %s202
      %p206 = pneg %p200
      %p207 = scmp.eq.s32.totalorder %s33, 3
      %p208 = por %p206, %p207
      %p209 = scmp.ne.s32.totalorder %s201, %s204
      %p210 = scmp.eq.s32.totalorder %s33, 0
      %p211 = por %p209, %p210
      %p212 = scmp.ne.s32.totalorder %s201, %s204
      %p213 = scmp.eq.s32.totalorder %s38, 3
      %p214 = por %p212, %p213
      %p215 = scmp.ne.s32.totalorder %s204, %s205
      %p216 = scmp.eq.s32.totalorder %s38, 0
      %p217 = por %p215, %p216
      %p218 = scmp.ne.s32.totalorder %s204, %s205
      %p219 = scmp.eq.s32.totalorder %s39, 3
      %p220 = por %p218, %p219
      %p222 = scmp.ne.s32.totalorder %s205, %s221
      %p223 = scmp.eq.s32.totalorder %s39, 0
      %p224 = por %p222, %p223
      %s225 = ssub.s32 %s41, %s48
      %p226 = scmp.eq.s32.totalorder %s225, 0
      %s228 = sadd.s32 %s227, 1
      %s229 = scalar_select %p226, %s227, %s228
      %p232 = pneg %p226
      %p233 = scmp.eq.s32.totalorder %s33, 3
      %p234 = por %p232, %p233
      %p235 = scmp.ne.s32.totalorder %s227, %s230
      %p236 = scmp.eq.s32.totalorder %s33, 0
      %p237 = por %p235, %p236
      %p238 = scmp.ne.s32.totalorder %s227, %s230
      %p239 = scmp.eq.s32.totalorder %s38, 3
      %p240 = por %p238, %p239
      %p241 = scmp.ne.s32.totalorder %s230, %s231
      %p242 = scmp.eq.s32.totalorder %s38, 0
      %p243 = por %p241, %p242
      %p244 = scmp.ne.s32.totalorder %s230, %s231
      %p245 = scmp.eq.s32.totalorder %s39, 3
      %p246 = por %p244, %p245
      %p248 = scmp.ne.s32.totalorder %s231, %s247
      %p249 = scmp.eq.s32.totalorder %s39, 0
      %p250 = por %p248, %p249
      %s251 = ssub.s32 %s41, %s48
      %p252 = scmp.eq.s32.totalorder %s251, 0
      %s254 = sadd.s32 %s253, 1
      %s255 = scalar_select %p252, %s253, %s254
      %p258 = pneg %p252
      %p259 = scmp.eq.s32.totalorder %s33, 3
      %p260 = por %p258, %p259
      %p261 = scmp.ne.s32.totalorder %s253, %s256
      %p262 = scmp.eq.s32.totalorder %s33, 0
      %p263 = por %p261, %p262
      %p264 = scmp.ne.s32.totalorder %s253, %s256
      %p265 = scmp.eq.s32.totalorder %s38, 3
      %p266 = por %p264, %p265
      %p267 = scmp.ne.s32.totalorder %s256, %s257
      %p268 = scmp.eq.s32.totalorder %s38, 0
      %p269 = por %p267, %p268
      %p270 = scmp.ne.s32.totalorder %s256, %s257
      %p271 = scmp.eq.s32.totalorder %s39, 3
      %p272 = por %p270, %p271
      %p274 = scmp.ne.s32.totalorder %s257, %s273
      %p275 = scmp.eq.s32.totalorder %s39, 0
      %p276 = por %p274, %p275
      %s277 = ssub.s32 %s41, %s48
      %p278 = scmp.eq.s32.totalorder %s277, 0
      %s280 = sadd.s32 %s279, 1
      %s281 = scalar_select %p278, %s279, %s280
      %p284 = pneg %p278
      %p285 = scmp.eq.s32.totalorder %s33, 3
      %p286 = por %p284, %p285
      %p287 = scmp.ne.s32.totalorder %s279, %s282
      %p288 = scmp.eq.s32.totalorder %s33, 0
      %p289 = por %p287, %p288
      %p290 = scmp.ne.s32.totalorder %s279, %s282
      %p291 = scmp.eq.s32.totalorder %s38, 3
      %p292 = por %p290, %p291
      %p293 = scmp.ne.s32.totalorder %s282, %s283
      %p294 = scmp.eq.s32.totalorder %s38, 0
      %p295 = por %p293, %p294
      %p296 = scmp.ne.s32.totalorder %s282, %s283
      %p297 = scmp.eq.s32.totalorder %s39, 3
      %p298 = por %p296, %p297
      %p300 = scmp.ne.s32.totalorder %s283, %s299
      %p301 = scmp.eq.s32.totalorder %s39, 0
      %p302 = por %p300, %p301
      %s303 = ssub.s32 %s41, %s48
      %p304 = scmp.eq.s32.totalorder %s303, 0
      %s306 = sadd.s32 %s305, 1
      %s307 = scalar_select %p304, %s305, %s306
      %p310 = pneg %p304
      %p311 = scmp.eq.s32.totalorder %s33, 3
      %p312 = por %p310, %p311
      %p313 = scmp.ne.s32.totalorder %s305, %s308
      %p314 = scmp.eq.s32.totalorder %s33, 0
      %p315 = por %p313, %p314
      %p316 = scmp.ne.s32.totalorder %s305, %s308
      %p317 = scmp.eq.s32.totalorder %s38, 3
      %p318 = por %p316, %p317
      %p319 = scmp.ne.s32.totalorder %s308, %s309
      %p320 = scmp.eq.s32.totalorder %s38, 0
      %p321 = por %p319, %p320
      %p322 = scmp.ne.s32.totalorder %s308, %s309
      %p323 = scmp.eq.s32.totalorder %s39, 3
      %p324 = por %p322, %p323
      %p326 = scmp.ne.s32.totalorder %s309, %s325
      %p327 = scmp.eq.s32.totalorder %s39, 0
      %p328 = por %p326, %p327
      %s329 = ssub.s32 %s41, %s48
      %p330 = scmp.eq.s32.totalorder %s329, 0
      %s332 = sadd.s32 %s331, 1
      %s333 = scalar_select %p330, %s331, %s332
      %p336 = pneg %p330
      %p337 = scmp.eq.s32.totalorder %s33, 3
      %p338 = por %p336, %p337
      %p339 = scmp.ne.s32.totalorder %s331, %s334
      %p340 = scmp.eq.s32.totalorder %s33, 0
      %p341 = por %p339, %p340
      %p342 = scmp.ne.s32.totalorder %s331, %s334
      %p343 = scmp.eq.s32.totalorder %s38, 3
      %p344 = por %p342, %p343
      %p345 = scmp.ne.s32.totalorder %s334, %s335
      %p346 = scmp.eq.s32.totalorder %s38, 0
      %p347 = por %p345, %p346
      %p348 = scmp.ne.s32.totalorder %s334, %s335
      %p349 = scmp.eq.s32.totalorder %s39, 3
      %p350 = por %p348, %p349
      %p352 = scmp.ne.s32.totalorder %s335, %s351
      %p353 = scmp.eq.s32.totalorder %s39, 0
      %p354 = por %p352, %p353
      %s355 = ssub.s32 %s41, %s48
      %p356 = scmp.eq.s32.totalorder %s355, 0
      %s358 = sadd.s32 %s357, 1
      %s359 = scalar_select %p356, %s357, %s358
      %p362 = pneg %p356
      %p363 = scmp.eq.s32.totalorder %s33, 3
      %p364 = por %p362, %p363
      %p365 = scmp.ne.s32.totalorder %s357, %s360
      %p366 = scmp.eq.s32.totalorder %s33, 0
      %p367 = por %p365, %p366
      %p368 = scmp.ne.s32.totalorder %s357, %s360
      %p369 = scmp.eq.s32.totalorder %s38, 3
      %p370 = por %p368, %p369
      %p371 = scmp.ne.s32.totalorder %s360, %s361
      %p372 = scmp.eq.s32.totalorder %s38, 0
      %p373 = por %p371, %p372
      %p374 = scmp.ne.s32.totalorder %s360, %s361
      %p375 = scmp.eq.s32.totalorder %s39, 3
      %p376 = por %p374, %p375
      %p378 = scmp.ne.s32.totalorder %s361, %s377
      %p379 = scmp.eq.s32.totalorder %s39, 0
      %p380 = por %p378, %p379
      %s381 = ssub.s32 %s41, %s48
      %p382 = scmp.eq.s32.totalorder %s381, 0
      %s384 = sadd.s32 %s383, 1
      %s385 = scalar_select %p382, %s383, %s384
      %p388 = pneg %p382
      %p389 = scmp.eq.s32.totalorder %s33, 3
      %p390 = por %p388, %p389
      %p391 = scmp.ne.s32.totalorder %s383, %s386
      %p392 = scmp.eq.s32.totalorder %s33, 0
      %p393 = por %p391, %p392
      %p394 = scmp.ne.s32.totalorder %s383, %s386
      %p395 = scmp.eq.s32.totalorder %s38, 3
      %p396 = por %p394, %p395
      %p397 = scmp.ne.s32.totalorder %s386, %s387
      %p398 = scmp.eq.s32.totalorder %s38, 0
      %p399 = por %p397, %p398
      %p400 = scmp.ne.s32.totalorder %s386, %s387
      %p401 = scmp.eq.s32.totalorder %s39, 3
      %p402 = por %p400, %p401
      %p404 = scmp.ne.s32.totalorder %s387, %s403
      %p405 = scmp.eq.s32.totalorder %s39, 0
      %p406 = por %p404, %p405
      %s407 = ssub.s32 %s41, %s48
      %p408 = scmp.eq.s32.totalorder %s407, 0
      %s410 = sadd.s32 %s409, 1
      %s411 = scalar_select %p408, %s409, %s410
      %p414 = pneg %p408
      %p415 = scmp.eq.s32.totalorder %s33, 3
      %p416 = por %p414, %p415
      %p417 = scmp.ne.s32.totalorder %s409, %s412
      %p418 = scmp.eq.s32.totalorder %s33, 0
      %p419 = por %p417, %p418
      %p420 = scmp.ne.s32.totalorder %s409, %s412
      %p421 = scmp.eq.s32.totalorder %s38, 3
      %p422 = por %p420, %p421
      %p423 = scmp.ne.s32.totalorder %s412, %s413
      %p424 = scmp.eq.s32.totalorder %s38, 0
      %p425 = por %p423, %p424
      %p426 = scmp.ne.s32.totalorder %s412, %s413
      %p427 = scmp.eq.s32.totalorder %s39, 3
      %p428 = por %p426, %p427
      %p430 = scmp.ne.s32.totalorder %s413, %s429
      %p431 = scmp.eq.s32.totalorder %s39, 0
      %p432 = por %p430, %p431
      %s433 = ssub.s32 %s41, %s48
      %p434 = scmp.eq.s32.totalorder %s433, 0
      %s436 = sadd.s32 %s435, 1
      %s437 = scalar_select %p434, %s435, %s436
      %p440 = pneg %p434
      %p441 = scmp.eq.s32.totalorder %s33, 3
      %p442 = por %p440, %p441
      %p443 = scmp.ne.s32.totalorder %s435, %s438
      %p444 = scmp.eq.s32.totalorder %s33, 0
      %p445 = por %p443, %p444
      %p446 = scmp.ne.s32.totalorder %s435, %s438
      %p447 = scmp.eq.s32.totalorder %s38, 3
      %p448 = por %p446, %p447
      %p449 = scmp.ne.s32.totalorder %s438, %s439
      %p450 = scmp.eq.s32.totalorder %s38, 0
      %p451 = por %p449, %p450
      %p452 = scmp.ne.s32.totalorder %s438, %s439
      %p453 = scmp.eq.s32.totalorder %s39, 3
      %p454 = por %p452, %p453
      %p456 = scmp.ne.s32.totalorder %s439, %s455
      %p457 = scmp.eq.s32.totalorder %s39, 0
      %p458 = por %p456, %p457
      %s459 = ssub.s32 %s41, %s48
      %p460 = scmp.eq.s32.totalorder %s459, 0
      %s462 = sadd.s32 %s461, 1
      %s463 = scalar_select %p460, %s461, %s462
      %p466 = pneg %p460
      %p467 = scmp.eq.s32.totalorder %s33, 3
      %p468 = por %p466, %p467
      %p469 = scmp.ne.s32.totalorder %s461, %s464
      %p470 = scmp.eq.s32.totalorder %s33, 0
      %p471 = por %p469, %p470
      %p472 = scmp.ne.s32.totalorder %s461, %s464
      %p473 = scmp.eq.s32.totalorder %s38, 3
      %p474 = por %p472, %p473
      %p475 = scmp.ne.s32.totalorder %s464, %s465
      %p476 = scmp.eq.s32.totalorder %s38, 0
      %p477 = por %p475, %p476
      %p478 = scmp.ne.s32.totalorder %s464, %s465
      %p479 = scmp.eq.s32.totalorder %s39, 3
      %p480 = por %p478, %p479
      %p482 = scmp.ne.s32.totalorder %s465, %s481
      %p483 = scmp.eq.s32.totalorder %s39, 0
      %p484 = por %p482, %p483
      %s485 = ssub.s32 %s41, %s48
      %p486 = scmp.eq.s32.totalorder %s485, 0
      %s488 = sadd.s32 %s487, 1
      %s489 = scalar_select %p486, %s487, %s488
      %p492 = pneg %p486
      %p493 = scmp.eq.s32.totalorder %s33, 3
      %p494 = por %p492, %p493
      %p495 = scmp.ne.s32.totalorder %s487, %s490
      %p496 = scmp.eq.s32.totalorder %s33, 0
      %p497 = por %p495, %p496
      %p498 = scmp.ne.s32.totalorder %s487, %s490
      %p499 = scmp.eq.s32.totalorder %s38, 3
      %p500 = por %p498, %p499
      %p501 = scmp.ne.s32.totalorder %s490, %s491
      %p502 = scmp.eq.s32.totalorder %s38, 0
      %p503 = por %p501, %p502
      %p504 = scmp.ne.s32.totalorder %s490, %s491
      %p505 = scmp.eq.s32.totalorder %s39, 3
      %p506 = por %p504, %p505
      %p508 = scmp.ne.s32.totalorder %s491, %s507
      %p509 = scmp.eq.s32.totalorder %s39, 0
      %p510 = por %p508, %p509
      %s511 = ssub.s32 %s41, %s48
      %p512 = scmp.eq.s32.totalorder %s511, 0
      %s514 = sadd.s32 %s513, 1
      %s515 = scalar_select %p512, %s513, %s514
      %p518 = pneg %p512
      %p519 = scmp.eq.s32.totalorder %s33, 3
      %p520 = por %p518, %p519
      %p521 = scmp.ne.s32.totalorder %s513, %s516
      %p522 = scmp.eq.s32.totalorder %s33, 0
      %p523 = por %p521, %p522
      %p524 = scmp.ne.s32.totalorder %s513, %s516
      %p525 = scmp.eq.s32.totalorder %s38, 3
      %p526 = por %p524, %p525
      %p527 = scmp.ne.s32.totalorder %s516, %s517
      %p528 = scmp.eq.s32.totalorder %s38, 0
      %p529 = por %p527, %p528
      %p530 = scmp.ne.s32.totalorder %s516, %s517
      %p531 = scmp.eq.s32.totalorder %s39, 3
      %p532 = por %p530, %p531
      %p534 = scmp.ne.s32.totalorder %s517, %s533
      %p535 = scmp.eq.s32.totalorder %s39, 0
      %p536 = por %p534, %p535
      %s537 = ssub.s32 %s41, %s48
      %p538 = scmp.eq.s32.totalorder %s537, 0
      %s540 = sadd.s32 %s539, 1
      %s541 = scalar_select %p538, %s539, %s540
      %p544 = pneg %p538
      %p545 = scmp.eq.s32.totalorder %s33, 3
      %p546 = por %p544, %p545
      %p547 = scmp.ne.s32.totalorder %s539, %s542
      %p548 = scmp.eq.s32.totalorder %s33, 0
      %p549 = por %p547, %p548
      %p550 = scmp.ne.s32.totalorder %s539, %s542
      %p551 = scmp.eq.s32.totalorder %s38, 3
      %p552 = por %p550, %p551
      %p553 = scmp.ne.s32.totalorder %s542, %s543
      %p554 = scmp.eq.s32.totalorder %s38, 0
      %p555 = por %p553, %p554
      %p556 = scmp.ne.s32.totalorder %s542, %s543
      %p557 = scmp.eq.s32.totalorder %s39, 3
      %p558 = por %p556, %p557
      %p560 = scmp.ne.s32.totalorder %s543, %s559
      %p561 = scmp.eq.s32.totalorder %s39, 0
      %p562 = por %p560, %p561
      %s564 = sadd.s32 %s563, 1
      %p567 = scmp.eq.s32.totalorder %s33, 3
      %p568 = scmp.ne.s32.totalorder %s563, %s565
      %p569 = scmp.eq.s32.totalorder %s33, 0
      %p570 = por %p568, %p569
      %p571 = scmp.ne.s32.totalorder %s563, %s565
      %p572 = scmp.eq.s32.totalorder %s38, 3
      %p573 = por %p571, %p572
      %p574 = scmp.ne.s32.totalorder %s565, %s566
      %p575 = scmp.eq.s32.totalorder %s38, 0
      %p576 = por %p574, %p575
      %p577 = scmp.ne.s32.totalorder %s565, %s566
      %p578 = scmp.eq.s32.totalorder %s39, 3
      %p579 = por %p577, %p578
      %p581 = scmp.ne.s32.totalorder %s566, %s580
      %p582 = scmp.eq.s32.totalorder %s39, 0
      %p583 = por %p581, %p582
      %s585 = sadd.s32 %s584, 1
      %p588 = scmp.eq.s32.totalorder %s33, 3
      %p589 = scmp.ne.s32.totalorder %s584, %s586
      %p590 = scmp.eq.s32.totalorder %s33, 0
      %p591 = por %p589, %p590
      %p592 = scmp.ne.s32.totalorder %s584, %s586
      %p593 = scmp.eq.s32.totalorder %s38, 3
      %p594 = por %p592, %p593
      %p595 = scmp.ne.s32.totalorder %s586, %s587
      %p596 = scmp.eq.s32.totalorder %s38, 0
      %p597 = por %p595, %p596
      %p598 = scmp.ne.s32.totalorder %s586, %s587
      %p599 = scmp.eq.s32.totalorder %s39, 3
      %p600 = por %p598, %p599
      %p602 = scmp.ne.s32.totalorder %s587, %s601
      %p603 = scmp.eq.s32.totalorder %s39, 0
      %p604 = por %p602, %p603
      %s606 = sadd.s32 %s605, 1
      %p609 = scmp.eq.s32.totalorder %s33, 3
      %p610 = scmp.ne.s32.totalorder %s605, %s607
      %p611 = scmp.eq.s32.totalorder %s33, 0
      %p612 = por %p610, %p611
      %p613 = scmp.ne.s32.totalorder %s605, %s607
      %p614 = scmp.eq.s32.totalorder %s38, 3
      %p615 = por %p613, %p614
      %p616 = scmp.ne.s32.totalorder %s607, %s608
      %p617 = scmp.eq.s32.totalorder %s38, 0
      %p618 = por %p616, %p617
      %p619 = scmp.ne.s32.totalorder %s607, %s608
      %p620 = scmp.eq.s32.totalorder %s39, 3
      %p621 = por %p619, %p620
      %p623 = scmp.ne.s32.totalorder %s608, %s622
      %p624 = scmp.eq.s32.totalorder %s39, 0
      %p625 = por %p623, %p624
      %s627 = sadd.s32 %s626, 1
      %p630 = scmp.eq.s32.totalorder %s33, 3
      %p631 = scmp.ne.s32.totalorder %s626, %s628
      %p632 = scmp.eq.s32.totalorder %s33, 0
      %p633 = por %p631, %p632
      %p634 = scmp.ne.s32.totalorder %s626, %s628
      %p635 = scmp.eq.s32.totalorder %s38, 3
      %p636 = por %p634, %p635
      %p637 = scmp.ne.s32.totalorder %s628, %s629
      %p638 = scmp.eq.s32.totalorder %s38, 0
      %p639 = por %p637, %p638
      %p640 = scmp.ne.s32.totalorder %s628, %s629
      %p641 = scmp.eq.s32.totalorder %s39, 3
      %p642 = por %p640, %p641
      %p644 = scmp.ne.s32.totalorder %s629, %s643
      %p645 = scmp.eq.s32.totalorder %s39, 0
      %p646 = por %p644, %p645
      %s647 = ssub.s32 %s40, %s52
      %p648 = scmp.eq.s32.totalorder %s647, 0
      %s650 = sadd.s32 %s649, 1
      %s651 = scalar_select %p648, %s649, %s650
      %p654 = pneg %p648
      %p655 = scmp.eq.s32.totalorder %s33, 3
      %p656 = por %p654, %p655
      %p657 = scmp.ne.s32.totalorder %s649, %s652
      %p658 = scmp.eq.s32.totalorder %s33, 0
      %p659 = por %p657, %p658
      %p660 = scmp.ne.s32.totalorder %s649, %s652
      %p661 = scmp.eq.s32.totalorder %s38, 3
      %p662 = por %p660, %p661
      %p663 = scmp.ne.s32.totalorder %s652, %s653
      %p664 = scmp.eq.s32.totalorder %s38, 0
      %p665 = por %p663, %p664
      %p666 = scmp.ne.s32.totalorder %s652, %s653
      %p667 = scmp.eq.s32.totalorder %s39, 3
      %p668 = por %p666, %p667
      %p670 = scmp.ne.s32.totalorder %s653, %s669
      %p671 = scmp.eq.s32.totalorder %s39, 0
      %p672 = por %p670, %p671
      %p673 = scmp.le.s32.totalorder 1, %s33
      %p674 = scmp.lt.s32.totalorder %s33, 5
      %p675 = pnand %p673, %p674
      %p676 = pneg %p675
      // Predicated region
      $region9: #{bert_classifier_forward.1} parent=5 // pred_check
        _
      $region10: #{bert_classifier_forward.1} parent=5 // pred_check_branch
        %678 = sbr.rel (%p675) target = $region12
      $region11: #{bert_classifier_forward.1} parent=5 // pred_region
        %s679 = ssub.s32 %s33, 1
        // Predicated region
        $region13: #{bert_classifier_forward.1} parent=11 // pred_check
          %p680 = pneg %p118
        $region14: #{bert_classifier_forward.1} parent=11 // pred_check_branch
          %682 = sbr.rel (%p680) target = $region16
        $region15: #{bert_classifier_forward.1} parent=11 // pred_region
          _
        $region16: #{bert_classifier_forward.1} parent=11 // pred_fallthru
          _
        // Predicated region
        $region17: #{bert_classifier_forward.1} parent=11 // pred_check
          %p683 = pneg %p139
        $region18: #{bert_classifier_forward.1} parent=11 // pred_check_branch
          %685 = sbr.rel (%p683) target = $region20
        $region19: #{bert_classifier_forward.1} parent=11 // pred_region
          _
        $region20: #{bert_classifier_forward.1} parent=11 // pred_fallthru
          _
        // Predicated region
        $region21: #{bert_classifier_forward.1} parent=11 // pred_check
          %p686 = pneg %p576
        $region22: #{bert_classifier_forward.1} parent=11 // pred_check_branch
          %688 = sbr.rel (%p686) target = $region24
        $region23: #{bert_classifier_forward.1} parent=11 // pred_region
          _
        $region24: #{bert_classifier_forward.1} parent=11 // pred_fallthru
          _
        // Predicated region
        $region25: #{bert_classifier_forward.1} parent=11 // pred_check
          %p689 = pneg %p597
        $region26: #{bert_classifier_forward.1} parent=11 // pred_check_branch
          %691 = sbr.rel (%p689) target = $region28
        $region27: #{bert_classifier_forward.1} parent=11 // pred_region
          _
        $region28: #{bert_classifier_forward.1} parent=11 // pred_fallthru
          _
        // Predicated region
        $region29: #{bert_classifier_forward.1} parent=11 // pred_check
          %p692 = pneg %p618
        $region30: #{bert_classifier_forward.1} parent=11 // pred_check_branch
          %694 = sbr.rel (%p692) target = $region32
        $region31: #{bert_classifier_forward.1} parent=11 // pred_region
          _
        $region32: #{bert_classifier_forward.1} parent=11 // pred_fallthru
          _
        // Predicated region
        $region33: #{bert_classifier_forward.1} parent=11 // pred_check
          %p695 = pneg %p639
        $region34: #{bert_classifier_forward.1} parent=11 // pred_check_branch
          %697 = sbr.rel (%p695) target = $region36
        $region35: #{bert_classifier_forward.1} parent=11 // pred_region
          _
        $region36: #{bert_classifier_forward.1} parent=11 // pred_fallthru
          _
      $region12: #{bert_classifier_forward.1} parent=5 // pred_fallthru
        _
      %p698 = scmp.lt.s32.totalorder %s33, 4
      // Predicated region
      $region37: #{bert_classifier_forward.1} parent=5 // pred_check
        %p699 = pneg %p698
      $region38: #{bert_classifier_forward.1} parent=5 // pred_check_branch
        %701 = sbr.rel (%p699) target = $region40
      $region39: #{bert_classifier_forward.1} parent=5 // pred_region
        // Predicated region
        $region41: #{bert_classifier_forward.1} parent=39 // pred_check
          %p702 = pneg %p65
        $region42: #{bert_classifier_forward.1} parent=39 // pred_check_branch
          %704 = sbr.rel (%p702) target = $region44
        $region43: #{bert_classifier_forward.1} parent=39 // pred_region
          %p705 = scmp.lt.s32.totalorder %s40, 1
          %s706 = scalar_select %p705, %s40, 1
          %s707 = smul.addr %s706, 8
          %s708 = scalar_lea.vmem %s0, %s707
        $region44: #{bert_classifier_forward.1} parent=39 // pred_fallthru
          _
        // Predicated region
        $region45: #{bert_classifier_forward.1} parent=39 // pred_check
          %p709 = pneg %p91
        $region46: #{bert_classifier_forward.1} parent=39 // pred_check_branch
          %711 = sbr.rel (%p709) target = $region48
        $region47: #{bert_classifier_forward.1} parent=39 // pred_region
          %p712 = scmp.lt.s32.totalorder %s40, 1
          %s713 = scalar_select %p712, %s40, 1
          %s714 = scalar_lea.vmem %s1, %s713
        $region48: #{bert_classifier_forward.1} parent=39 // pred_fallthru
          _
        // Predicated region
        $region49: #{bert_classifier_forward.1} parent=39 // pred_check
          %p715 = pneg %p159
        $region50: #{bert_classifier_forward.1} parent=39 // pred_check_branch
          %717 = sbr.rel (%p715) target = $region52
        $region51: #{bert_classifier_forward.1} parent=39 // pred_region
          %p718 = scmp.lt.s32.totalorder %s41, 1
          %s719 = scalar_select %p718, %s41, 1
          %s720 = smul.addr %s719, 16
          %s721 = smul.addr %s720, 4
          %s722 = scalar_lea.vmem %s4, %s721
        $region52: #{bert_classifier_forward.1} parent=39 // pred_fallthru
          _
        // Predicated region
        $region53: #{bert_classifier_forward.1} parent=39 // pred_check
          %p723 = pneg %p185
        $region54: #{bert_classifier_forward.1} parent=39 // pred_check_branch
          %725 = sbr.rel (%p723) target = $region56
        $region55: #{bert_classifier_forward.1} parent=39 // pred_region
          %p726 = scmp.lt.s32.totalorder %s41, 1
          %s727 = scalar_select %p726, %s41, 1
          %s728 = smul.addr %s727, 4
          %s729 = scalar_lea.vmem %s5, %s728
        $region56: #{bert_classifier_forward.1} parent=39 // pred_fallthru
          _
        // Predicated region
        $region57: #{bert_classifier_forward.1} parent=39 // pred_check
          %p730 = pneg %p211
        $region58: #{bert_classifier_forward.1} parent=39 // pred_check_branch
          %732 = sbr.rel (%p730) target = $region60
        $region59: #{bert_classifier_forward.1} parent=39 // pred_region
          %p733 = scmp.lt.s32.totalorder %s41, 1
          %s734 = scalar_select %p733, %s41, 1
          %s735 = smul.addr %s734, 16
          %s736 = smul.addr %s735, 4
          %s737 = scalar_lea.vmem %s6, %s736
        $region60: #{bert_classifier_forward.1} parent=39 // pred_fallthru
          _
        // Predicated region
        $region61: #{bert_classifier_forward.1} parent=39 // pred_check
          %p738 = pneg %p237
        $region62: #{bert_classifier_forward.1} parent=39 // pred_check_branch
          %740 = sbr.rel (%p738) target = $region64
        $region63: #{bert_classifier_forward.1} parent=39 // pred_region
          %p741 = scmp.lt.s32.totalorder %s41, 1
          %s742 = scalar_select %p741, %s41, 1
          %s743 = smul.addr %s742, 4
          %s744 = scalar_lea.vmem %s7, %s743
        $region64: #{bert_classifier_forward.1} parent=39 // pred_fallthru
          _
        // Predicated region
        $region65: #{bert_classifier_forward.1} parent=39 // pred_check
          %p745 = pneg %p263
        $region66: #{bert_classifier_forward.1} parent=39 // pred_check_branch
          %747 = sbr.rel (%p745) target = $region68
        $region67: #{bert_classifier_forward.1} parent=39 // pred_region
          %p748 = scmp.lt.s32.totalorder %s41, 1
          %s749 = scalar_select %p748, %s41, 1
          %s750 = smul.addr %s749, 16
          %s751 = smul.addr %s750, 4
          %s752 = scalar_lea.vmem %s8, %s751
        $region68: #{bert_classifier_forward.1} parent=39 // pred_fallthru
          _
        // Predicated region
        $region69: #{bert_classifier_forward.1} parent=39 // pred_check
          %p753 = pneg %p289
        $region70: #{bert_classifier_forward.1} parent=39 // pred_check_branch
          %755 = sbr.rel (%p753) target = $region72
        $region71: #{bert_classifier_forward.1} parent=39 // pred_region
          %p756 = scmp.lt.s32.totalorder %s41, 1
          %s757 = scalar_select %p756, %s41, 1
          %s758 = smul.addr %s757, 4
          %s759 = scalar_lea.vmem %s9, %s758
        $region72: #{bert_classifier_forward.1} parent=39 // pred_fallthru
          _
        // Predicated region
        $region73: #{bert_classifier_forward.1} parent=39 // pred_check
          %p760 = pneg %p315
        $region74: #{bert_classifier_forward.1} parent=39 // pred_check_branch
          %762 = sbr.rel (%p760) target = $region76
        $region75: #{bert_classifier_forward.1} parent=39 // pred_region
          %p763 = scmp.lt.s32.totalorder %s41, 1
          %s764 = scalar_select %p763, %s41, 1
          %s765 = smul.addr %s764, 4
          %s766 = smul.addr %s765, 4
          %s767 = scalar_lea.vmem %s10, %s766
        $region76: #{bert_classifier_forward.1} parent=39 // pred_fallthru
          _
        // Predicated region
        $region77: #{bert_classifier_forward.1} parent=39 // pred_check
          %p768 = pneg %p341
        $region78: #{bert_classifier_forward.1} parent=39 // pred_check_branch
          %770 = sbr.rel (%p768) target = $region80
        $region79: #{bert_classifier_forward.1} parent=39 // pred_region
          %p771 = scmp.lt.s32.totalorder %s41, 1
          %s772 = scalar_select %p771, %s41, 1
          %s773 = scalar_lea.vmem %s11, %s772
        $region80: #{bert_classifier_forward.1} parent=39 // pred_fallthru
          _
        // Predicated region
        $region81: #{bert_classifier_forward.1} parent=39 // pred_check
          %p774 = pneg %p367
        $region82: #{bert_classifier_forward.1} parent=39 // pred_check_branch
          %776 = sbr.rel (%p774) target = $region84
        $region83: #{bert_classifier_forward.1} parent=39 // pred_region
          %p777 = scmp.lt.s32.totalorder %s41, 1
          %s778 = scalar_select %p777, %s41, 1
          %s779 = scalar_lea.vmem %s12, %s778
        $region84: #{bert_classifier_forward.1} parent=39 // pred_fallthru
          _
        // Predicated region
        $region85: #{bert_classifier_forward.1} parent=39 // pred_check
          %p780 = pneg %p393
        $region86: #{bert_classifier_forward.1} parent=39 // pred_check_branch
          %782 = sbr.rel (%p780) target = $region88
        $region87: #{bert_classifier_forward.1} parent=39 // pred_region
          %p783 = scmp.lt.s32.totalorder %s41, 1
          %s784 = scalar_select %p783, %s41, 1
          %s785 = scalar_lea.vmem %s13, %s784
        $region88: #{bert_classifier_forward.1} parent=39 // pred_fallthru
          _
        // Predicated region
        $region89: #{bert_classifier_forward.1} parent=39 // pred_check
          %p786 = pneg %p419
        $region90: #{bert_classifier_forward.1} parent=39 // pred_check_branch
          %788 = sbr.rel (%p786) target = $region92
        $region91: #{bert_classifier_forward.1} parent=39 // pred_region
          %p789 = scmp.lt.s32.totalorder %s41, 1
          %s790 = scalar_select %p789, %s41, 1
          %s791 = smul.addr %s790, 4
          %s792 = smul.addr %s791, 4
          %s793 = scalar_lea.vmem %s14, %s792
        $region92: #{bert_classifier_forward.1} parent=39 // pred_fallthru
          _
        // Predicated region
        $region93: #{bert_classifier_forward.1} parent=39 // pred_check
          %p794 = pneg %p445
        $region94: #{bert_classifier_forward.1} parent=39 // pred_check_branch
          %796 = sbr.rel (%p794) target = $region96
        $region95: #{bert_classifier_forward.1} parent=39 // pred_region
          %p797 = scmp.lt.s32.totalorder %s41, 1
          %s798 = scalar_select %p797, %s41, 1
          %s799 = scalar_lea.vmem %s15, %s798
        $region96: #{bert_classifier_forward.1} parent=39 // pred_fallthru
          _
        // Predicated region
        $region97: #{bert_classifier_forward.1} parent=39 // pred_check
          %p800 = pneg %p471
        $region98: #{bert_classifier_forward.1} parent=39 // pred_check_branch
          %802 = sbr.rel (%p800) target = $region100
        $region99: #{bert_classifier_forward.1} parent=39 // pred_region
          %p803 = scmp.lt.s32.totalorder %s41, 1
          %s804 = scalar_select %p803, %s41, 1
          %s805 = smul.addr %s804, 8
          %s806 = smul.addr %s805, 4
          %s807 = scalar_lea.vmem %s16, %s806
        $region100: #{bert_classifier_forward.1} parent=39 // pred_fallthru
          _
        // Predicated region
        $region101: #{bert_classifier_forward.1} parent=39 // pred_check
          %p808 = pneg %p497
        $region102: #{bert_classifier_forward.1} parent=39 // pred_check_branch
          %810 = sbr.rel (%p808) target = $region104
        $region103: #{bert_classifier_forward.1} parent=39 // pred_region
          %p811 = scmp.lt.s32.totalorder %s41, 1
          %s812 = scalar_select %p811, %s41, 1
          %s813 = scalar_lea.vmem %s17, %s812
        $region104: #{bert_classifier_forward.1} parent=39 // pred_fallthru
          _
        // Predicated region
        $region105: #{bert_classifier_forward.1} parent=39 // pred_check
          %p814 = pneg %p523
        $region106: #{bert_classifier_forward.1} parent=39 // pred_check_branch
          %816 = sbr.rel (%p814) target = $region108
        $region107: #{bert_classifier_forward.1} parent=39 // pred_region
          %p817 = scmp.lt.s32.totalorder %s41, 1
          %s818 = scalar_select %p817, %s41, 1
          %s819 = scalar_lea.vmem %s18, %s818
        $region108: #{bert_classifier_forward.1} parent=39 // pred_fallthru
          _
        // Predicated region
        $region109: #{bert_classifier_forward.1} parent=39 // pred_check
          %p820 = pneg %p549
        $region110: #{bert_classifier_forward.1} parent=39 // pred_check_branch
          %822 = sbr.rel (%p820) target = $region112
        $region111: #{bert_classifier_forward.1} parent=39 // pred_region
          %p823 = scmp.lt.s32.totalorder %s41, 1
          %s824 = scalar_select %p823, %s41, 1
          %s825 = scalar_lea.vmem %s19, %s824
        $region112: #{bert_classifier_forward.1} parent=39 // pred_fallthru
          _
      $region40: #{bert_classifier_forward.1} parent=5 // pred_fallthru
        _
      %p826 = scmp.le.s32.totalorder 1, %s33
      %p827 = scmp.lt.s32.totalorder %s33, 5
      %p828 = pnand %p826, %p827
      %p829 = pneg %p828
      // Predicated region
      $region113: #{bert_classifier_forward.1} parent=5 // pred_check
        _
      $region114: #{bert_classifier_forward.1} parent=5 // pred_check_branch
        %831 = sbr.rel (%p828) target = $region116
      $region115: #{bert_classifier_forward.1} parent=5 // pred_region
        %s832 = ssub.s32 %s33, 1
        %p833 = scmp.lt.s32.totalorder %s42, 1
        %s834 = scalar_select %p833, %s42, 1
        %s835 = smul.addr %s834, 8
        %s836 = scalar_lea.vmem %s0, %s835
        %p837 = pneg %p71
        %p838 = pneg %p68
        %p839 = scmp.lt.s32.totalorder %s42, 1
        %s840 = scalar_select %p839, %s42, 1
        %s841 = scalar_lea.vmem %s1, %s840
        %p842 = pneg %p97
        %p843 = pneg %p94
        %p844 = pneg %p118
        %p845 = pneg %p115
        %p846 = pneg %p139
        %p847 = pneg %p136
        %p848 = scmp.lt.s32.totalorder %s43, 1
        %s849 = scalar_select %p848, %s43, 1
        %s850 = smul.addr %s849, 16
        %s851 = smul.addr %s850, 4
        %s852 = scalar_lea.vmem %s4, %s851
        %p853 = pneg %p165
        %p854 = pneg %p162
        %p855 = scmp.lt.s32.totalorder %s43, 1
        %s856 = scalar_select %p855, %s43, 1
        %s857 = smul.addr %s856, 4
        %s858 = scalar_lea.vmem %s5, %s857
        %p859 = pneg %p191
        %p860 = pneg %p188
        %p861 = scmp.lt.s32.totalorder %s43, 1
        %s862 = scalar_select %p861, %s43, 1
        %s863 = smul.addr %s862, 16
        %s864 = smul.addr %s863, 4
        %s865 = scalar_lea.vmem %s6, %s864
        %p866 = pneg %p217
        %p867 = pneg %p214
        %p868 = scmp.lt.s32.totalorder %s43, 1
        %s869 = scalar_select %p868, %s43, 1
        %s870 = smul.addr %s869, 4
        %s871 = scalar_lea.vmem %s7, %s870
        %p872 = pneg %p243
        %p873 = pneg %p240
        %p874 = scmp.lt.s32.totalorder %s43, 1
        %s875 = scalar_select %p874, %s43, 1
        %s876 = smul.addr %s875, 16
        %s877 = smul.addr %s876, 4
        %s878 = scalar_lea.vmem %s8, %s877
        %p879 = pneg %p269
        %p880 = pneg %p266
        %p881 = scmp.lt.s32.totalorder %s43, 1
        %s882 = scalar_select %p881, %s43, 1
        %s883 = smul.addr %s882, 4
        %s884 = scalar_lea.vmem %s9, %s883
        %p885 = pneg %p295
        %p886 = pneg %p292
        %p887 = scmp.lt.s32.totalorder %s43, 1
        %s888 = scalar_select %p887, %s43, 1
        %s889 = smul.addr %s888, 4
        %s890 = smul.addr %s889, 4
        %s891 = scalar_lea.vmem %s10, %s890
        %p892 = pneg %p321
        %p893 = pneg %p318
        %p894 = scmp.lt.s32.totalorder %s43, 1
        %s895 = scalar_select %p894, %s43, 1
        %s896 = scalar_lea.vmem %s11, %s895
        %p897 = pneg %p347
        %p898 = pneg %p344
        %p899 = scmp.lt.s32.totalorder %s43, 1
        %s900 = scalar_select %p899, %s43, 1
        %s901 = scalar_lea.vmem %s12, %s900
        %p902 = pneg %p373
        %p903 = pneg %p370
        %p904 = scmp.lt.s32.totalorder %s43, 1
        %s905 = scalar_select %p904, %s43, 1
        %s906 = scalar_lea.vmem %s13, %s905
        %p907 = pneg %p399
        %p908 = pneg %p396
        %p909 = scmp.lt.s32.totalorder %s43, 1
        %s910 = scalar_select %p909, %s43, 1
        %s911 = smul.addr %s910, 4
        %s912 = smul.addr %s911, 4
        %s913 = scalar_lea.vmem %s14, %s912
        %p914 = pneg %p425
        %p915 = pneg %p422
        %p916 = scmp.lt.s32.totalorder %s43, 1
        %s917 = scalar_select %p916, %s43, 1
        %s918 = scalar_lea.vmem %s15, %s917
        %p919 = pneg %p451
        %p920 = pneg %p448
        %p921 = scmp.lt.s32.totalorder %s43, 1
        %s922 = scalar_select %p921, %s43, 1
        %s923 = smul.addr %s922, 8
        %s924 = smul.addr %s923, 4
        %s925 = scalar_lea.vmem %s16, %s924
        %p926 = pneg %p477
        %p927 = pneg %p474
        %p928 = scmp.lt.s32.totalorder %s43, 1
        %s929 = scalar_select %p928, %s43, 1
        %s930 = scalar_lea.vmem %s17, %s929
        %p931 = pneg %p503
        %p932 = pneg %p500
        %p933 = scmp.lt.s32.totalorder %s43, 1
        %s934 = scalar_select %p933, %s43, 1
        %s935 = scalar_lea.vmem %s18, %s934
        %p936 = pneg %p529
        %p937 = pneg %p526
        %p938 = scmp.lt.s32.totalorder %s43, 1
        %s939 = scalar_select %p938, %s43, 1
        %s940 = scalar_lea.vmem %s19, %s939
        %p941 = pneg %p555
        %p942 = pneg %p552
        %p943 = pneg %p576
        %p944 = pneg %p573
        %p945 = pneg %p597
        %p946 = pneg %p594
        %p947 = pneg %p618
        %p948 = pneg %p615
        %p949 = pneg %p639
        %p950 = pneg %p636
        %p951 = pneg %p665
        %p952 = pneg %p662
        %s953 = sand.u32 %s652, 1
        %s954 = scalar_lea.sflag [#allocation4], %s953
        %s955 = sand.u32 %s652, 1
        %s956 = scalar_lea.vmem [#allocation3], %s955
        %p957 = scmp.lt.s32.totalorder %s42, 1
        %s958 = scalar_select %p957, %s42, 1
        %s959 = smul.addr %s958, 8
        %s960 = scalar_lea.vmem %s0, %s959
        %p961 = scmp.lt.s32.totalorder %s42, 1
        %s962 = scalar_select %p961, %s42, 1
        %s963 = scalar_lea.vmem %s1, %s962
        %p964 = scmp.lt.s32.totalorder %s43, 1
        %s965 = scalar_select %p964, %s43, 1
        %s966 = smul.addr %s965, 16
        %s967 = smul.addr %s966, 4
        %s968 = scalar_lea.vmem %s4, %s967
        %p969 = scmp.lt.s32.totalorder %s43, 1
        %s970 = scalar_select %p969, %s43, 1
        %s971 = smul.addr %s970, 4
        %s972 = scalar_lea.vmem %s5, %s971
        %p973 = scmp.lt.s32.totalorder %s43, 1
        %s974 = scalar_select %p973, %s43, 1
        %s975 = smul.addr %s974, 16
        %s976 = smul.addr %s975, 4
        %s977 = scalar_lea.vmem %s6, %s976
        %p978 = scmp.lt.s32.totalorder %s43, 1
        %s979 = scalar_select %p978, %s43, 1
        %s980 = smul.addr %s979, 4
        %s981 = scalar_lea.vmem %s7, %s980
        %p982 = scmp.lt.s32.totalorder %s43, 1
        %s983 = scalar_select %p982, %s43, 1
        %s984 = smul.addr %s983, 16
        %s985 = smul.addr %s984, 4
        %s986 = scalar_lea.vmem %s8, %s985
        %p987 = scmp.lt.s32.totalorder %s43, 1
        %s988 = scalar_select %p987, %s43, 1
        %s989 = smul.addr %s988, 4
        %s990 = scalar_lea.vmem %s9, %s989
        %p991 = scmp.lt.s32.totalorder %s43, 1
        %s992 = scalar_select %p991, %s43, 1
        %s993 = smul.addr %s992, 4
        %s994 = smul.addr %s993, 4
        %s995 = scalar_lea.vmem %s10, %s994
        %p996 = scmp.lt.s32.totalorder %s43, 1
        %s997 = scalar_select %p996, %s43, 1
        %s998 = scalar_lea.vmem %s11, %s997
        %p999 = scmp.lt.s32.totalorder %s43, 1
        %s1000 = scalar_select %p999, %s43, 1
        %s1001 = scalar_lea.vmem %s12, %s1000
        %p1002 = scmp.lt.s32.totalorder %s43, 1
        %s1003 = scalar_select %p1002, %s43, 1
        %s1004 = scalar_lea.vmem %s13, %s1003
        %p1005 = scmp.lt.s32.totalorder %s43, 1
        %s1006 = scalar_select %p1005, %s43, 1
        %s1007 = smul.addr %s1006, 4
        %s1008 = smul.addr %s1007, 4
        %s1009 = scalar_lea.vmem %s14, %s1008
        %p1010 = scmp.lt.s32.totalorder %s43, 1
        %s1011 = scalar_select %p1010, %s43, 1
        %s1012 = scalar_lea.vmem %s15, %s1011
        %p1013 = scmp.lt.s32.totalorder %s43, 1
        %s1014 = scalar_select %p1013, %s43, 1
        %s1015 = smul.addr %s1014, 8
        %s1016 = smul.addr %s1015, 4
        %s1017 = scalar_lea.vmem %s16, %s1016
        %p1018 = scmp.lt.s32.totalorder %s43, 1
        %s1019 = scalar_select %p1018, %s43, 1
        %s1020 = scalar_lea.vmem %s17, %s1019
        %p1021 = scmp.lt.s32.totalorder %s43, 1
        %s1022 = scalar_select %p1021, %s43, 1
        %s1023 = scalar_lea.vmem %s18, %s1022
        %p1024 = scmp.lt.s32.totalorder %s43, 1
        %s1025 = scalar_select %p1024, %s43, 1
        %s1026 = scalar_lea.vmem %s19, %s1025
        %p1028 = scmp.eq.s32.totalorder %s43, 0
        // Predicated region
        $region117: #{bert_classifier_forward.1} parent=115 // pred_check
          %p1029 = pneg %p1028
        $region118: #{bert_classifier_forward.1} parent=115 // pred_check_branch
          %1031 = sbr.rel (%p1029) target = $region120
        $region119: #{bert_classifier_forward.1} parent=115 // pred_region
          %v1032 = vld [vmem:[%s960] sm:$0xff]
          %v1033 = vld [vmem:[%s2] sm:$0x1]
          %v1034 = vld [vmem:[%s3] sm:$0x1]
          %vm1035 = vcmask 261120
          %v1036 = vsel %vm1035, %v1032, 0.0
          %1037 = vadd.xlane.f32.xlu0 %v1036
          %v1038 = vpop.xlane.xlu0 %1037
          %v1039 = vrcp.pop 32.0
          %v1040 = vmul.f32 %v1038, %v1039
          %v1041 = vsub.f32 %v1032, %v1040
          %v1042 = vmul.f32 %v1041, %v1041
          %v1043 = vsel %vm1035, %v1042, 0.0
          %1044 = vadd.xlane.f32.xlu0 %v1043
          %v1045 = vpop.xlane.xlu0 %1044
          %v1046 = vmul.f32 %v1045, %v1039
          %v1047 = vadd.f32 %v1046, 1e-05
          %v1048 = vrsqrt.pop %v1047
          %v1049 = vmul.f32 %v1041, %v1048
          %v1051 = vlaneseq
          %v1052 = vshrl.u32 %v1051, 7
          %v1053 = vsub.s32 0, %v1052
          %v1054 = vrot.slane %v1033, %v1053
          %v1056 = vmul.f32 %v1049, %v1054
          %v1058 = vlaneseq
          %v1059 = vshrl.u32 %v1058, 7
          %v1060 = vsub.s32 0, %v1059
          %v1061 = vrot.slane %v1034, %v1060
          %v1063 = vadd.f32 %v1056, %v1061
          %1064 = vst.msk [vmem:[#allocation2] sm:$0xff] %vm1035, %v1063
        $region120: #{bert_classifier_forward.1} parent=115 // pred_fallthru
          _
        %v1065 = vld [vmem:[#allocation2] sm:$0xff]
        %v1066 = vld [vmem:[%s963] sm:$0x1]
        %v1067 = vpack.c.bf16 %v1065, %v1065
        %v1068 = vld [vmem:[%s968] sm:$0xf]
        %v1069 = vld [vmem:[%s968 + $0x4] sm:$0xf]
        %v1070 = vld [vmem:[%s968 + $0x8] sm:$0xf]
        %v1071 = vld [vmem:[%s968 + $0xc] sm:$0xf]
        %v1072 = vld [vmem:[%s968 + $0x10] sm:$0xf]
        %v1073 = vld [vmem:[%s968 + $0x14] sm:$0xf]
        %v1074 = vld [vmem:[%s968 + $0x18] sm:$0xf]
        %v1075 = vld [vmem:[%s968 + $0x1c] sm:$0xf]
        %v1076 = vld [vmem:[%s968 + $0x20] sm:$0xf]
        %v1077 = vld [vmem:[%s968 + $0x24] sm:$0xf]
        %v1078 = vld [vmem:[%s968 + $0x28] sm:$0xf]
        %v1079 = vld [vmem:[%s968 + $0x2c] sm:$0xf]
        %v1080 = vld [vmem:[%s968 + $0x30] sm:$0xf]
        %v1081 = vld [vmem:[%s968 + $0x34] sm:$0xf]
        %v1082 = vld [vmem:[%s968 + $0x38] sm:$0xf]
        %v1083 = vld [vmem:[%s968 + $0x3c] sm:$0xf]
        %v1084 = vld [vmem:[%s972] sm:$0x1]
        %v1085 = vld [vmem:[%s972 + $0x1] sm:$0x1]
        %v1086 = vld [vmem:[%s972 + $0x2] sm:$0x1]
        %v1087 = vld [vmem:[%s972 + $0x3] sm:$0x1]
        %v1092 = vlaneseq
        %v1093 = vshrl.u32 %v1092, 7
        %v1094 = vsub.s32 0, %v1093
        %v1095 = vrot.slane %v1084, %v1094
        %v1096 = vlaneseq
        %v1097 = vshrl.u32 %v1096, 7
        %v1098 = vsub.s32 0, %v1097
        %v1099 = vrot.slane %v1085, %v1098
        %v1100 = vlaneseq
        %v1101 = vshrl.u32 %v1100, 7
        %v1102 = vsub.s32 0, %v1101
        %v1103 = vrot.slane %v1086, %v1102
        %v1104 = vlaneseq
        %v1105 = vshrl.u32 %v1104, 7
        %v1106 = vsub.s32 0, %v1105
        %v1107 = vrot.slane %v1087, %v1106
        %v1116 = vunpack.c.l.b16 %v1068
        %v1117 = vunpack.c.l.b16 %v1069
        %v1118 = vunpack.c.l.b16 %v1070
        %v1119 = vunpack.c.l.b16 %v1071
        %v1120 = vpack.c.b16 %v1117, %v1116
        %v1121 = vpack.c.b16 %v1119, %v1118
        %vm1124 = vcmask 261120
        %v1126 = vsel %vm1124, %v1067, 0
        %1128 = vmatprep.subr.bf16.mxu0 0
        %1129 = vmatpush1.bf16.msra.mxu0 0
        %1130 = vmatprep.subr.bf16.mxu0 0
        %1131 = vmatpush1.bf16.msra.mxu0 0
        %1132 = vmatprep.subr.bf16.mxu0 0
        %1133 = vmatpush1.bf16.msra.mxu0 0
        %1134 = vmatprep.subr.bf16.mxu0 0
        %1135 = vmatpush1.bf16.msra.mxu0 0
        %1136 = vmatprep.subr.bf16.mxu0 0
        %1137 = vmatpush1.bf16.msra.mxu0 0
        %1138 = vmatprep.subr.bf16.mxu0 0
        %1139 = vmatpush1.bf16.msra.mxu0 0
        %1140 = vmatprep.subr.bf16.mxu0 0
        %1141 = vmatpush1.bf16.msra.mxu0 %v1121
        %1142 = vmatprep.subr.bf16.mxu0 0
        %1143 = vmatpush1.bf16.msra.mxu0 %v1120
        %1144 = vmatprep.subr.bf16.mxu0 0
        %1145 = vmatpush2.bf16.msra.mxu0 0
        %1146 = vmatprep.subr.bf16.mxu0 0
        %1147 = vmatpush2.bf16.msra.mxu0 0
        %1148 = vmatprep.subr.bf16.mxu0 0
        %1149 = vmatpush2.bf16.msra.mxu0 0
        %1150 = vmatprep.subr.bf16.mxu0 0
        %1151 = vmatpush2.bf16.msra.mxu0 0
        %1152 = vmatprep.subr.bf16.mxu0 0
        %1153 = vmatpush2.bf16.msra.mxu0 0
        %1154 = vmatprep.subr.bf16.mxu0 0
        %1155 = vmatpush2.bf16.msra.mxu0 0
        %1156 = vmatprep.subr.bf16.mxu0 0
        %1157 = vmatpush2.bf16.msra.mxu0 0
        %1158 = vmatprep.subr.bf16.mxu0 0
        %1159 = vmatpush2.bf16.msra.mxu0 0
        %1160 = vmatprep.mubr.bf16.mxu0 0
        %1161 = vmatmul.mubr.bf16.gmra.mxu0 %v1126
        %v1162 = vpop.f32.mrf.mxu0
        %v1163 = vadd.f32 %v1095, %v1162
        %v1164 = vpop.f32.mrf.mxu0
        %v1165 = vpop.f32.mrf.mxu0
        %v1166 = vpop.f32.mrf.mxu0
        %1167 = vdwg.mxu0
        %v1172 = vunpack.c.l.b16 %v1072
        %v1173 = vunpack.c.l.b16 %v1073
        %v1174 = vunpack.c.l.b16 %v1074
        %v1175 = vunpack.c.l.b16 %v1075
        %v1176 = vpack.c.b16 %v1173, %v1172
        %v1177 = vpack.c.b16 %v1175, %v1174
        %1180 = vmatprep.subr.bf16.mxu0 0
        %1181 = vmatpush1.bf16.msra.mxu0 0
        %1182 = vmatprep.subr.bf16.mxu0 0
        %1183 = vmatpush1.bf16.msra.mxu0 0
        %1184 = vmatprep.subr.bf16.mxu0 0
        %1185 = vmatpush1.bf16.msra.mxu0 0
        %1186 = vmatprep.subr.bf16.mxu0 0
        %1187 = vmatpush1.bf16.msra.mxu0 0
        %1188 = vmatprep.subr.bf16.mxu0 0
        %1189 = vmatpush1.bf16.msra.mxu0 0
        %1190 = vmatprep.subr.bf16.mxu0 0
        %1191 = vmatpush1.bf16.msra.mxu0 0
        %1192 = vmatprep.subr.bf16.mxu0 0
        %1193 = vmatpush1.bf16.msra.mxu0 %v1177
        %1194 = vmatprep.subr.bf16.mxu0 0
        %1195 = vmatpush1.bf16.msra.mxu0 %v1176
        %1196 = vmatprep.subr.bf16.mxu0 0
        %1197 = vmatpush2.bf16.msra.mxu0 0
        %1198 = vmatprep.subr.bf16.mxu0 0
        %1199 = vmatpush2.bf16.msra.mxu0 0
        %1200 = vmatprep.subr.bf16.mxu0 0
        %1201 = vmatpush2.bf16.msra.mxu0 0
        %1202 = vmatprep.subr.bf16.mxu0 0
        %1203 = vmatpush2.bf16.msra.mxu0 0
        %1204 = vmatprep.subr.bf16.mxu0 0
        %1205 = vmatpush2.bf16.msra.mxu0 0
        %1206 = vmatprep.subr.bf16.mxu0 0
        %1207 = vmatpush2.bf16.msra.mxu0 0
        %1208 = vmatprep.subr.bf16.mxu0 0
        %1209 = vmatpush2.bf16.msra.mxu0 0
        %1210 = vmatprep.subr.bf16.mxu0 0
        %1211 = vmatpush2.bf16.msra.mxu0 0
        %1212 = vmatprep.mubr.bf16.mxu0 0
        %1213 = vmatmul.mubr.bf16.gmra.mxu0 %v1126
        %v1214 = vpop.f32.mrf.mxu0
        %v1215 = vadd.f32 %v1099, %v1214
        %v1216 = vpop.f32.mrf.mxu0
        %v1217 = vpop.f32.mrf.mxu0
        %v1218 = vpop.f32.mrf.mxu0
        %1219 = vdwg.mxu0
        %v1224 = vunpack.c.l.b16 %v1076
        %v1225 = vunpack.c.l.b16 %v1077
        %v1226 = vunpack.c.l.b16 %v1078
        %v1227 = vunpack.c.l.b16 %v1079
        %v1228 = vpack.c.b16 %v1225, %v1224
        %v1229 = vpack.c.b16 %v1227, %v1226
        %1232 = vmatprep.subr.bf16.mxu0 0
        %1233 = vmatpush1.bf16.msra.mxu0 0
        %1234 = vmatprep.subr.bf16.mxu0 0
        %1235 = vmatpush1.bf16.msra.mxu0 0
        %1236 = vmatprep.subr.bf16.mxu0 0
        %1237 = vmatpush1.bf16.msra.mxu0 0
        %1238 = vmatprep.subr.bf16.mxu0 0
        %1239 = vmatpush1.bf16.msra.mxu0 0
        %1240 = vmatprep.subr.bf16.mxu0 0
        %1241 = vmatpush1.bf16.msra.mxu0 0
        %1242 = vmatprep.subr.bf16.mxu0 0
        %1243 = vmatpush1.bf16.msra.mxu0 0
        %1244 = vmatprep.subr.bf16.mxu0 0
        %1245 = vmatpush1.bf16.msra.mxu0 %v1229
        %1246 = vmatprep.subr.bf16.mxu0 0
        %1247 = vmatpush1.bf16.msra.mxu0 %v1228
        %1248 = vmatprep.subr.bf16.mxu0 0
        %1249 = vmatpush2.bf16.msra.mxu0 0
        %1250 = vmatprep.subr.bf16.mxu0 0
        %1251 = vmatpush2.bf16.msra.mxu0 0
        %1252 = vmatprep.subr.bf16.mxu0 0
        %1253 = vmatpush2.bf16.msra.mxu0 0
        %1254 = vmatprep.subr.bf16.mxu0 0
        %1255 = vmatpush2.bf16.msra.mxu0 0
        %1256 = vmatprep.subr.bf16.mxu0 0
        %1257 = vmatpush2.bf16.msra.mxu0 0
        %1258 = vmatprep.subr.bf16.mxu0 0
        %1259 = vmatpush2.bf16.msra.mxu0 0
        %1260 = vmatprep.subr.bf16.mxu0 0
        %1261 = vmatpush2.bf16.msra.mxu0 0
        %1262 = vmatprep.subr.bf16.mxu0 0
        %1263 = vmatpush2.bf16.msra.mxu0 0
        %1264 = vmatprep.mubr.bf16.mxu0 0
        %1265 = vmatmul.mubr.bf16.gmra.mxu0 %v1126
        %v1266 = vpop.f32.mrf.mxu0
        %v1267 = vadd.f32 %v1103, %v1266
        %v1268 = vpop.f32.mrf.mxu0
        %v1269 = vpop.f32.mrf.mxu0
        %v1270 = vpop.f32.mrf.mxu0
        %1271 = vdwg.mxu0
        %v1276 = vunpack.c.l.b16 %v1080
        %v1277 = vunpack.c.l.b16 %v1081
        %v1278 = vunpack.c.l.b16 %v1082
        %v1279 = vunpack.c.l.b16 %v1083
        %v1280 = vpack.c.b16 %v1277, %v1276
        %v1281 = vpack.c.b16 %v1279, %v1278
        %1284 = vmatprep.subr.bf16.mxu0 0
        %1285 = vmatpush1.bf16.msra.mxu0 0
        %1286 = vmatprep.subr.bf16.mxu0 0
        %1287 = vmatpush1.bf16.msra.mxu0 0
        %1288 = vmatprep.subr.bf16.mxu0 0
        %1289 = vmatpush1.bf16.msra.mxu0 0
        %1290 = vmatprep.subr.bf16.mxu0 0
        %1291 = vmatpush1.bf16.msra.mxu0 0
        %1292 = vmatprep.subr.bf16.mxu0 0
        %1293 = vmatpush1.bf16.msra.mxu0 0
        %1294 = vmatprep.subr.bf16.mxu0 0
        %1295 = vmatpush1.bf16.msra.mxu0 0
        %1296 = vmatprep.subr.bf16.mxu0 0
        %1297 = vmatpush1.bf16.msra.mxu0 %v1281
        %1298 = vmatprep.subr.bf16.mxu0 0
        %1299 = vmatpush1.bf16.msra.mxu0 %v1280
        %1300 = vmatprep.subr.bf16.mxu0 0
        %1301 = vmatpush2.bf16.msra.mxu0 0
        %1302 = vmatprep.subr.bf16.mxu0 0
        %1303 = vmatpush2.bf16.msra.mxu0 0
        %1304 = vmatprep.subr.bf16.mxu0 0
        %1305 = vmatpush2.bf16.msra.mxu0 0
        %1306 = vmatprep.subr.bf16.mxu0 0
        %1307 = vmatpush2.bf16.msra.mxu0 0
        %1308 = vmatprep.subr.bf16.mxu0 0
        %1309 = vmatpush2.bf16.msra.mxu0 0
        %1310 = vmatprep.subr.bf16.mxu0 0
        %1311 = vmatpush2.bf16.msra.mxu0 0
        %1312 = vmatprep.subr.bf16.mxu0 0
        %1313 = vmatpush2.bf16.msra.mxu0 0
        %1314 = vmatprep.subr.bf16.mxu0 0
        %1315 = vmatpush2.bf16.msra.mxu0 0
        %1316 = vmatprep.mubr.bf16.mxu0 0
        %1317 = vmatmul.mubr.bf16.gmra.mxu0 %v1126
        %v1318 = vpop.f32.mrf.mxu0
        %v1319 = vadd.f32 %v1107, %v1318
        %v1320 = vpop.f32.mrf.mxu0
        %v1321 = vpop.f32.mrf.mxu0
        %v1322 = vpop.f32.mrf.mxu0
        %1323 = vdwg.mxu0
        %v1324 = vld [vmem:[%s977] sm:$0xf]
        %v1325 = vld [vmem:[%s977 + $0x4] sm:$0xf]
        %v1326 = vld [vmem:[%s977 + $0x8] sm:$0xf]
        %v1327 = vld [vmem:[%s977 + $0xc] sm:$0xf]
        %v1328 = vld [vmem:[%s977 + $0x10] sm:$0xf]
        %v1329 = vld [vmem:[%s977 + $0x14] sm:$0xf]
        %v1330 = vld [vmem:[%s977 + $0x18] sm:$0xf]
        %v1331 = vld [vmem:[%s977 + $0x1c] sm:$0xf]
        %v1332 = vld [vmem:[%s977 + $0x20] sm:$0xf]
        %v1333 = vld [vmem:[%s977 + $0x24] sm:$0xf]
        %v1334 = vld [vmem:[%s977 + $0x28] sm:$0xf]
        %v1335 = vld [vmem:[%s977 + $0x2c] sm:$0xf]
        %v1336 = vld [vmem:[%s977 + $0x30] sm:$0xf]
        %v1337 = vld [vmem:[%s977 + $0x34] sm:$0xf]
        %v1338 = vld [vmem:[%s977 + $0x38] sm:$0xf]
        %v1339 = vld [vmem:[%s977 + $0x3c] sm:$0xf]
        %v1340 = vld [vmem:[%s981] sm:$0x1]
        %v1341 = vld [vmem:[%s981 + $0x1] sm:$0x1]
        %v1342 = vld [vmem:[%s981 + $0x2] sm:$0x1]
        %v1343 = vld [vmem:[%s981 + $0x3] sm:$0x1]
        %v1348 = vlaneseq
        %v1349 = vshrl.u32 %v1348, 7
        %v1350 = vsub.s32 0, %v1349
        %v1351 = vrot.slane %v1340, %v1350
        %v1352 = vlaneseq
        %v1353 = vshrl.u32 %v1352, 7
        %v1354 = vsub.s32 0, %v1353
        %v1355 = vrot.slane %v1341, %v1354
        %v1356 = vlaneseq
        %v1357 = vshrl.u32 %v1356, 7
        %v1358 = vsub.s32 0, %v1357
        %v1359 = vrot.slane %v1342, %v1358
        %v1360 = vlaneseq
        %v1361 = vshrl.u32 %v1360, 7
        %v1362 = vsub.s32 0, %v1361
        %v1363 = vrot.slane %v1343, %v1362
        %v1372 = vunpack.c.l.b16 %v1324
        %v1373 = vunpack.c.l.b16 %v1325
        %v1374 = vunpack.c.l.b16 %v1326
        %v1375 = vunpack.c.l.b16 %v1327
        %v1376 = vpack.c.b16 %v1373, %v1372
        %v1377 = vpack.c.b16 %v1375, %v1374
        %1380 = vmatprep.subr.bf16.mxu0 0
        %1381 = vmatpush1.bf16.msra.mxu0 0
        %1382 = vmatprep.subr.bf16.mxu0 0
        %1383 = vmatpush1.bf16.msra.mxu0 0
        %1384 = vmatprep.subr.bf16.mxu0 0
        %1385 = vmatpush1.bf16.msra.mxu0 0
        %1386 = vmatprep.subr.bf16.mxu0 0
        %1387 = vmatpush1.bf16.msra.mxu0 0
        %1388 = vmatprep.subr.bf16.mxu0 0
        %1389 = vmatpush1.bf16.msra.mxu0 0
        %1390 = vmatprep.subr.bf16.mxu0 0
        %1391 = vmatpush1.bf16.msra.mxu0 0
        %1392 = vmatprep.subr.bf16.mxu0 0
        %1393 = vmatpush1.bf16.msra.mxu0 %v1377
        %1394 = vmatprep.subr.bf16.mxu0 0
        %1395 = vmatpush1.bf16.msra.mxu0 %v1376
        %1396 = vmatprep.subr.bf16.mxu0 0
        %1397 = vmatpush2.bf16.msra.mxu0 0
        %1398 = vmatprep.subr.bf16.mxu0 0
        %1399 = vmatpush2.bf16.msra.mxu0 0
        %1400 = vmatprep.subr.bf16.mxu0 0
        %1401 = vmatpush2.bf16.msra.mxu0 0
        %1402 = vmatprep.subr.bf16.mxu0 0
        %1403 = vmatpush2.bf16.msra.mxu0 0
        %1404 = vmatprep.subr.bf16.mxu0 0
        %1405 = vmatpush2.bf16.msra.mxu0 0
        %1406 = vmatprep.subr.bf16.mxu0 0
        %1407 = vmatpush2.bf16.msra.mxu0 0
        %1408 = vmatprep.subr.bf16.mxu0 0
        %1409 = vmatpush2.bf16.msra.mxu0 0
        %1410 = vmatprep.subr.bf16.mxu0 0
        %1411 = vmatpush2.bf16.msra.mxu0 0
        %1412 = vmatprep.mubr.bf16.mxu0 0
        %1413 = vmatmul.mubr.bf16.gmra.mxu0 %v1126
        %v1414 = vpop.f32.mrf.mxu0
        %v1415 = vadd.f32 %v1351, %v1414
        %v1416 = vpop.f32.mrf.mxu0
        %v1417 = vpop.f32.mrf.mxu0
        %v1418 = vpop.f32.mrf.mxu0
        %1419 = vdwg.mxu0
        %v1424 = vunpack.c.l.b16 %v1328
        %v1425 = vunpack.c.l.b16 %v1329
        %v1426 = vunpack.c.l.b16 %v1330
        %v1427 = vunpack.c.l.b16 %v1331
        %v1428 = vpack.c.b16 %v1425, %v1424
        %v1429 = vpack.c.b16 %v1427, %v1426
        %1432 = vmatprep.subr.bf16.mxu0 0
        %1433 = vmatpush1.bf16.msra.mxu0 0
        %1434 = vmatprep.subr.bf16.mxu0 0
        %1435 = vmatpush1.bf16.msra.mxu0 0
        %1436 = vmatprep.subr.bf16.mxu0 0
        %1437 = vmatpush1.bf16.msra.mxu0 0
        %1438 = vmatprep.subr.bf16.mxu0 0
        %1439 = vmatpush1.bf16.msra.mxu0 0
        %1440 = vmatprep.subr.bf16.mxu0 0
        %1441 = vmatpush1.bf16.msra.mxu0 0
        %1442 = vmatprep.subr.bf16.mxu0 0
        %1443 = vmatpush1.bf16.msra.mxu0 0
        %1444 = vmatprep.subr.bf16.mxu0 0
        %1445 = vmatpush1.bf16.msra.mxu0 %v1429
        %1446 = vmatprep.subr.bf16.mxu0 0
        %1447 = vmatpush1.bf16.msra.mxu0 %v1428
        %1448 = vmatprep.subr.bf16.mxu0 0
        %1449 = vmatpush2.bf16.msra.mxu0 0
        %1450 = vmatprep.subr.bf16.mxu0 0
        %1451 = vmatpush2.bf16.msra.mxu0 0
        %1452 = vmatprep.subr.bf16.mxu0 0
        %1453 = vmatpush2.bf16.msra.mxu0 0
        %1454 = vmatprep.subr.bf16.mxu0 0
        %1455 = vmatpush2.bf16.msra.mxu0 0
        %1456 = vmatprep.subr.bf16.mxu0 0
        %1457 = vmatpush2.bf16.msra.mxu0 0
        %1458 = vmatprep.subr.bf16.mxu0 0
        %1459 = vmatpush2.bf16.msra.mxu0 0
        %1460 = vmatprep.subr.bf16.mxu0 0
        %1461 = vmatpush2.bf16.msra.mxu0 0
        %1462 = vmatprep.subr.bf16.mxu0 0
        %1463 = vmatpush2.bf16.msra.mxu0 0
        %1464 = vmatprep.mubr.bf16.mxu0 0
        %1465 = vmatmul.mubr.bf16.gmra.mxu0 %v1126
        %v1466 = vpop.f32.mrf.mxu0
        %v1467 = vadd.f32 %v1355, %v1466
        %v1468 = vpop.f32.mrf.mxu0
        %v1469 = vpop.f32.mrf.mxu0
        %v1470 = vpop.f32.mrf.mxu0
        %1471 = vdwg.mxu0
        %v1476 = vunpack.c.l.b16 %v1332
        %v1477 = vunpack.c.l.b16 %v1333
        %v1478 = vunpack.c.l.b16 %v1334
        %v1479 = vunpack.c.l.b16 %v1335
        %v1480 = vpack.c.b16 %v1477, %v1476
        %v1481 = vpack.c.b16 %v1479, %v1478
        %1484 = vmatprep.subr.bf16.mxu0 0
        %1485 = vmatpush1.bf16.msra.mxu0 0
        %1486 = vmatprep.subr.bf16.mxu0 0
        %1487 = vmatpush1.bf16.msra.mxu0 0
        %1488 = vmatprep.subr.bf16.mxu0 0
        %1489 = vmatpush1.bf16.msra.mxu0 0
        %1490 = vmatprep.subr.bf16.mxu0 0
        %1491 = vmatpush1.bf16.msra.mxu0 0
        %1492 = vmatprep.subr.bf16.mxu0 0
        %1493 = vmatpush1.bf16.msra.mxu0 0
        %1494 = vmatprep.subr.bf16.mxu0 0
        %1495 = vmatpush1.bf16.msra.mxu0 0
        %1496 = vmatprep.subr.bf16.mxu0 0
        %1497 = vmatpush1.bf16.msra.mxu0 %v1481
        %1498 = vmatprep.subr.bf16.mxu0 0
        %1499 = vmatpush1.bf16.msra.mxu0 %v1480
        %1500 = vmatprep.subr.bf16.mxu0 0
        %1501 = vmatpush2.bf16.msra.mxu0 0
        %1502 = vmatprep.subr.bf16.mxu0 0
        %1503 = vmatpush2.bf16.msra.mxu0 0
        %1504 = vmatprep.subr.bf16.mxu0 0
        %1505 = vmatpush2.bf16.msra.mxu0 0
        %1506 = vmatprep.subr.bf16.mxu0 0
        %1507 = vmatpush2.bf16.msra.mxu0 0
        %1508 = vmatprep.subr.bf16.mxu0 0
        %1509 = vmatpush2.bf16.msra.mxu0 0
        %1510 = vmatprep.subr.bf16.mxu0 0
        %1511 = vmatpush2.bf16.msra.mxu0 0
        %1512 = vmatprep.subr.bf16.mxu0 0
        %1513 = vmatpush2.bf16.msra.mxu0 0
        %1514 = vmatprep.subr.bf16.mxu0 0
        %1515 = vmatpush2.bf16.msra.mxu0 0
        %1516 = vmatprep.mubr.bf16.mxu0 0
        %1517 = vmatmul.mubr.bf16.gmra.mxu0 %v1126
        %v1518 = vpop.f32.mrf.mxu0
        %v1519 = vadd.f32 %v1359, %v1518
        %v1520 = vpop.f32.mrf.mxu0
        %v1521 = vpop.f32.mrf.mxu0
        %v1522 = vpop.f32.mrf.mxu0
        %1523 = vdwg.mxu0
        %v1528 = vunpack.c.l.b16 %v1336
        %v1529 = vunpack.c.l.b16 %v1337
        %v1530 = vunpack.c.l.b16 %v1338
        %v1531 = vunpack.c.l.b16 %v1339
        %v1532 = vpack.c.b16 %v1529, %v1528
        %v1533 = vpack.c.b16 %v1531, %v1530
        %1536 = vmatprep.subr.bf16.mxu0 0
        %1537 = vmatpush1.bf16.msra.mxu0 0
        %1538 = vmatprep.subr.bf16.mxu0 0
        %1539 = vmatpush1.bf16.msra.mxu0 0
        %1540 = vmatprep.subr.bf16.mxu0 0
        %1541 = vmatpush1.bf16.msra.mxu0 0
        %1542 = vmatprep.subr.bf16.mxu0 0
        %1543 = vmatpush1.bf16.msra.mxu0 0
        %1544 = vmatprep.subr.bf16.mxu0 0
        %1545 = vmatpush1.bf16.msra.mxu0 0
        %1546 = vmatprep.subr.bf16.mxu0 0
        %1547 = vmatpush1.bf16.msra.mxu0 0
        %1548 = vmatprep.subr.bf16.mxu0 0
        %1549 = vmatpush1.bf16.msra.mxu0 %v1533
        %1550 = vmatprep.subr.bf16.mxu0 0
        %1551 = vmatpush1.bf16.msra.mxu0 %v1532
        %1552 = vmatprep.subr.bf16.mxu0 0
        %1553 = vmatpush2.bf16.msra.mxu0 0
        %1554 = vmatprep.subr.bf16.mxu0 0
        %1555 = vmatpush2.bf16.msra.mxu0 0
        %1556 = vmatprep.subr.bf16.mxu0 0
        %1557 = vmatpush2.bf16.msra.mxu0 0
        %1558 = vmatprep.subr.bf16.mxu0 0
        %1559 = vmatpush2.bf16.msra.mxu0 0
        %1560 = vmatprep.subr.bf16.mxu0 0
        %1561 = vmatpush2.bf16.msra.mxu0 0
        %1562 = vmatprep.subr.bf16.mxu0 0
        %1563 = vmatpush2.bf16.msra.mxu0 0
        %1564 = vmatprep.subr.bf16.mxu0 0
        %1565 = vmatpush2.bf16.msra.mxu0 0
        %1566 = vmatprep.subr.bf16.mxu0 0
        %1567 = vmatpush2.bf16.msra.mxu0 0
        %1568 = vmatprep.mubr.bf16.mxu0 0
        %1569 = vmatmul.mubr.bf16.gmra.mxu0 %v1126
        %v1570 = vpop.f32.mrf.mxu0
        %v1571 = vadd.f32 %v1363, %v1570
        %v1572 = vpop.f32.mrf.mxu0
        %v1573 = vpop.f32.mrf.mxu0
        %v1574 = vpop.f32.mrf.mxu0
        %1575 = vdwg.mxu0
        %v1576 = vld [vmem:[%s986] sm:$0xf]
        %v1577 = vld [vmem:[%s986 + $0x4] sm:$0xf]
        %v1578 = vld [vmem:[%s986 + $0x8] sm:$0xf]
        %v1579 = vld [vmem:[%s986 + $0xc] sm:$0xf]
        %v1580 = vld [vmem:[%s986 + $0x10] sm:$0xf]
        %v1581 = vld [vmem:[%s986 + $0x14] sm:$0xf]
        %v1582 = vld [vmem:[%s986 + $0x18] sm:$0xf]
        %v1583 = vld [vmem:[%s986 + $0x1c] sm:$0xf]
        %v1584 = vld [vmem:[%s986 + $0x20] sm:$0xf]
        %v1585 = vld [vmem:[%s986 + $0x24] sm:$0xf]
        %v1586 = vld [vmem:[%s986 + $0x28] sm:$0xf]
        %v1587 = vld [vmem:[%s986 + $0x2c] sm:$0xf]
        %v1588 = vld [vmem:[%s986 + $0x30] sm:$0xf]
        %v1589 = vld [vmem:[%s986 + $0x34] sm:$0xf]
        %v1590 = vld [vmem:[%s986 + $0x38] sm:$0xf]
        %v1591 = vld [vmem:[%s986 + $0x3c] sm:$0xf]
        %v1592 = vld [vmem:[%s990] sm:$0x1]
        %v1593 = vld [vmem:[%s990 + $0x1] sm:$0x1]
        %v1594 = vld [vmem:[%s990 + $0x2] sm:$0x1]
        %v1595 = vld [vmem:[%s990 + $0x3] sm:$0x1]
        %v1600 = vlaneseq
        %v1601 = vshrl.u32 %v1600, 7
        %v1602 = vsub.s32 0, %v1601
        %v1603 = vrot.slane %v1592, %v1602
        %v1604 = vlaneseq
        %v1605 = vshrl.u32 %v1604, 7
        %v1606 = vsub.s32 0, %v1605
        %v1607 = vrot.slane %v1593, %v1606
        %v1608 = vlaneseq
        %v1609 = vshrl.u32 %v1608, 7
        %v1610 = vsub.s32 0, %v1609
        %v1611 = vrot.slane %v1594, %v1610
        %v1612 = vlaneseq
        %v1613 = vshrl.u32 %v1612, 7
        %v1614 = vsub.s32 0, %v1613
        %v1615 = vrot.slane %v1595, %v1614
        %v1624 = vunpack.c.l.b16 %v1576
        %v1625 = vunpack.c.l.b16 %v1577
        %v1626 = vunpack.c.l.b16 %v1578
        %v1627 = vunpack.c.l.b16 %v1579
        %v1628 = vpack.c.b16 %v1625, %v1624
        %v1629 = vpack.c.b16 %v1627, %v1626
        %1632 = vmatprep.subr.bf16.mxu0 0
        %1633 = vmatpush1.bf16.msra.mxu0 0
        %1634 = vmatprep.subr.bf16.mxu0 0
        %1635 = vmatpush1.bf16.msra.mxu0 0
        %1636 = vmatprep.subr.bf16.mxu0 0
        %1637 = vmatpush1.bf16.msra.mxu0 0
        %1638 = vmatprep.subr.bf16.mxu0 0
        %1639 = vmatpush1.bf16.msra.mxu0 0
        %1640 = vmatprep.subr.bf16.mxu0 0
        %1641 = vmatpush1.bf16.msra.mxu0 0
        %1642 = vmatprep.subr.bf16.mxu0 0
        %1643 = vmatpush1.bf16.msra.mxu0 0
        %1644 = vmatprep.subr.bf16.mxu0 0
        %1645 = vmatpush1.bf16.msra.mxu0 %v1629
        %1646 = vmatprep.subr.bf16.mxu0 0
        %1647 = vmatpush1.bf16.msra.mxu0 %v1628
        %1648 = vmatprep.subr.bf16.mxu0 0
        %1649 = vmatpush2.bf16.msra.mxu0 0
        %1650 = vmatprep.subr.bf16.mxu0 0
        %1651 = vmatpush2.bf16.msra.mxu0 0
        %1652 = vmatprep.subr.bf16.mxu0 0
        %1653 = vmatpush2.bf16.msra.mxu0 0
        %1654 = vmatprep.subr.bf16.mxu0 0
        %1655 = vmatpush2.bf16.msra.mxu0 0
        %1656 = vmatprep.subr.bf16.mxu0 0
        %1657 = vmatpush2.bf16.msra.mxu0 0
        %1658 = vmatprep.subr.bf16.mxu0 0
        %1659 = vmatpush2.bf16.msra.mxu0 0
        %1660 = vmatprep.subr.bf16.mxu0 0
        %1661 = vmatpush2.bf16.msra.mxu0 0
        %1662 = vmatprep.subr.bf16.mxu0 0
        %1663 = vmatpush2.bf16.msra.mxu0 0
        %1664 = vmatprep.mubr.bf16.mxu0 0
        %1665 = vmatmul.mubr.bf16.gmra.mxu0 %v1126
        %v1666 = vpop.f32.mrf.mxu0
        %v1667 = vadd.f32 %v1603, %v1666
        %v1668 = vpop.f32.mrf.mxu0
        %v1669 = vpop.f32.mrf.mxu0
        %v1670 = vpop.f32.mrf.mxu0
        %1671 = vdwg.mxu0
        %v1676 = vunpack.c.l.b16 %v1580
        %v1677 = vunpack.c.l.b16 %v1581
        %v1678 = vunpack.c.l.b16 %v1582
        %v1679 = vunpack.c.l.b16 %v1583
        %v1680 = vpack.c.b16 %v1677, %v1676
        %v1681 = vpack.c.b16 %v1679, %v1678
        %1684 = vmatprep.subr.bf16.mxu0 0
        %1685 = vmatpush1.bf16.msra.mxu0 0
        %1686 = vmatprep.subr.bf16.mxu0 0
        %1687 = vmatpush1.bf16.msra.mxu0 0
        %1688 = vmatprep.subr.bf16.mxu0 0
        %1689 = vmatpush1.bf16.msra.mxu0 0
        %1690 = vmatprep.subr.bf16.mxu0 0
        %1691 = vmatpush1.bf16.msra.mxu0 0
        %1692 = vmatprep.subr.bf16.mxu0 0
        %1693 = vmatpush1.bf16.msra.mxu0 0
        %1694 = vmatprep.subr.bf16.mxu0 0
        %1695 = vmatpush1.bf16.msra.mxu0 0
        %1696 = vmatprep.subr.bf16.mxu0 0
        %1697 = vmatpush1.bf16.msra.mxu0 %v1681
        %1698 = vmatprep.subr.bf16.mxu0 0
        %1699 = vmatpush1.bf16.msra.mxu0 %v1680
        %1700 = vmatprep.subr.bf16.mxu0 0
        %1701 = vmatpush2.bf16.msra.mxu0 0
        %1702 = vmatprep.subr.bf16.mxu0 0
        %1703 = vmatpush2.bf16.msra.mxu0 0
        %1704 = vmatprep.subr.bf16.mxu0 0
        %1705 = vmatpush2.bf16.msra.mxu0 0
        %1706 = vmatprep.subr.bf16.mxu0 0
        %1707 = vmatpush2.bf16.msra.mxu0 0
        %1708 = vmatprep.subr.bf16.mxu0 0
        %1709 = vmatpush2.bf16.msra.mxu0 0
        %1710 = vmatprep.subr.bf16.mxu0 0
        %1711 = vmatpush2.bf16.msra.mxu0 0
        %1712 = vmatprep.subr.bf16.mxu0 0
        %1713 = vmatpush2.bf16.msra.mxu0 0
        %1714 = vmatprep.subr.bf16.mxu0 0
        %1715 = vmatpush2.bf16.msra.mxu0 0
        %1716 = vmatprep.mubr.bf16.mxu0 0
        %1717 = vmatmul.mubr.bf16.gmra.mxu0 %v1126
        %v1718 = vpop.f32.mrf.mxu0
        %v1719 = vadd.f32 %v1607, %v1718
        %v1720 = vpop.f32.mrf.mxu0
        %v1721 = vpop.f32.mrf.mxu0
        %v1722 = vpop.f32.mrf.mxu0
        %1723 = vdwg.mxu0
        %v1728 = vunpack.c.l.b16 %v1584
        %v1729 = vunpack.c.l.b16 %v1585
        %v1730 = vunpack.c.l.b16 %v1586
        %v1731 = vunpack.c.l.b16 %v1587
        %v1732 = vpack.c.b16 %v1729, %v1728
        %v1733 = vpack.c.b16 %v1731, %v1730
        %1736 = vmatprep.subr.bf16.mxu0 0
        %1737 = vmatpush1.bf16.msra.mxu0 0
        %1738 = vmatprep.subr.bf16.mxu0 0
        %1739 = vmatpush1.bf16.msra.mxu0 0
        %1740 = vmatprep.subr.bf16.mxu0 0
        %1741 = vmatpush1.bf16.msra.mxu0 0
        %1742 = vmatprep.subr.bf16.mxu0 0
        %1743 = vmatpush1.bf16.msra.mxu0 0
        %1744 = vmatprep.subr.bf16.mxu0 0
        %1745 = vmatpush1.bf16.msra.mxu0 0
        %1746 = vmatprep.subr.bf16.mxu0 0
        %1747 = vmatpush1.bf16.msra.mxu0 0
        %1748 = vmatprep.subr.bf16.mxu0 0
        %1749 = vmatpush1.bf16.msra.mxu0 %v1733
        %1750 = vmatprep.subr.bf16.mxu0 0
        %1751 = vmatpush1.bf16.msra.mxu0 %v1732
        %1752 = vmatprep.subr.bf16.mxu0 0
        %1753 = vmatpush2.bf16.msra.mxu0 0
        %1754 = vmatprep.subr.bf16.mxu0 0
        %1755 = vmatpush2.bf16.msra.mxu0 0
        %1756 = vmatprep.subr.bf16.mxu0 0
        %1757 = vmatpush2.bf16.msra.mxu0 0
        %1758 = vmatprep.subr.bf16.mxu0 0
        %1759 = vmatpush2.bf16.msra.mxu0 0
        %1760 = vmatprep.subr.bf16.mxu0 0
        %1761 = vmatpush2.bf16.msra.mxu0 0
        %1762 = vmatprep.subr.bf16.mxu0 0
        %1763 = vmatpush2.bf16.msra.mxu0 0
        %1764 = vmatprep.subr.bf16.mxu0 0
        %1765 = vmatpush2.bf16.msra.mxu0 0
        %1766 = vmatprep.subr.bf16.mxu0 0
        %1767 = vmatpush2.bf16.msra.mxu0 0
        %1768 = vmatprep.mubr.bf16.mxu0 0
        %1769 = vmatmul.mubr.bf16.gmra.mxu0 %v1126
        %v1770 = vpop.f32.mrf.mxu0
        %v1771 = vadd.f32 %v1611, %v1770
        %v1772 = vpop.f32.mrf.mxu0
        %v1773 = vpop.f32.mrf.mxu0
        %v1774 = vpop.f32.mrf.mxu0
        %1775 = vdwg.mxu0
        %v1780 = vunpack.c.l.b16 %v1588
        %v1781 = vunpack.c.l.b16 %v1589
        %v1782 = vunpack.c.l.b16 %v1590
        %v1783 = vunpack.c.l.b16 %v1591
        %v1784 = vpack.c.b16 %v1781, %v1780
        %v1785 = vpack.c.b16 %v1783, %v1782
        %1788 = vmatprep.subr.bf16.mxu0 0
        %1789 = vmatpush1.bf16.msra.mxu0 0
        %1790 = vmatprep.subr.bf16.mxu0 0
        %1791 = vmatpush1.bf16.msra.mxu0 0
        %1792 = vmatprep.subr.bf16.mxu0 0
        %1793 = vmatpush1.bf16.msra.mxu0 0
        %1794 = vmatprep.subr.bf16.mxu0 0
        %1795 = vmatpush1.bf16.msra.mxu0 0
        %1796 = vmatprep.subr.bf16.mxu0 0
        %1797 = vmatpush1.bf16.msra.mxu0 0
        %1798 = vmatprep.subr.bf16.mxu0 0
        %1799 = vmatpush1.bf16.msra.mxu0 0
        %1800 = vmatprep.subr.bf16.mxu0 0
        %1801 = vmatpush1.bf16.msra.mxu0 %v1785
        %1802 = vmatprep.subr.bf16.mxu0 0
        %1803 = vmatpush1.bf16.msra.mxu0 %v1784
        %1804 = vmatprep.subr.bf16.mxu0 0
        %1805 = vmatpush2.bf16.msra.mxu0 0
        %1806 = vmatprep.subr.bf16.mxu0 0
        %1807 = vmatpush2.bf16.msra.mxu0 0
        %1808 = vmatprep.subr.bf16.mxu0 0
        %1809 = vmatpush2.bf16.msra.mxu0 0
        %1810 = vmatprep.subr.bf16.mxu0 0
        %1811 = vmatpush2.bf16.msra.mxu0 0
        %1812 = vmatprep.subr.bf16.mxu0 0
        %1813 = vmatpush2.bf16.msra.mxu0 0
        %1814 = vmatprep.subr.bf16.mxu0 0
        %1815 = vmatpush2.bf16.msra.mxu0 0
        %1816 = vmatprep.subr.bf16.mxu0 0
        %1817 = vmatpush2.bf16.msra.mxu0 0
        %1818 = vmatprep.subr.bf16.mxu0 0
        %1819 = vmatpush2.bf16.msra.mxu0 0
        %1820 = vmatprep.mubr.bf16.mxu0 0
        %1821 = vmatmul.mubr.bf16.gmra.mxu0 %v1126
        %v1822 = vpop.f32.mrf.mxu0
        %v1823 = vadd.f32 %v1615, %v1822
        %v1824 = vpop.f32.mrf.mxu0
        %v1825 = vpop.f32.mrf.mxu0
        %v1826 = vpop.f32.mrf.mxu0
        %1827 = vdwg.mxu0
        %v1828 = vmul.f32 %v1163, 0.35355338
        %v1829 = vmul.f32 %v1215, 0.35355338
        %v1830 = vmul.f32 %v1267, 0.35355338
        %v1831 = vmul.f32 %v1319, 0.35355338
        %v1832 = vpack.c.bf16 %v1828, %v1828
        %v1833 = vpack.c.bf16 %v1829, %v1829
        %v1834 = vpack.c.bf16 %v1830, %v1830
        %v1835 = vpack.c.bf16 %v1831, %v1831
        %v1836 = vpack.c.bf16 %v1415, %v1415
        %v1837 = vpack.c.bf16 %v1467, %v1467
        %v1838 = vpack.c.bf16 %v1519, %v1519
        %v1839 = vpack.c.bf16 %v1571, %v1571
        %v1841 = vlaneseq
        %v1842 = vshrl.u32 %v1841, 7
        %v1843 = vsub.s32 0, %v1842
        %v1844 = vrot.slane %v1066, %v1843
        %vm1846 = vcmask 64512
        %v1848 = vsel %vm1846, %v1832, 0
        %v1851 = vsel %vm1846, %v1836, 0
        %1853 = vmatprep.subr.bf16.mxu0 0
        %1854 = vmatpush1.bf16.xpose.msra.mxu0 0
        %1855 = vmatprep.subr.bf16.mxu0 0
        %1856 = vmatpush1.bf16.xpose.msra.mxu0 0
        %1857 = vmatprep.subr.bf16.mxu0 0
        %1858 = vmatpush1.bf16.xpose.msra.mxu0 0
        %1859 = vmatprep.subr.bf16.mxu0 0
        %1860 = vmatpush1.bf16.xpose.msra.mxu0 0
        %1861 = vmatprep.subr.bf16.mxu0 0
        %1862 = vmatpush1.bf16.xpose.msra.mxu0 0
        %1863 = vmatprep.subr.bf16.mxu0 0
        %1864 = vmatpush1.bf16.xpose.msra.mxu0 0
        %1865 = vmatprep.subr.bf16.mxu0 0
        %1866 = vmatpush1.bf16.xpose.msra.mxu0 0
        %1867 = vmatprep.subr.bf16.mxu0 0
        %1868 = vmatpush1.bf16.xpose.msra.mxu0 %v1851
        %1869 = vmatprep.subr.bf16.mxu0 0
        %1870 = vmatpush2.bf16.xpose.msra.mxu0 0
        %1871 = vmatprep.subr.bf16.mxu0 0
        %1872 = vmatpush2.bf16.xpose.msra.mxu0 0
        %1873 = vmatprep.subr.bf16.mxu0 0
        %1874 = vmatpush2.bf16.xpose.msra.mxu0 0
        %1875 = vmatprep.subr.bf16.mxu0 0
        %1876 = vmatpush2.bf16.xpose.msra.mxu0 0
        %1877 = vmatprep.subr.bf16.mxu0 0
        %1878 = vmatpush2.bf16.xpose.msra.mxu0 0
        %1879 = vmatprep.subr.bf16.mxu0 0
        %1880 = vmatpush2.bf16.xpose.msra.mxu0 0
        %1881 = vmatprep.subr.bf16.mxu0 0
        %1882 = vmatpush2.bf16.xpose.msra.mxu0 0
        %1883 = vmatprep.subr.bf16.mxu0 0
        %1884 = vmatpush2.bf16.xpose.msra.mxu0 0
        %1885 = vmatprep.mubr.bf16.mxu0 0
        %1886 = vmatmul.mubr.bf16.gmra.mxu0 %v1848
        %v1887 = vpop.f32.mrf.mxu0
        %v1888 = vadd.f32 %v1844, %v1887
        %v1889 = vpop.f32.mrf.mxu0
        %v1890 = vpop.f32.mrf.mxu0
        %v1891 = vpop.f32.mrf.mxu0
        %1892 = vdwg.mxu0
        %v1894 = vsel %vm1846, %v1833, 0
        %v1897 = vsel %vm1846, %v1837, 0
        %1899 = vmatprep.subr.bf16.mxu0 0
        %1900 = vmatpush1.bf16.xpose.msra.mxu0 0
        %1901 = vmatprep.subr.bf16.mxu0 0
        %1902 = vmatpush1.bf16.xpose.msra.mxu0 0
        %1903 = vmatprep.subr.bf16.mxu0 0
        %1904 = vmatpush1.bf16.xpose.msra.mxu0 0
        %1905 = vmatprep.subr.bf16.mxu0 0
        %1906 = vmatpush1.bf16.xpose.msra.mxu0 0
        %1907 = vmatprep.subr.bf16.mxu0 0
        %1908 = vmatpush1.bf16.xpose.msra.mxu0 0
        %1909 = vmatprep.subr.bf16.mxu0 0
        %1910 = vmatpush1.bf16.xpose.msra.mxu0 0
        %1911 = vmatprep.subr.bf16.mxu0 0
        %1912 = vmatpush1.bf16.xpose.msra.mxu0 0
        %1913 = vmatprep.subr.bf16.mxu0 0
        %1914 = vmatpush1.bf16.xpose.msra.mxu0 %v1897
        %1915 = vmatprep.subr.bf16.mxu0 0
        %1916 = vmatpush2.bf16.xpose.msra.mxu0 0
        %1917 = vmatprep.subr.bf16.mxu0 0
        %1918 = vmatpush2.bf16.xpose.msra.mxu0 0
        %1919 = vmatprep.subr.bf16.mxu0 0
        %1920 = vmatpush2.bf16.xpose.msra.mxu0 0
        %1921 = vmatprep.subr.bf16.mxu0 0
        %1922 = vmatpush2.bf16.xpose.msra.mxu0 0
        %1923 = vmatprep.subr.bf16.mxu0 0
        %1924 = vmatpush2.bf16.xpose.msra.mxu0 0
        %1925 = vmatprep.subr.bf16.mxu0 0
        %1926 = vmatpush2.bf16.xpose.msra.mxu0 0
        %1927 = vmatprep.subr.bf16.mxu0 0
        %1928 = vmatpush2.bf16.xpose.msra.mxu0 0
        %1929 = vmatprep.subr.bf16.mxu0 0
        %1930 = vmatpush2.bf16.xpose.msra.mxu0 0
        %1931 = vmatprep.mubr.bf16.mxu0 0
        %1932 = vmatmul.mubr.bf16.gmra.mxu0 %v1894
        %v1933 = vpop.f32.mrf.mxu0
        %v1934 = vadd.f32 %v1844, %v1933
        %v1935 = vpop.f32.mrf.mxu0
        %v1936 = vpop.f32.mrf.mxu0
        %v1937 = vpop.f32.mrf.mxu0
        %1938 = vdwg.mxu0
        %v1940 = vsel %vm1846, %v1834, 0
        %v1943 = vsel %vm1846, %v1838, 0
        %1945 = vmatprep.subr.bf16.mxu0 0
        %1946 = vmatpush1.bf16.xpose.msra.mxu0 0
        %1947 = vmatprep.subr.bf16.mxu0 0
        %1948 = vmatpush1.bf16.xpose.msra.mxu0 0
        %1949 = vmatprep.subr.bf16.mxu0 0
        %1950 = vmatpush1.bf16.xpose.msra.mxu0 0
        %1951 = vmatprep.subr.bf16.mxu0 0
        %1952 = vmatpush1.bf16.xpose.msra.mxu0 0
        %1953 = vmatprep.subr.bf16.mxu0 0
        %1954 = vmatpush1.bf16.xpose.msra.mxu0 0
        %1955 = vmatprep.subr.bf16.mxu0 0
        %1956 = vmatpush1.bf16.xpose.msra.mxu0 0
        %1957 = vmatprep.subr.bf16.mxu0 0
        %1958 = vmatpush1.bf16.xpose.msra.mxu0 0
        %1959 = vmatprep.subr.bf16.mxu0 0
        %1960 = vmatpush1.bf16.xpose.msra.mxu0 %v1943
        %1961 = vmatprep.subr.bf16.mxu0 0
        %1962 = vmatpush2.bf16.xpose.msra.mxu0 0
        %1963 = vmatprep.subr.bf16.mxu0 0
        %1964 = vmatpush2.bf16.xpose.msra.mxu0 0
        %1965 = vmatprep.subr.bf16.mxu0 0
        %1966 = vmatpush2.bf16.xpose.msra.mxu0 0
        %1967 = vmatprep.subr.bf16.mxu0 0
        %1968 = vmatpush2.bf16.xpose.msra.mxu0 0
        %1969 = vmatprep.subr.bf16.mxu0 0
        %1970 = vmatpush2.bf16.xpose.msra.mxu0 0
        %1971 = vmatprep.subr.bf16.mxu0 0
        %1972 = vmatpush2.bf16.xpose.msra.mxu0 0
        %1973 = vmatprep.subr.bf16.mxu0 0
        %1974 = vmatpush2.bf16.xpose.msra.mxu0 0
        %1975 = vmatprep.subr.bf16.mxu0 0
        %1976 = vmatpush2.bf16.xpose.msra.mxu0 0
        %1977 = vmatprep.mubr.bf16.mxu0 0
        %1978 = vmatmul.mubr.bf16.gmra.mxu0 %v1940
        %v1979 = vpop.f32.mrf.mxu0
        %v1980 = vadd.f32 %v1844, %v1979
        %v1981 = vpop.f32.mrf.mxu0
        %v1982 = vpop.f32.mrf.mxu0
        %v1983 = vpop.f32.mrf.mxu0
        %1984 = vdwg.mxu0
        %v1986 = vsel %vm1846, %v1835, 0
        %v1989 = vsel %vm1846, %v1839, 0
        %1991 = vmatprep.subr.bf16.mxu0 0
        %1992 = vmatpush1.bf16.xpose.msra.mxu0 0
        %1993 = vmatprep.subr.bf16.mxu0 0
        %1994 = vmatpush1.bf16.xpose.msra.mxu0 0
        %1995 = vmatprep.subr.bf16.mxu0 0
        %1996 = vmatpush1.bf16.xpose.msra.mxu0 0
        %1997 = vmatprep.subr.bf16.mxu0 0
        %1998 = vmatpush1.bf16.xpose.msra.mxu0 0
        %1999 = vmatprep.subr.bf16.mxu0 0
        %2000 = vmatpush1.bf16.xpose.msra.mxu0 0
        %2001 = vmatprep.subr.bf16.mxu0 0
        %2002 = vmatpush1.bf16.xpose.msra.mxu0 0
        %2003 = vmatprep.subr.bf16.mxu0 0
        %2004 = vmatpush1.bf16.xpose.msra.mxu0 0
        %2005 = vmatprep.subr.bf16.mxu0 0
        %2006 = vmatpush1.bf16.xpose.msra.mxu0 %v1989
        %2007 = vmatprep.subr.bf16.mxu0 0
        %2008 = vmatpush2.bf16.xpose.msra.mxu0 0
        %2009 = vmatprep.subr.bf16.mxu0 0
        %2010 = vmatpush2.bf16.xpose.msra.mxu0 0
        %2011 = vmatprep.subr.bf16.mxu0 0
        %2012 = vmatpush2.bf16.xpose.msra.mxu0 0
        %2013 = vmatprep.subr.bf16.mxu0 0
        %2014 = vmatpush2.bf16.xpose.msra.mxu0 0
        %2015 = vmatprep.subr.bf16.mxu0 0
        %2016 = vmatpush2.bf16.xpose.msra.mxu0 0
        %2017 = vmatprep.subr.bf16.mxu0 0
        %2018 = vmatpush2.bf16.xpose.msra.mxu0 0
        %2019 = vmatprep.subr.bf16.mxu0 0
        %2020 = vmatpush2.bf16.xpose.msra.mxu0 0
        %2021 = vmatprep.subr.bf16.mxu0 0
        %2022 = vmatpush2.bf16.xpose.msra.mxu0 0
        %2023 = vmatprep.mubr.bf16.mxu0 0
        %2024 = vmatmul.mubr.bf16.gmra.mxu0 %v1986
        %v2025 = vpop.f32.mrf.mxu0
        %v2026 = vadd.f32 %v1844, %v2025
        %v2027 = vpop.f32.mrf.mxu0
        %v2028 = vpop.f32.mrf.mxu0
        %v2029 = vpop.f32.mrf.mxu0
        %2030 = vdwg.mxu0
        %v2031 = vsel %vm1846, %v1888, -inf
        %2032 = vmax.xlane.f32.xlu0 %v2031
        %v2033 = vpop.xlane.xlu0 %2032
        %v2034 = vsel %vm1846, %v1934, -inf
        %2035 = vmax.xlane.f32.xlu0 %v2034
        %v2036 = vpop.xlane.xlu0 %2035
        %v2037 = vsel %vm1846, %v1980, -inf
        %2038 = vmax.xlane.f32.xlu0 %v2037
        %v2039 = vpop.xlane.xlu0 %2038
        %v2040 = vsel %vm1846, %v2026, -inf
        %2041 = vmax.xlane.f32.xlu0 %v2040
        %v2042 = vpop.xlane.xlu0 %2041
        %v2043 = vsub.f32 %v1888, %v2033
        %v2044 = vsub.f32 %v1934, %v2036
        %v2045 = vsub.f32 %v1980, %v2039
        %v2046 = vsub.f32 %v2026, %v2042
        %v2047 = vmul.f32 %v2043, 1.442695
        %v2048 = vpow.pop %v2047
        %v2049 = vmul.f32 %v2044, 1.442695
        %v2050 = vpow.pop %v2049
        %v2051 = vmul.f32 %v2045, 1.442695
        %v2052 = vpow.pop %v2051
        %v2053 = vmul.f32 %v2046, 1.442695
        %v2054 = vpow.pop %v2053
        %v2055 = vsel %vm1846, %v2048, 0.0
        %2056 = vadd.xlane.f32.xlu0 %v2055
        %v2057 = vpop.xlane.xlu0 %2056
        %v2058 = vsel %vm1846, %v2050, 0.0
        %2059 = vadd.xlane.f32.xlu0 %v2058
        %v2060 = vpop.xlane.xlu0 %2059
        %v2061 = vsel %vm1846, %v2052, 0.0
        %2062 = vadd.xlane.f32.xlu0 %v2061
        %v2063 = vpop.xlane.xlu0 %2062
        %v2064 = vsel %vm1846, %v2054, 0.0
        %2065 = vadd.xlane.f32.xlu0 %v2064
        %v2066 = vpop.xlane.xlu0 %2065
        %v2067 = vrcp.pop %v2057
        %v2068 = vrcp.pop %v2060
        %v2069 = vrcp.pop %v2063
        %v2070 = vrcp.pop %v2066
        %v2071 = vmul.f32 %v2048, %v2067
        %v2072 = vmul.f32 %v2050, %v2068
        %v2073 = vmul.f32 %v2052, %v2069
        %v2074 = vmul.f32 %v2054, %v2070
        %v2075 = vpack.c.bf16 %v2071, %v2071
        %v2076 = vpack.c.bf16 %v2072, %v2072
        %v2077 = vpack.c.bf16 %v2073, %v2073
        %v2078 = vpack.c.bf16 %v2074, %v2074
        %v2079 = vpack.c.bf16 %v1667, %v1667
        %v2080 = vpack.c.bf16 %v1719, %v1719
        %v2081 = vpack.c.bf16 %v1771, %v1771
        %v2082 = vpack.c.bf16 %v1823, %v1823
        %v2084 = vsel %vm1846, %v2075, 0
        %vm2086 = vcmask 1043456
        %v2088 = vsel %vm2086, %v2079, 0
        %2090 = vmatprep.subr.bf16.mxu0 0
        %2091 = vmatpush1.bf16.msra.mxu0 0
        %2092 = vmatprep.subr.bf16.mxu0 0
        %2093 = vmatpush1.bf16.msra.mxu0 0
        %2094 = vmatprep.subr.bf16.mxu0 0
        %2095 = vmatpush1.bf16.msra.mxu0 0
        %2096 = vmatprep.subr.bf16.mxu0 0
        %2097 = vmatpush1.bf16.msra.mxu0 0
        %2098 = vmatprep.subr.bf16.mxu0 0
        %2099 = vmatpush1.bf16.msra.mxu0 0
        %2100 = vmatprep.subr.bf16.mxu0 0
        %2101 = vmatpush1.bf16.msra.mxu0 0
        %2102 = vmatprep.subr.bf16.mxu0 0
        %2103 = vmatpush1.bf16.msra.mxu0 0
        %2104 = vmatprep.subr.bf16.mxu0 0
        %2105 = vmatpush1.bf16.msra.mxu0 %v2088
        %2106 = vmatprep.subr.bf16.mxu0 0
        %2107 = vmatpush2.bf16.msra.mxu0 0
        %2108 = vmatprep.subr.bf16.mxu0 0
        %2109 = vmatpush2.bf16.msra.mxu0 0
        %2110 = vmatprep.subr.bf16.mxu0 0
        %2111 = vmatpush2.bf16.msra.mxu0 0
        %2112 = vmatprep.subr.bf16.mxu0 0
        %2113 = vmatpush2.bf16.msra.mxu0 0
        %2114 = vmatprep.subr.bf16.mxu0 0
        %2115 = vmatpush2.bf16.msra.mxu0 0
        %2116 = vmatprep.subr.bf16.mxu0 0
        %2117 = vmatpush2.bf16.msra.mxu0 0
        %2118 = vmatprep.subr.bf16.mxu0 0
        %2119 = vmatpush2.bf16.msra.mxu0 0
        %2120 = vmatprep.subr.bf16.mxu0 0
        %2121 = vmatpush2.bf16.msra.mxu0 0
        %2122 = vmatprep.mubr.bf16.mxu0 0
        %2123 = vmatmul.mubr.bf16.gmra.mxu0 %v2084
        %v2124 = vpop.f32.mrf.mxu0
        %v2125 = vadd.f32 0.0, %v2124
        %v2126 = vpop.f32.mrf.mxu0
        %v2127 = vpop.f32.mrf.mxu0
        %v2128 = vpop.f32.mrf.mxu0
        %2129 = vdwg.mxu0
        %v2131 = vsel %vm1846, %v2076, 0
        %v2134 = vsel %vm2086, %v2080, 0
        %2136 = vmatprep.subr.bf16.mxu0 0
        %2137 = vmatpush1.bf16.msra.mxu0 0
        %2138 = vmatprep.subr.bf16.mxu0 0
        %2139 = vmatpush1.bf16.msra.mxu0 0
        %2140 = vmatprep.subr.bf16.mxu0 0
        %2141 = vmatpush1.bf16.msra.mxu0 0
        %2142 = vmatprep.subr.bf16.mxu0 0
        %2143 = vmatpush1.bf16.msra.mxu0 0
        %2144 = vmatprep.subr.bf16.mxu0 0
        %2145 = vmatpush1.bf16.msra.mxu0 0
        %2146 = vmatprep.subr.bf16.mxu0 0
        %2147 = vmatpush1.bf16.msra.mxu0 0
        %2148 = vmatprep.subr.bf16.mxu0 0
        %2149 = vmatpush1.bf16.msra.mxu0 0
        %2150 = vmatprep.subr.bf16.mxu0 0
        %2151 = vmatpush1.bf16.msra.mxu0 %v2134
        %2152 = vmatprep.subr.bf16.mxu0 0
        %2153 = vmatpush2.bf16.msra.mxu0 0
        %2154 = vmatprep.subr.bf16.mxu0 0
        %2155 = vmatpush2.bf16.msra.mxu0 0
        %2156 = vmatprep.subr.bf16.mxu0 0
        %2157 = vmatpush2.bf16.msra.mxu0 0
        %2158 = vmatprep.subr.bf16.mxu0 0
        %2159 = vmatpush2.bf16.msra.mxu0 0
        %2160 = vmatprep.subr.bf16.mxu0 0
        %2161 = vmatpush2.bf16.msra.mxu0 0
        %2162 = vmatprep.subr.bf16.mxu0 0
        %2163 = vmatpush2.bf16.msra.mxu0 0
        %2164 = vmatprep.subr.bf16.mxu0 0
        %2165 = vmatpush2.bf16.msra.mxu0 0
        %2166 = vmatprep.subr.bf16.mxu0 0
        %2167 = vmatpush2.bf16.msra.mxu0 0
        %2168 = vmatprep.mubr.bf16.mxu0 0
        %2169 = vmatmul.mubr.bf16.gmra.mxu0 %v2131
        %v2170 = vpop.f32.mrf.mxu0
        %v2171 = vadd.f32 0.0, %v2170
        %v2172 = vpop.f32.mrf.mxu0
        %v2173 = vpop.f32.mrf.mxu0
        %v2174 = vpop.f32.mrf.mxu0
        %2175 = vdwg.mxu0
        %v2177 = vsel %vm1846, %v2077, 0
        %v2180 = vsel %vm2086, %v2081, 0
        %2182 = vmatprep.subr.bf16.mxu0 0
        %2183 = vmatpush1.bf16.msra.mxu0 0
        %2184 = vmatprep.subr.bf16.mxu0 0
        %2185 = vmatpush1.bf16.msra.mxu0 0
        %2186 = vmatprep.subr.bf16.mxu0 0
        %2187 = vmatpush1.bf16.msra.mxu0 0
        %2188 = vmatprep.subr.bf16.mxu0 0
        %2189 = vmatpush1.bf16.msra.mxu0 0
        %2190 = vmatprep.subr.bf16.mxu0 0
        %2191 = vmatpush1.bf16.msra.mxu0 0
        %2192 = vmatprep.subr.bf16.mxu0 0
        %2193 = vmatpush1.bf16.msra.mxu0 0
        %2194 = vmatprep.subr.bf16.mxu0 0
        %2195 = vmatpush1.bf16.msra.mxu0 0
        %2196 = vmatprep.subr.bf16.mxu0 0
        %2197 = vmatpush1.bf16.msra.mxu0 %v2180
        %2198 = vmatprep.subr.bf16.mxu0 0
        %2199 = vmatpush2.bf16.msra.mxu0 0
        %2200 = vmatprep.subr.bf16.mxu0 0
        %2201 = vmatpush2.bf16.msra.mxu0 0
        %2202 = vmatprep.subr.bf16.mxu0 0
        %2203 = vmatpush2.bf16.msra.mxu0 0
        %2204 = vmatprep.subr.bf16.mxu0 0
        %2205 = vmatpush2.bf16.msra.mxu0 0
        %2206 = vmatprep.subr.bf16.mxu0 0
        %2207 = vmatpush2.bf16.msra.mxu0 0
        %2208 = vmatprep.subr.bf16.mxu0 0
        %2209 = vmatpush2.bf16.msra.mxu0 0
        %2210 = vmatprep.subr.bf16.mxu0 0
        %2211 = vmatpush2.bf16.msra.mxu0 0
        %2212 = vmatprep.subr.bf16.mxu0 0
        %2213 = vmatpush2.bf16.msra.mxu0 0
        %2214 = vmatprep.mubr.bf16.mxu0 0
        %2215 = vmatmul.mubr.bf16.gmra.mxu0 %v2177
        %v2216 = vpop.f32.mrf.mxu0
        %v2217 = vadd.f32 0.0, %v2216
        %v2218 = vpop.f32.mrf.mxu0
        %v2219 = vpop.f32.mrf.mxu0
        %v2220 = vpop.f32.mrf.mxu0
        %2221 = vdwg.mxu0
        %v2223 = vsel %vm1846, %v2078, 0
        %v2226 = vsel %vm2086, %v2082, 0
        %2228 = vmatprep.subr.bf16.mxu0 0
        %2229 = vmatpush1.bf16.msra.mxu0 0
        %2230 = vmatprep.subr.bf16.mxu0 0
        %2231 = vmatpush1.bf16.msra.mxu0 0
        %2232 = vmatprep.subr.bf16.mxu0 0
        %2233 = vmatpush1.bf16.msra.mxu0 0
        %2234 = vmatprep.subr.bf16.mxu0 0
        %2235 = vmatpush1.bf16.msra.mxu0 0
        %2236 = vmatprep.subr.bf16.mxu0 0
        %2237 = vmatpush1.bf16.msra.mxu0 0
        %2238 = vmatprep.subr.bf16.mxu0 0
        %2239 = vmatpush1.bf16.msra.mxu0 0
        %2240 = vmatprep.subr.bf16.mxu0 0
        %2241 = vmatpush1.bf16.msra.mxu0 0
        %2242 = vmatprep.subr.bf16.mxu0 0
        %2243 = vmatpush1.bf16.msra.mxu0 %v2226
        %2244 = vmatprep.subr.bf16.mxu0 0
        %2245 = vmatpush2.bf16.msra.mxu0 0
        %2246 = vmatprep.subr.bf16.mxu0 0
        %2247 = vmatpush2.bf16.msra.mxu0 0
        %2248 = vmatprep.subr.bf16.mxu0 0
        %2249 = vmatpush2.bf16.msra.mxu0 0
        %2250 = vmatprep.subr.bf16.mxu0 0
        %2251 = vmatpush2.bf16.msra.mxu0 0
        %2252 = vmatprep.subr.bf16.mxu0 0
        %2253 = vmatpush2.bf16.msra.mxu0 0
        %2254 = vmatprep.subr.bf16.mxu0 0
        %2255 = vmatpush2.bf16.msra.mxu0 0
        %2256 = vmatprep.subr.bf16.mxu0 0
        %2257 = vmatpush2.bf16.msra.mxu0 0
        %2258 = vmatprep.subr.bf16.mxu0 0
        %2259 = vmatpush2.bf16.msra.mxu0 0
        %2260 = vmatprep.mubr.bf16.mxu0 0
        %2261 = vmatmul.mubr.bf16.gmra.mxu0 %v2223
        %v2262 = vpop.f32.mrf.mxu0
        %v2263 = vadd.f32 0.0, %v2262
        %v2264 = vpop.f32.mrf.mxu0
        %v2265 = vpop.f32.mrf.mxu0
        %v2266 = vpop.f32.mrf.mxu0
        %2267 = vdwg.mxu0
        %v2268 = vpack.c.bf16 %v2125, %v2125
        %v2269 = vpack.c.bf16 %v2171, %v2171
        %v2270 = vpack.c.bf16 %v2217, %v2217
        %v2271 = vpack.c.bf16 %v2263, %v2263
        %v2272 = vld [vmem:[%s995] sm:$0xf]
        %v2273 = vld [vmem:[%s995 + $0x4] sm:$0xf]
        %v2274 = vld [vmem:[%s995 + $0x8] sm:$0xf]
        %v2275 = vld [vmem:[%s995 + $0xc] sm:$0xf]
        %v2277 = vsel %vm1846, %v2268, 0
        %v2280 = vsel %vm2086, %v2272, 0
        %2282 = vmatprep.subr.bf16.mxu0 0
        %2283 = vmatpush1.bf16.msra.mxu0 0
        %2284 = vmatprep.subr.bf16.mxu0 0
        %2285 = vmatpush1.bf16.msra.mxu0 0
        %2286 = vmatprep.subr.bf16.mxu0 0
        %2287 = vmatpush1.bf16.msra.mxu0 0
        %2288 = vmatprep.subr.bf16.mxu0 0
        %2289 = vmatpush1.bf16.msra.mxu0 0
        %2290 = vmatprep.subr.bf16.mxu0 0
        %2291 = vmatpush1.bf16.msra.mxu0 0
        %2292 = vmatprep.subr.bf16.mxu0 0
        %2293 = vmatpush1.bf16.msra.mxu0 0
        %2294 = vmatprep.subr.bf16.mxu0 0
        %2295 = vmatpush1.bf16.msra.mxu0 0
        %2296 = vmatprep.subr.bf16.mxu0 0
        %2297 = vmatpush1.bf16.msra.mxu0 %v2280
        %2298 = vmatprep.subr.bf16.mxu0 0
        %2299 = vmatpush2.bf16.msra.mxu0 0
        %2300 = vmatprep.subr.bf16.mxu0 0
        %2301 = vmatpush2.bf16.msra.mxu0 0
        %2302 = vmatprep.subr.bf16.mxu0 0
        %2303 = vmatpush2.bf16.msra.mxu0 0
        %2304 = vmatprep.subr.bf16.mxu0 0
        %2305 = vmatpush2.bf16.msra.mxu0 0
        %2306 = vmatprep.subr.bf16.mxu0 0
        %2307 = vmatpush2.bf16.msra.mxu0 0
        %2308 = vmatprep.subr.bf16.mxu0 0
        %2309 = vmatpush2.bf16.msra.mxu0 0
        %2310 = vmatprep.subr.bf16.mxu0 0
        %2311 = vmatpush2.bf16.msra.mxu0 0
        %2312 = vmatprep.subr.bf16.mxu0 0
        %2313 = vmatpush2.bf16.msra.mxu0 0
        %2314 = vmatprep.mubr.bf16.mxu0 0
        %2315 = vmatmul.mubr.bf16.gmra.mxu0 %v2277
        %v2316 = vpop.f32.mrf.mxu0
        %v2317 = vadd.f32 0.0, %v2316
        %v2318 = vpop.f32.mrf.mxu0
        %v2319 = vpop.f32.mrf.mxu0
        %v2320 = vpop.f32.mrf.mxu0
        %2321 = vdwg.mxu0
        %v2323 = vsel %vm1846, %v2269, 0
        %v2326 = vsel %vm2086, %v2273, 0
        %2328 = vmatprep.subr.bf16.mxu0 0
        %2329 = vmatpush1.bf16.msra.mxu0 0
        %2330 = vmatprep.subr.bf16.mxu0 0
        %2331 = vmatpush1.bf16.msra.mxu0 0
        %2332 = vmatprep.subr.bf16.mxu0 0
        %2333 = vmatpush1.bf16.msra.mxu0 0
        %2334 = vmatprep.subr.bf16.mxu0 0
        %2335 = vmatpush1.bf16.msra.mxu0 0
        %2336 = vmatprep.subr.bf16.mxu0 0
        %2337 = vmatpush1.bf16.msra.mxu0 0
        %2338 = vmatprep.subr.bf16.mxu0 0
        %2339 = vmatpush1.bf16.msra.mxu0 0
        %2340 = vmatprep.subr.bf16.mxu0 0
        %2341 = vmatpush1.bf16.msra.mxu0 0
        %2342 = vmatprep.subr.bf16.mxu0 0
        %2343 = vmatpush1.bf16.msra.mxu0 %v2326
        %2344 = vmatprep.subr.bf16.mxu0 0
        %2345 = vmatpush2.bf16.msra.mxu0 0
        %2346 = vmatprep.subr.bf16.mxu0 0
        %2347 = vmatpush2.bf16.msra.mxu0 0
        %2348 = vmatprep.subr.bf16.mxu0 0
        %2349 = vmatpush2.bf16.msra.mxu0 0
        %2350 = vmatprep.subr.bf16.mxu0 0
        %2351 = vmatpush2.bf16.msra.mxu0 0
        %2352 = vmatprep.subr.bf16.mxu0 0
        %2353 = vmatpush2.bf16.msra.mxu0 0
        %2354 = vmatprep.subr.bf16.mxu0 0
        %2355 = vmatpush2.bf16.msra.mxu0 0
        %2356 = vmatprep.subr.bf16.mxu0 0
        %2357 = vmatpush2.bf16.msra.mxu0 0
        %2358 = vmatprep.subr.bf16.mxu0 0
        %2359 = vmatpush2.bf16.msra.mxu0 0
        %2360 = vmatprep.mubr.bf16.mxu0 0
        %2361 = vmatmul.mubr.bf16.gmra.mxu0 %v2323
        %v2362 = vpop.f32.mrf.mxu0
        %v2363 = vadd.f32 0.0, %v2362
        %v2364 = vpop.f32.mrf.mxu0
        %v2365 = vpop.f32.mrf.mxu0
        %v2366 = vpop.f32.mrf.mxu0
        %2367 = vdwg.mxu0
        %v2369 = vsel %vm1846, %v2270, 0
        %v2372 = vsel %vm2086, %v2274, 0
        %2374 = vmatprep.subr.bf16.mxu0 0
        %2375 = vmatpush1.bf16.msra.mxu0 0
        %2376 = vmatprep.subr.bf16.mxu0 0
        %2377 = vmatpush1.bf16.msra.mxu0 0
        %2378 = vmatprep.subr.bf16.mxu0 0
        %2379 = vmatpush1.bf16.msra.mxu0 0
        %2380 = vmatprep.subr.bf16.mxu0 0
        %2381 = vmatpush1.bf16.msra.mxu0 0
        %2382 = vmatprep.subr.bf16.mxu0 0
        %2383 = vmatpush1.bf16.msra.mxu0 0
        %2384 = vmatprep.subr.bf16.mxu0 0
        %2385 = vmatpush1.bf16.msra.mxu0 0
        %2386 = vmatprep.subr.bf16.mxu0 0
        %2387 = vmatpush1.bf16.msra.mxu0 0
        %2388 = vmatprep.subr.bf16.mxu0 0
        %2389 = vmatpush1.bf16.msra.mxu0 %v2372
        %2390 = vmatprep.subr.bf16.mxu0 0
        %2391 = vmatpush2.bf16.msra.mxu0 0
        %2392 = vmatprep.subr.bf16.mxu0 0
        %2393 = vmatpush2.bf16.msra.mxu0 0
        %2394 = vmatprep.subr.bf16.mxu0 0
        %2395 = vmatpush2.bf16.msra.mxu0 0
        %2396 = vmatprep.subr.bf16.mxu0 0
        %2397 = vmatpush2.bf16.msra.mxu0 0
        %2398 = vmatprep.subr.bf16.mxu0 0
        %2399 = vmatpush2.bf16.msra.mxu0 0
        %2400 = vmatprep.subr.bf16.mxu0 0
        %2401 = vmatpush2.bf16.msra.mxu0 0
        %2402 = vmatprep.subr.bf16.mxu0 0
        %2403 = vmatpush2.bf16.msra.mxu0 0
        %2404 = vmatprep.subr.bf16.mxu0 0
        %2405 = vmatpush2.bf16.msra.mxu0 0
        %2406 = vmatprep.mubr.bf16.mxu0 0
        %2407 = vmatmul.mubr.bf16.gmra.mxu0 %v2369
        %v2408 = vpop.f32.mrf.mxu0
        %v2409 = vadd.f32 0.0, %v2408
        %v2410 = vpop.f32.mrf.mxu0
        %v2411 = vpop.f32.mrf.mxu0
        %v2412 = vpop.f32.mrf.mxu0
        %2413 = vdwg.mxu0
        %v2415 = vsel %vm1846, %v2271, 0
        %v2418 = vsel %vm2086, %v2275, 0
        %2420 = vmatprep.subr.bf16.mxu0 0
        %2421 = vmatpush1.bf16.msra.mxu0 0
        %2422 = vmatprep.subr.bf16.mxu0 0
        %2423 = vmatpush1.bf16.msra.mxu0 0
        %2424 = vmatprep.subr.bf16.mxu0 0
        %2425 = vmatpush1.bf16.msra.mxu0 0
        %2426 = vmatprep.subr.bf16.mxu0 0
        %2427 = vmatpush1.bf16.msra.mxu0 0
        %2428 = vmatprep.subr.bf16.mxu0 0
        %2429 = vmatpush1.bf16.msra.mxu0 0
        %2430 = vmatprep.subr.bf16.mxu0 0
        %2431 = vmatpush1.bf16.msra.mxu0 0
        %2432 = vmatprep.subr.bf16.mxu0 0
        %2433 = vmatpush1.bf16.msra.mxu0 0
        %2434 = vmatprep.subr.bf16.mxu0 0
        %2435 = vmatpush1.bf16.msra.mxu0 %v2418
        %2436 = vmatprep.subr.bf16.mxu0 0
        %2437 = vmatpush2.bf16.msra.mxu0 0
        %2438 = vmatprep.subr.bf16.mxu0 0
        %2439 = vmatpush2.bf16.msra.mxu0 0
        %2440 = vmatprep.subr.bf16.mxu0 0
        %2441 = vmatpush2.bf16.msra.mxu0 0
        %2442 = vmatprep.subr.bf16.mxu0 0
        %2443 = vmatpush2.bf16.msra.mxu0 0
        %2444 = vmatprep.subr.bf16.mxu0 0
        %2445 = vmatpush2.bf16.msra.mxu0 0
        %2446 = vmatprep.subr.bf16.mxu0 0
        %2447 = vmatpush2.bf16.msra.mxu0 0
        %2448 = vmatprep.subr.bf16.mxu0 0
        %2449 = vmatpush2.bf16.msra.mxu0 0
        %2450 = vmatprep.subr.bf16.mxu0 0
        %2451 = vmatpush2.bf16.msra.mxu0 0
        %2452 = vmatprep.mubr.bf16.mxu0 0
        %2453 = vmatmul.mubr.bf16.gmra.mxu0 %v2415
        %v2454 = vpop.f32.mrf.mxu0
        %v2455 = vadd.f32 0.0, %v2454
        %v2456 = vpop.f32.mrf.mxu0
        %v2457 = vpop.f32.mrf.mxu0
        %v2458 = vpop.f32.mrf.mxu0
        %2459 = vdwg.mxu0
        %v2460 = vsel %vm1124, %v2317, 0.0
        %v2461 = vsel %vm1124, %v2363, 0.0
        %v2462 = vadd.f32 %v2460, %v2461
        %v2463 = vsel %vm1124, %v2409, 0.0
        %v2464 = vadd.f32 %v2462, %v2463
        %v2465 = vsel %vm1124, %v2455, 0.0
        %v2466 = vadd.f32 %v2464, %v2465
        %v2467 = vld [vmem:[%s998] sm:$0x1]
        %v2469 = vlaneseq
        %v2470 = vshrl.u32 %v2469, 7
        %v2471 = vsub.s32 0, %v2470
        %v2472 = vrot.slane %v2467, %v2471
        %v2474 = vadd.f32 %v2466, %v2472
        %v2475 = vadd.f32 %v1065, %v2474
        %v2476 = vld [vmem:[%s1001] sm:$0x1]
        %v2477 = vld [vmem:[%s1004] sm:$0x1]
        %v2478 = vsel %vm1124, %v2475, 0.0
        %2479 = vadd.xlane.f32.xlu0 %v2478
        %v2480 = vpop.xlane.xlu0 %2479
        %v2481 = vrcp.pop 32.0
        %v2482 = vmul.f32 %v2480, %v2481
        %v2483 = vsub.f32 %v2475, %v2482
        %v2484 = vmul.f32 %v2483, %v2483
        %v2485 = vsel %vm1124, %v2484, 0.0
        %2486 = vadd.xlane.f32.xlu0 %v2485
        %v2487 = vpop.xlane.xlu0 %2486
        %v2488 = vmul.f32 %v2487, %v2481
        %v2489 = vadd.f32 %v2488, 1e-05
        %v2490 = vrsqrt.pop %v2489
        %v2491 = vmul.f32 %v2483, %v2490
        %v2493 = vlaneseq
        %v2494 = vshrl.u32 %v2493, 7
        %v2495 = vsub.s32 0, %v2494
        %v2496 = vrot.slane %v2476, %v2495
        %v2498 = vmul.f32 %v2491, %v2496
        %v2500 = vlaneseq
        %v2501 = vshrl.u32 %v2500, 7
        %v2502 = vsub.s32 0, %v2501
        %v2503 = vrot.slane %v2477, %v2502
        %v2505 = vadd.f32 %v2498, %v2503
        %v2506 = vpack.c.bf16 %v2505, %v2505
        %v2507 = vld [vmem:[%s1009] sm:$0xf]
        %v2508 = vld [vmem:[%s1009 + $0x4] sm:$0xf]
        %v2509 = vld [vmem:[%s1009 + $0x8] sm:$0xf]
        %v2510 = vld [vmem:[%s1009 + $0xc] sm:$0xf]
        %v2511 = vld [vmem:[%s1012] sm:$0x1]
        %v2513 = vlaneseq
        %v2514 = vshrl.u32 %v2513, 7
        %v2515 = vsub.s32 0, %v2514
        %v2516 = vrot.slane %v2511, %v2515
        %v2522 = vunpack.c.l.b16 %v2507
        %v2523 = vunpack.c.l.b16 %v2508
        %v2524 = vunpack.c.l.b16 %v2509
        %v2525 = vunpack.c.l.b16 %v2510
        %v2526 = vpack.c.b16 %v2523, %v2522
        %v2527 = vpack.c.b16 %v2525, %v2524
        %v2531 = vsel %vm1124, %v2506, 0
        %2533 = vmatprep.subr.bf16.mxu0 0
        %2534 = vmatpush1.bf16.msra.mxu0 0
        %2535 = vmatprep.subr.bf16.mxu0 0
        %2536 = vmatpush1.bf16.msra.mxu0 0
        %2537 = vmatprep.subr.bf16.mxu0 0
        %2538 = vmatpush1.bf16.msra.mxu0 0
        %2539 = vmatprep.subr.bf16.mxu0 0
        %2540 = vmatpush1.bf16.msra.mxu0 0
        %2541 = vmatprep.subr.bf16.mxu0 0
        %2542 = vmatpush1.bf16.msra.mxu0 0
        %2543 = vmatprep.subr.bf16.mxu0 0
        %2544 = vmatpush1.bf16.msra.mxu0 0
        %2545 = vmatprep.subr.bf16.mxu0 0
        %2546 = vmatpush1.bf16.msra.mxu0 %v2527
        %2547 = vmatprep.subr.bf16.mxu0 0
        %2548 = vmatpush1.bf16.msra.mxu0 %v2526
        %2549 = vmatprep.subr.bf16.mxu0 0
        %2550 = vmatpush2.bf16.msra.mxu0 0
        %2551 = vmatprep.subr.bf16.mxu0 0
        %2552 = vmatpush2.bf16.msra.mxu0 0
        %2553 = vmatprep.subr.bf16.mxu0 0
        %2554 = vmatpush2.bf16.msra.mxu0 0
        %2555 = vmatprep.subr.bf16.mxu0 0
        %2556 = vmatpush2.bf16.msra.mxu0 0
        %2557 = vmatprep.subr.bf16.mxu0 0
        %2558 = vmatpush2.bf16.msra.mxu0 0
        %2559 = vmatprep.subr.bf16.mxu0 0
        %2560 = vmatpush2.bf16.msra.mxu0 0
        %2561 = vmatprep.subr.bf16.mxu0 0
        %2562 = vmatpush2.bf16.msra.mxu0 0
        %2563 = vmatprep.subr.bf16.mxu0 0
        %2564 = vmatpush2.bf16.msra.mxu0 0
        %2565 = vmatprep.mubr.bf16.mxu0 0
        %2566 = vmatmul.mubr.bf16.gmra.mxu0 %v2531
        %v2567 = vpop.f32.mrf.mxu0
        %v2568 = vadd.f32 %v2516, %v2567
        %v2569 = vpop.f32.mrf.mxu0
        %v2570 = vpop.f32.mrf.mxu0
        %v2571 = vpop.f32.mrf.mxu0
        %2572 = vdwg.mxu0
        %v2573 = vmul.f32 %v2568, %v2568
        %v2574 = vmul.f32 %v2568, %v2573
        %v2575 = vmul.f32 %v2574, 0.044715
        %v2576 = vadd.f32 %v2568, %v2575
        %v2577 = vmul.f32 %v2576, 0.7978846
        %v2578 = vtanh.pop %v2577
        %v2579 = vadd.f32 %v2578, 1.0
        %v2580 = vmul.f32 %v2579, 0.5
        %v2581 = vmul.f32 %v2568, %v2580
        %v2582 = vpack.c.bf16 %v2581, %v2581
        %v2583 = vld [vmem:[%s1017] sm:$0xf]
        %v2584 = vld [vmem:[%s1017 + $0x4] sm:$0xf]
        %v2585 = vld [vmem:[%s1017 + $0x8] sm:$0xf]
        %v2586 = vld [vmem:[%s1017 + $0xc] sm:$0xf]
        %v2587 = vld [vmem:[%s1017 + $0x10] sm:$0xf]
        %v2588 = vld [vmem:[%s1017 + $0x14] sm:$0xf]
        %v2589 = vld [vmem:[%s1017 + $0x18] sm:$0xf]
        %v2590 = vld [vmem:[%s1017 + $0x1c] sm:$0xf]
        %v2591 = vld [vmem:[%s1020] sm:$0x1]
        %v2593 = vlaneseq
        %v2594 = vshrl.u32 %v2593, 7
        %v2595 = vsub.s32 0, %v2594
        %v2596 = vrot.slane %v2591, %v2595
        %v2606 = vunpack.c.l.b16 %v2583
        %v2607 = vunpack.c.l.b16 %v2584
        %v2608 = vunpack.c.l.b16 %v2585
        %v2609 = vunpack.c.l.b16 %v2586
        %v2610 = vunpack.c.l.b16 %v2587
        %v2611 = vunpack.c.l.b16 %v2588
        %v2612 = vunpack.c.l.b16 %v2589
        %v2613 = vunpack.c.l.b16 %v2590
        %v2614 = vpack.c.b16 %v2607, %v2606
        %v2615 = vpack.c.b16 %v2609, %v2608
        %v2616 = vpack.c.b16 %v2611, %v2610
        %v2617 = vpack.c.b16 %v2613, %v2612
        %vm2622 = vcmask 523264
        %v2624 = vsel %vm2622, %v2582, 0
        %2626 = vmatprep.subr.bf16.mxu0 0
        %2627 = vmatpush1.bf16.msra.mxu0 0
        %2628 = vmatprep.subr.bf16.mxu0 0
        %2629 = vmatpush1.bf16.msra.mxu0 0
        %2630 = vmatprep.subr.bf16.mxu0 0
        %2631 = vmatpush1.bf16.msra.mxu0 0
        %2632 = vmatprep.subr.bf16.mxu0 0
        %2633 = vmatpush1.bf16.msra.mxu0 0
        %2634 = vmatprep.subr.bf16.mxu0 0
        %2635 = vmatpush1.bf16.msra.mxu0 %v2617
        %2636 = vmatprep.subr.bf16.mxu0 0
        %2637 = vmatpush1.bf16.msra.mxu0 %v2616
        %2638 = vmatprep.subr.bf16.mxu0 0
        %2639 = vmatpush1.bf16.msra.mxu0 %v2615
        %2640 = vmatprep.subr.bf16.mxu0 0
        %2641 = vmatpush1.bf16.msra.mxu0 %v2614
        %2642 = vmatprep.subr.bf16.mxu0 0
        %2643 = vmatpush2.bf16.msra.mxu0 0
        %2644 = vmatprep.subr.bf16.mxu0 0
        %2645 = vmatpush2.bf16.msra.mxu0 0
        %2646 = vmatprep.subr.bf16.mxu0 0
        %2647 = vmatpush2.bf16.msra.mxu0 0
        %2648 = vmatprep.subr.bf16.mxu0 0
        %2649 = vmatpush2.bf16.msra.mxu0 0
        %2650 = vmatprep.subr.bf16.mxu0 0
        %2651 = vmatpush2.bf16.msra.mxu0 0
        %2652 = vmatprep.subr.bf16.mxu0 0
        %2653 = vmatpush2.bf16.msra.mxu0 0
        %2654 = vmatprep.subr.bf16.mxu0 0
        %2655 = vmatpush2.bf16.msra.mxu0 0
        %2656 = vmatprep.subr.bf16.mxu0 0
        %2657 = vmatpush2.bf16.msra.mxu0 0
        %2658 = vmatprep.mubr.bf16.mxu0 0
        %2659 = vmatmul.mubr.bf16.gmra.mxu0 %v2624
        %v2660 = vpop.f32.mrf.mxu0
        %v2661 = vadd.f32 %v2596, %v2660
        %v2662 = vpop.f32.mrf.mxu0
        %v2663 = vpop.f32.mrf.mxu0
        %v2664 = vpop.f32.mrf.mxu0
        %2665 = vdwg.mxu0
        %v2666 = vadd.f32 %v2505, %v2661
        %v2667 = vld [vmem:[%s1023] sm:$0x1]
        %v2668 = vld [vmem:[%s1026] sm:$0x1]
        %v2669 = vsel %vm1124, %v2666, 0.0
        %2670 = vadd.xlane.f32.xlu0 %v2669
        %v2671 = vpop.xlane.xlu0 %2670
        %v2672 = vmul.f32 %v2671, %v2481
        %v2673 = vsub.f32 %v2666, %v2672
        %v2674 = vmul.f32 %v2673, %v2673
        %v2675 = vsel %vm1124, %v2674, 0.0
        %2676 = vadd.xlane.f32.xlu0 %v2675
        %v2677 = vpop.xlane.xlu0 %2676
        %v2678 = vmul.f32 %v2677, %v2481
        %v2679 = vadd.f32 %v2678, 1e-05
        %v2680 = vrsqrt.pop %v2679
        %v2681 = vmul.f32 %v2673, %v2680
        %v2683 = vlaneseq
        %v2684 = vshrl.u32 %v2683, 7
        %v2685 = vsub.s32 0, %v2684
        %v2686 = vrot.slane %v2667, %v2685
        %v2688 = vmul.f32 %v2681, %v2686
        %v2690 = vlaneseq
        %v2691 = vshrl.u32 %v2690, 7
        %v2692 = vsub.s32 0, %v2691
        %v2693 = vrot.slane %v2668, %v2692
        %v2695 = vadd.f32 %v2688, %v2693
        %2696 = vst.msk [vmem:[#allocation2] sm:$0xff] %vm1124, %v2695
        %p2697 = scmp.eq.s32.totalorder %s43, 1
        // Predicated region
        $region121: #{bert_classifier_forward.1} parent=115 // pred_check
          %p2698 = pneg %p2697
        $region122: #{bert_classifier_forward.1} parent=115 // pred_check_branch
          %2700 = sbr.rel (%p2698) target = $region124
        $region123: #{bert_classifier_forward.1} parent=115 // pred_region
          %v2701 = vpack.c.bf16 %v2695, %v2695
          %v2702 = vld [vmem:[%s20] sm:$0xf]
          %v2703 = vld [vmem:[%s20 + $0x4] sm:$0xf]
          %v2704 = vld [vmem:[%s20 + $0x8] sm:$0xf]
          %v2705 = vld [vmem:[%s20 + $0xc] sm:$0xf]
          %v2706 = vld [vmem:[%s21] sm:$0x1]
          %v2711 = vunpack.c.l.b16 %v2702
          %v2712 = vunpack.c.l.b16 %v2703
          %v2713 = vunpack.c.l.b16 %v2704
          %v2714 = vunpack.c.l.b16 %v2705
          %v2715 = vpack.c.b16 %v2712, %v2711
          %v2716 = vpack.c.b16 %v2714, %v2713
          %v2720 = vsel %vm1124, %v2701, 0
          %2722 = vmatprep.subr.bf16.mxu0 0
          %2723 = vmatpush1.bf16.msra.mxu0 0
          %2724 = vmatprep.subr.bf16.mxu0 0
          %2725 = vmatpush1.bf16.msra.mxu0 0
          %2726 = vmatprep.subr.bf16.mxu0 0
          %2727 = vmatpush1.bf16.msra.mxu0 0
          %2728 = vmatprep.subr.bf16.mxu0 0
          %2729 = vmatpush1.bf16.msra.mxu0 0
          %2730 = vmatprep.subr.bf16.mxu0 0
          %2731 = vmatpush1.bf16.msra.mxu0 0
          %2732 = vmatprep.subr.bf16.mxu0 0
          %2733 = vmatpush1.bf16.msra.mxu0 0
          %2734 = vmatprep.subr.bf16.mxu0 0
          %2735 = vmatpush1.bf16.msra.mxu0 %v2716
          %2736 = vmatprep.subr.bf16.mxu0 0
          %2737 = vmatpush1.bf16.msra.mxu0 %v2715
          %2738 = vmatprep.subr.bf16.mxu0 0
          %2739 = vmatpush2.bf16.msra.mxu0 0
          %2740 = vmatprep.subr.bf16.mxu0 0
          %2741 = vmatpush2.bf16.msra.mxu0 0
          %2742 = vmatprep.subr.bf16.mxu0 0
          %2743 = vmatpush2.bf16.msra.mxu0 0
          %2744 = vmatprep.subr.bf16.mxu0 0
          %2745 = vmatpush2.bf16.msra.mxu0 0
          %2746 = vmatprep.subr.bf16.mxu0 0
          %2747 = vmatpush2.bf16.msra.mxu0 0
          %2748 = vmatprep.subr.bf16.mxu0 0
          %2749 = vmatpush2.bf16.msra.mxu0 0
          %2750 = vmatprep.subr.bf16.mxu0 0
          %2751 = vmatpush2.bf16.msra.mxu0 0
          %2752 = vmatprep.subr.bf16.mxu0 0
          %2753 = vmatpush2.bf16.msra.mxu0 0
          %2754 = vmatprep.mubr.bf16.mxu0 0
          %2755 = vmatmul.mubr.bf16.gmra.mxu0 %v2720
          %v2756 = vpop.f32.mrf.mxu0
          %v2757 = vadd.f32 %v2706, %v2756
          %v2758 = vpop.f32.mrf.mxu0
          %v2759 = vpop.f32.mrf.mxu0
          %v2760 = vpop.f32.mrf.mxu0
          %2761 = vdwg.mxu0
          %v2762 = vtanh.pop %v2757
          %v2763 = vpack.c.bf16 %v2762, %v2762
          %v2764 = vld [vmem:[%s22] sm:$0xf]
          %v2765 = vld [vmem:[%s22 + $0x4] sm:$0xf]
          %v2766 = vld [vmem:[%s22 + $0x8] sm:$0xf]
          %v2767 = vld [vmem:[%s22 + $0xc] sm:$0xf]
          %v2768 = vld [vmem:[%s23] sm:$0x1]
          %v2773 = vunpack.c.l.b16 %v2764
          %v2774 = vunpack.c.l.b16 %v2765
          %v2775 = vunpack.c.l.b16 %v2766
          %v2776 = vunpack.c.l.b16 %v2767
          %v2777 = vpack.c.b16 %v2774, %v2773
          %v2778 = vpack.c.b16 %v2776, %v2775
          %v2782 = vsel %vm1124, %v2763, 0
          %2784 = vmatprep.subr.bf16.mxu0 0
          %2785 = vmatpush1.bf16.msra.mxu0 0
          %2786 = vmatprep.subr.bf16.mxu0 0
          %2787 = vmatpush1.bf16.msra.mxu0 0
          %2788 = vmatprep.subr.bf16.mxu0 0
          %2789 = vmatpush1.bf16.msra.mxu0 0
          %2790 = vmatprep.subr.bf16.mxu0 0
          %2791 = vmatpush1.bf16.msra.mxu0 0
          %2792 = vmatprep.subr.bf16.mxu0 0
          %2793 = vmatpush1.bf16.msra.mxu0 0
          %2794 = vmatprep.subr.bf16.mxu0 0
          %2795 = vmatpush1.bf16.msra.mxu0 0
          %2796 = vmatprep.subr.bf16.mxu0 0
          %2797 = vmatpush1.bf16.msra.mxu0 %v2778
          %2798 = vmatprep.subr.bf16.mxu0 0
          %2799 = vmatpush1.bf16.msra.mxu0 %v2777
          %2800 = vmatprep.subr.bf16.mxu0 0
          %2801 = vmatpush2.bf16.msra.mxu0 0
          %2802 = vmatprep.subr.bf16.mxu0 0
          %2803 = vmatpush2.bf16.msra.mxu0 0
          %2804 = vmatprep.subr.bf16.mxu0 0
          %2805 = vmatpush2.bf16.msra.mxu0 0
          %2806 = vmatprep.subr.bf16.mxu0 0
          %2807 = vmatpush2.bf16.msra.mxu0 0
          %2808 = vmatprep.subr.bf16.mxu0 0
          %2809 = vmatpush2.bf16.msra.mxu0 0
          %2810 = vmatprep.subr.bf16.mxu0 0
          %2811 = vmatpush2.bf16.msra.mxu0 0
          %2812 = vmatprep.subr.bf16.mxu0 0
          %2813 = vmatpush2.bf16.msra.mxu0 0
          %2814 = vmatprep.subr.bf16.mxu0 0
          %2815 = vmatpush2.bf16.msra.mxu0 0
          %2816 = vmatprep.mubr.bf16.mxu0 0
          %2817 = vmatmul.mubr.bf16.gmra.mxu0 %v2782
          %v2818 = vpop.f32.mrf.mxu0
          %v2819 = vadd.f32 %v2768, %v2818
          %v2820 = vpop.f32.mrf.mxu0
          %v2821 = vpop.f32.mrf.mxu0
          %v2822 = vpop.f32.mrf.mxu0
          %2823 = vdwg.mxu0
          %v2824 = vmax.f32 %v2819, 0.0
          %2825 = vst [vmem:[%s956] sm:$0x1] %v2824
        $region124: #{bert_classifier_forward.1} parent=115 // pred_fallthru
          _
        %s2826 = sand.u32 %s652, 1
        %s2827 = scalar_lea.sflag [#allocation4], %s2826
        %s2828 = sand.u32 %s652, 1
        %s2829 = scalar_lea.vmem [#allocation3], %s2828
        // Predicated region
        $region125: #{bert_classifier_forward.1} parent=115 // pred_check
          %p2830 = pneg %p662
        $region126: #{bert_classifier_forward.1} parent=115 // pred_check_branch
          %2832 = sbr.rel (%p2830) target = $region128
        $region127: #{bert_classifier_forward.1} parent=115 // pred_region
          %s2834 = ssub.s32 16, 16
          %2835 = vsyncadd %s2827, %s2834
          %s2836 = smul.addr %s42, 16
          %s2837 = scalar_lea.hbm %s24, %s2836
          %s2839 = sshll.u32 %s2829, 4
          %s2840 = int_to_ptr.vmem [resolvable:$true] %s2839
          %2842 = dma.vmem_to_hbm [thread:$0]  %s2840, 16, %s2837, %s2827
        $region128: #{bert_classifier_forward.1} parent=115 // pred_fallthru
          _
      $region116: #{bert_classifier_forward.1} parent=5 // pred_fallthru
        _
      %p2843 = scmp.le.s32.totalorder 2, %s33
      // Predicated region
      $region129: #{bert_classifier_forward.1} parent=5 // pred_check
        %p2844 = pneg %p2843
      $region130: #{bert_classifier_forward.1} parent=5 // pred_check_branch
        %2846 = sbr.rel (%p2844) target = $region132
      $region131: #{bert_classifier_forward.1} parent=5 // pred_region
        %s2847 = ssub.s32 %s33, 2
        // Predicated region
        $region133: #{bert_classifier_forward.1} parent=131 // pred_check
          %p2848 = pneg %p668
        $region134: #{bert_classifier_forward.1} parent=131 // pred_check_branch
          %2850 = sbr.rel (%p2848) target = $region136
        $region135: #{bert_classifier_forward.1} parent=131 // pred_region
          %s2851 = sand.u32 %s653, 1
          %s2852 = scalar_lea.sflag [#allocation4], %s2851
          %s2853 = sand.u32 %s653, 1
          %s2854 = scalar_lea.vmem [#allocation3], %s2853
          %2855 = dma.done %s2852, 16
        $region136: #{bert_classifier_forward.1} parent=131 // pred_fallthru
          _
      $region132: #{bert_classifier_forward.1} parent=5 // pred_fallthru
        _
    $region6: #{bert_classifier_forward.1} parent=1 // loop_footer
      %s37 = sadd.s32 1, %s33
    $region7: #{bert_classifier_forward.1} parent=1 // loop_footer_branch
      %32 = sbr.rel target = $region3
    $region8: #{bert_classifier_forward.1} parent=1 // loop_exit
      _
    %2856 = vsyncpa [#allocation4], 1
    %s2857 = scalar_lea.sflag [#allocation4], 1
    %2858 = vsyncpa %s2857, 1

</llo_original>
